<compile_context>
chip_gen: v6e
topology: v6e:2x2x1
jax: 0.10.0
libtpu: 0.0.40
codegen_flags: <defaults>
</compile_context>

<pallas_src>
import functools

import jax
import jax.numpy as jnp
from jax.experimental import pallas as pl
from jax.experimental.pallas import tpu as pltpu

BN_EPS = 1e-5
LANE = 128
VMEM_LIMIT = 48 * 1024 * 1024          # fits v7x (64 MiB) / v6e / v5e
_RES_VMEM_BUDGET = 24 * 1024 * 1024    # budget used to pick residual row tile


def _round_up(x, m):
    return ((x + m - 1) // m) * m


def _row_tile(m):
    if m >= 512:
        return 512
    return _round_up(m, 16)


# ---------------------------------------------------------------------------
# Pallas kernels
# ---------------------------------------------------------------------------
def _conv_kernel(x_ref, w_ref, b_ref, o_ref, acc_ref, *, act):
    """K-tiled matmul + bias + optional QuickGELU with f32 VMEM accumulator."""
    @pl.when(pl.program_id(2) == 0)
    def _():
        acc_ref[...] = jnp.zeros_like(acc_ref)

    acc_ref[...] += jnp.dot(x_ref[...], w_ref[...],
                            preferred_element_type=jnp.float32)

    @pl.when(pl.program_id(2) == pl.num_programs(2) - 1)
    def _():
        y = acc_ref[...] + b_ref[...]
        if act == "quick_gelu":
            y = y * jax.nn.sigmoid(1.702 * y)
        o_ref[...] = y.astype(o_ref.dtype)


def _residual_kernel(p3_ref, x_ref, w1_ref, b1_ref, w2_ref, b2_ref, o_ref):
    """Fused ResidualLayer + trailing QuickGELU:
       t = leaky_relu(patches3 @ W1 + b1)          (BN folded into W1/b1)
       y = qgelu(x + t @ W2 + b2)                  (BN folded into W2/b2)
    The intermediate t lives only in vregs/VMEM."""
    t = jnp.dot(p3_ref[...], w1_ref[...],
                preferred_element_type=jnp.float32) + b1_ref[...]
    t = jnp.where(t >= 0, t, 0.01 * t)                     # LeakyReLU(0.01)
    y = jnp.dot(t.astype(w2_ref.dtype), w2_ref[...],
                preferred_element_type=jnp.float32) + b2_ref[...]
    y = x_ref[...].astype(jnp.float32) + y                 # residual add
    y = y * jax.nn.sigmoid(1.702 * y)                      # QuickGELU
    o_ref[...] = y.astype(o_ref.dtype)


# ---------------------------------------------------------------------------
# Pallas wrappers
# ---------------------------------------------------------------------------
def conv_matmul(patches, w, b, *, act, out_dtype):
    """act(patches @ w + b), channel axes already padded to 128 lanes."""
    M, K_raw = patches.shape
    K_pad, N_pad = w.shape
    assert K_pad >= K_raw and N_pad % LANE == 0 and K_pad % LANE == 0

    tm = _row_tile(M)
    M_pad = _round_up(M, tm)
    tn = min(N_pad, 512)
    tk = 1024 if (K_pad > 1024 and K_pad % 1024 == 0) else K_pad

    p = patches.astype(jnp.bfloat16)
    if M_pad != M or K_pad != K_raw:
        p = jnp.pad(p, ((0, M_pad - M), (0, K_pad - K_raw)))

    grid = (M_pad // tm, N_pad // tn, K_pad // tk)
    kernel = functools.partial(_conv_kernel, act=act)
    out = pl.pallas_call(
        kernel,
        out_shape=jax.ShapeDtypeStruct((M_pad, N_pad), out_dtype),
        grid=grid,
        in_specs=[
            pl.BlockSpec((tm, tk), lambda i, j, k: (i, k)),
            pl.BlockSpec((tk, tn), lambda i, j, k: (k, j)),
            pl.BlockSpec((1, tn), lambda i, j, k: (0, j)),
        ],
        out_specs=pl.BlockSpec((tm, tn), lambda i, j, k: (i, j)),
        scratch_shapes=[pltpu.VMEM((tm, tn), jnp.float32)],
        compiler_params=pltpu.CompilerParams(
            dimension_semantics=("parallel", "parallel", "arbitrary"),
            vmem_limit_bytes=VMEM_LIMIT),
        cost_estimate=pl.CostEstimate(
            flops=2 * M_pad * K_pad * N_pad,
            transcendentals=M_pad * N_pad if act == "quick_gelu" else 0,
            bytes_accessed=(M_pad * K_pad + K_pad * N_pad) * 2
                           + M_pad * N_pad * jnp.dtype(out_dtype).itemsize),
    )(p, w, b.reshape(1, N_pad).astype(jnp.float32))
    return out[:M]


def _res_vmem_bytes(tm, k3, c):
    tiles = 2 * (tm * k3 + 2 * tm * c) * 2          # double-buffered bf16 tiles
    fixed = 2 * (k3 * c + c * c) * 2 + 2 * 2 * c * 4
    return tiles + fixed


def residual_block(p3, x_flat, w1, b1, w2, b2):
    """Whole ResidualLayer (+ trailing QuickGELU) in a single pallas_call."""
    M, K3_raw = p3.shape
    K3_pad, C_pad = w1.shape

    if M >= 512:
        tm = 512
        while tm > 16 and _res_vmem_bytes(tm, K3_pad, C_pad) > _RES_VMEM_BUDGET:
            tm //= 2
    else:
        tm = _round_up(M, 16)
    M_pad = _round_up(M, tm)

    p3p = p3.astype(jnp.bfloat16)
    xp = x_flat.astype(jnp.bfloat16)
    if M_pad != M or K3_pad != K3_raw:
        p3p = jnp.pad(p3p, ((0, M_pad - M), (0, K3_pad - K3_raw)))
    if M_pad != M:
        xp = jnp.pad(xp, ((0, M_pad - M), (0, 0)))

    out = pl.pallas_call(
        _residual_kernel,
        out_shape=jax.ShapeDtypeStruct((M_pad, C_pad), jnp.bfloat16),
        grid=(M_pad // tm,),
        in_specs=[
            pl.BlockSpec((tm, K3_pad), lambda i: (i, 0)),
            pl.BlockSpec((tm, C_pad), lambda i: (i, 0)),
            pl.BlockSpec((K3_pad, C_pad), lambda i: (0, 0)),
            pl.BlockSpec((1, C_pad), lambda i: (0, 0)),
            pl.BlockSpec((C_pad, C_pad), lambda i: (0, 0)),
            pl.BlockSpec((1, C_pad), lambda i: (0, 0)),
        ],
        out_specs=pl.BlockSpec((tm, C_pad), lambda i: (i, 0)),
        compiler_params=pltpu.CompilerParams(
            dimension_semantics=("parallel",),
            vmem_limit_bytes=VMEM_LIMIT),
        cost_estimate=pl.CostEstimate(
            flops=2 * M_pad * C_pad * (K3_pad + C_pad),
            transcendentals=M_pad * C_pad,
            bytes_accessed=(M_pad * (K3_pad + 2 * C_pad)
                            + K3_pad * C_pad + C_pad * C_pad) * 2),
    )(p3p, xp, w1, b1.reshape(1, C_pad).astype(jnp.float32),
      w2, b2.reshape(1, C_pad).astype(jnp.float32))
    return out[:M]


# ---------------------------------------------------------------------------
# Plain-JAX glue: im2col, parameter init, BN folding, padding
# ---------------------------------------------------------------------------
def im2col(x, k, stride, pad):
    """x: (N,H,W,C) -> (N*Ho*Wo, k*k*C) patches ordered (kh, kw, C)."""
    N, H, W, C = x.shape
    xp = jnp.pad(x, ((0, 0), (pad, pad), (pad, pad), (0, 0)))
    Ho = (H + 2 * pad - k) // stride + 1
    Wo = (W + 2 * pad - k) // stride + 1
    cols = []
    for i in range(k):
        for j in range(k):
            cols.append(xp[:, i:i + stride * Ho:stride, j:j + stride * Wo:stride, :])
    patches = jnp.concatenate(cols, axis=-1)
    return patches.reshape(N * Ho * Wo, k * k * C), (N, Ho, Wo)


def _to_matmul_weight(w_pt):
    """PyTorch (Cout,Cin,kh,kw) -> im2col matmul weight (kh*kw*Cin, Cout)."""
    cout, cin, kh, kw = w_pt.shape
    return jnp.transpose(w_pt, (2, 3, 1, 0)).reshape(kh * kw * cin, cout)


def _init_conv(key, cout, cin, k, bias=True):
    kw_key, kb_key = jax.random.split(key)
    fan_in = cin * k * k
    w = jax.random.normal(kw_key, (cout, cin, k, k), jnp.float32) / jnp.sqrt(fan_in)
    if bias:
        b = 0.01 * jax.random.normal(kb_key, (cout,), jnp.float32)
    else:
        b = jnp.zeros((cout,), jnp.float32)
    return w, b


def _init_bn(key, c):
    k1, k2, k3, k4 = jax.random.split(key, 4)
    gamma = 1.0 + 0.1 * jax.random.normal(k1, (c,), jnp.float32)
    beta = 0.05 * jax.random.normal(k2, (c,), jnp.float32)
    mean = 0.1 * jax.random.normal(k3, (c,), jnp.float32)
    var = 1.0 + 0.1 * jnp.abs(jax.random.normal(k4, (c,), jnp.float32))
    return gamma, beta, mean, var


def _fold_bn(w_mat, b, bn):
    gamma, beta, mean, var = bn
    scale = gamma / jnp.sqrt(var + BN_EPS)
    return w_mat * scale[None, :], (b - mean) * scale + beta


def init_params(key, in_channels, hidden_dims, num_embeddings):
    """Logical (unpadded, f32) folded parameters — shared by Pallas & reference."""
    params = []
    cin = in_channels
    for h in hidden_dims:
        key, k1, k2, k3, k4, k5, k6 = jax.random.split(key, 7)
        down_w, down_b = _init_conv(k1, h, cin, 4)             # Conv2d(k=4,s=2,p=1)
        down_bn = _init_bn(k2, h)
        r1_w, _ = _init_conv(k3, h, h, 3, bias=False)          # Conv2d(k=3,p=1,bias=False)
        r1_bn = _init_bn(k4, h)
        r2_w, _ = _init_conv(k5, h, h, 1, bias=False)          # Conv2d(k=1,bias=False)
        r2_bn = _init_bn(k6, h)
        zeros = jnp.zeros((h,), jnp.float32)
        params.append(dict(
            down=_fold_bn(_to_matmul_weight(down_w), down_b, down_bn),
            res1=_fold_bn(_to_matmul_weight(r1_w), zeros, r1_bn),
            res2=_fold_bn(_to_matmul_weight(r2_w), zeros, r2_bn),
        ))
        cin = h
    key, kf = jax.random.split(key)
    fw, fb = _init_conv(kf, num_embeddings, cin, 1)            # Conv2d(k=1) with bias
    params.append(dict(final=(_to_matmul_weight(fw), fb)))
    return params


def _expand_weight(w_mat, k, cin, cin_pad, cout, cout_pad):
    """Zero-pad input-channel rows and output-channel columns of an im2col weight."""
    w = w_mat.reshape(k * k, cin, cout)
    w = jnp.pad(w, ((0, 0), (0, cin_pad - cin), (0, cout_pad - cout)))
    return w.reshape(k * k * cin_pad, cout_pad)


def _pad_contract(w):
    """Pad contracting dim to a 128 multiple (and to 1024 multiple if > 2048)."""
    K, N = w.shape
    K_pad = _round_up(K, LANE)
    if K_pad > 2048:
        K_pad = _round_up(K_pad, 1024)
    if K_pad != K:
        w = jnp.pad(w, ((0, K_pad - K), (0, 0)))
    return w


def prepare_pallas_params(params, in_channels, hidden_dims, num_embeddings):
    """Lane-pad + bf16-cast the folded parameters for the Pallas path."""
    layers = []
    cin, cin_pad = in_channels, in_channels     # first layer input is raw channels
    for h, layer in zip(hidden_dims, params[:-1]):
        c_pad = _round_up(h, LANE)
        dw, db = layer["down"]
        dw = _pad_contract(_expand_weight(dw, 4, cin, cin_pad, h, c_pad))
        r1w, r1b = layer["res1"]
        r1w = _expand_weight(r1w, 3, h, c_pad, h, c_pad)
        r2w, r2b = layer["res2"]
        r2w = _expand_weight(r2w, 1, h, c_pad, h, c_pad)
        layers.append(dict(
            down=(dw.astype(jnp.bfloat16), jnp.pad(db, (0, c_pad - h))),
            res1=(r1w.astype(jnp.bfloat16), jnp.pad(r1b, (0, c_pad - h))),
            res2=(r2w.astype(jnp.bfloat16), jnp.pad(r2b, (0, c_pad - h))),
        ))
        cin, cin_pad = h, c_pad
    fw, fb = params[-1]["final"]
    e_pad = _round_up(num_embeddings, LANE)
    fw = _expand_weight(fw, 1, cin, cin_pad, num_embeddings, e_pad)
    final = (fw.astype(jnp.bfloat16), jnp.pad(fb, (0, e_pad - num_embeddings)))
    return {"layers": layers, "final": final}


# ---------------------------------------------------------------------------
# Full encoder forward (Pallas path)
# ---------------------------------------------------------------------------
def vqvae_encoder_forward(pparams, x_nchw, num_embeddings):
    x = jnp.transpose(x_nchw, (0, 2, 3, 1)).astype(jnp.bfloat16)  # NCHW -> NHWC (bf16)
    for layer in pparams["layers"]:
        # [DownConv(k4,s2,p1) -> BN -> QuickGELU]
        w, b = layer["down"]
        c_pad = w.shape[1]
        patches, (N, Ho, Wo) = im2col(x, 4, 2, 1)
        y = conv_matmul(patches, w, b, act="quick_gelu", out_dtype=jnp.bfloat16)
        x = y.reshape(N, Ho, Wo, c_pad)
        # Fused ResidualLayer + QuickGELU
        w1, b1 = layer["res1"]
        w2, b2 = layer["res2"]
        patches3, _ = im2col(x, 3, 1, 1)
        y = residual_block(patches3, y, w1, b1, w2, b2)
        x = y.reshape(N, Ho, Wo, c_pad)
    # final Conv2d(cin, num_embeddings, k=1, s=1)
    wf, bf = pparams["final"]
    N, Ho, Wo, c_pad = x.shape
    yf = conv_matmul(x.reshape(N * Ho * Wo, c_pad), wf, bf,
                     act="none", out_dtype=jnp.float32)
    yf = yf[:, :num_embeddings].reshape(N, Ho, Wo, num_embeddings)
    return jnp.transpose(yf, (0, 3, 1, 2))  # back to NCHW


# ---------------------------------------------------------------------------
# Pure-JAX f32 reference (lax.conv) for correctness check
# ---------------------------------------------------------------------------
def _ref_conv(x, w_mat, b, k, stride, pad):
    cin = w_mat.shape[0] // (k * k)
    cout = w_mat.shape[1]
    w_hwio = w_mat.reshape(k, k, cin, cout)
    y = jax.lax.conv_general_dilated(
        x, w_hwio, (stride, stride), [(pad, pad), (pad, pad)],
        dimension_numbers=("NHWC", "HWIO", "NHWC"))
    return y + b[None, None, None, :]


def _qgelu(x):
    return x * jax.nn.sigmoid(1.702 * x)


def ref_forward(params, x_nchw):
    x = jnp.transpose(x_nchw, (0, 2, 3, 1))
    for layer in params[:-1]:
        w, b = layer["down"]
        x = _qgelu(_ref_conv(x, w, b, 4, 2, 1))
        w1, b1 = layer["res1"]
        t = _ref_conv(x, w1, b1, 3, 1, 1)
        t = jnp.where(t >= 0, t, 0.01 * t)
        w2, b2 = layer["res2"]
        x = _qgelu(x + _ref_conv(t, w2, b2, 1, 1, 0))
    wf, bf = params[-1]["final"]
    y = _ref_conv(x, wf, bf, 1, 1, 0)
    return jnp.transpose(y, (0, 3, 1, 2))


# ---------------------------------------------------------------------------
if __name__ == "__main__":
    batch, in_channels, spatial = 2, 4, 16
    hidden_dims = [8, 16]
    num_embeddings = 32

    key = jax.random.PRNGKey(0)
    key, kx = jax.random.split(key)
    x = jax.random.normal(kx, (batch, in_channels, spatial, spatial), jnp.float32)

    params = init_params(key, in_channels, hidden_dims, num_embeddings)
    pparams = prepare_pallas_params(params, in_channels, hidden_dims, num_embeddings)

    fwd = jax.jit(vqvae_encoder_forward, static_argnums=(2,))
    out = jax.block_until_ready(fwd(pparams, x, num_embeddings))

    expected_spatial = spatial // (2 ** len(hidden_dims))
    assert out.shape == (batch, num_embeddings, expected_spatial, expected_spatial), out.shape

    ref = jax.block_until_ready(ref_forward(params, x))
    max_err = float(jnp.max(jnp.abs(out - ref)))
    # bf16 operands with f32 accumulation -> looser tolerance than pure f32.
    assert jnp.allclose(out, ref, rtol=5e-2, atol=5e-2), \
        f"Pallas output mismatch vs reference (max abs err = {max_err})"

    print("KERNEL_OK")
</pallas_src>

<mosaic_0001>
module attributes {stable_mosaic.version = 11 : i64} {
  func.func @_conv_kernel(%arg0: i32, %arg1: i32, %arg2: i32, %arg3: memref<128x128xbf16, #tpu.memory_space<vmem>>, %arg4: memref<128x128xbf16, #tpu.memory_space<vmem>>, %arg5: memref<1x128xf32, #tpu.memory_space<vmem>>, %arg6: memref<128x128xbf16, #tpu.memory_space<vmem>>, %arg7: memref<128x128xf32, #tpu.memory_space<vmem>>) attributes {dimension_semantics = [#tpu.dimension_semantics<parallel>, #tpu.dimension_semantics<parallel>, #tpu.dimension_semantics<arbitrary>], iteration_bounds = array<i64: 1, 1, 1>, scalar_prefetch = 0 : i64, scratch_operands = 1 : i64, tpu.core_type = #tpu.core_type<tc>, window_params = [{transform_indices = @transform_0, window_bounds = array<i64: 128, 128>}, {transform_indices = @transform_1, window_bounds = array<i64: 128, 128>}, {transform_indices = @transform_2, window_bounds = array<i64: 1, 128>}, {transform_indices = @transform_3, window_bounds = array<i64: 128, 128>}]} {
    %c0_i32 = arith.constant 0 : i32
    %0 = arith.cmpi eq, %arg2, %c0_i32 : i32
    %1 = arith.extui %0 : i1 to i32
    %c0_i32_0 = arith.constant 0 : i32
    %2 = arith.cmpi ne, %1, %c0_i32_0 : i32
    scf.if %2 {
      %cst_10 = arith.constant 0.000000e+00 : f32
      %12 = vector.broadcast %cst_10 : f32 to vector<128x128xf32>
      %c0_11 = arith.constant 0 : index
      %c0_12 = arith.constant 0 : index
      %13 = vector.load %arg7[%c0_11, %c0_12] : memref<128x128xf32, #tpu.memory_space<vmem>>, vector<128x128xf32>
      tpu.vector_store %arg7[%c0_11, %c0_12], %12 {strides = array<i32>} : memref<128x128xf32, #tpu.memory_space<vmem>>, vector<128x128xf32>,
    } else {
    }
    %c0 = arith.constant 0 : index
    %c0_1 = arith.constant 0 : index
    %3 = vector.load %arg7[%c0, %c0_1] : memref<128x128xf32, #tpu.memory_space<vmem>>, vector<128x128xf32>
    %c0_2 = arith.constant 0 : index
    %c0_3 = arith.constant 0 : index
    %4 = vector.load %arg3[%c0_2, %c0_3] : memref<128x128xbf16, #tpu.memory_space<vmem>>, vector<128x128xbf16>
    %c0_4 = arith.constant 0 : index
    %c0_5 = arith.constant 0 : index
    %5 = vector.load %arg4[%c0_4, %c0_5] : memref<128x128xbf16, #tpu.memory_space<vmem>>, vector<128x128xbf16>
    %cst = arith.constant dense<0.000000e+00> : vector<128x128xf32>
    %6 = tpu.matmul %4, %5, %cst {dimension_numbers = #tpu.dot_dimension_numbers<[1], [0], [0], [1], [0, 0, 1, 1], [], []>} : vector<128x128xbf16>, vector<128x128xbf16>, vector<128x128xf32> -> vector<128x128xf32>
    %7 = arith.addf %3, %6 : vector<128x128xf32>
    %c0_6 = arith.constant 0 : index
    %c0_7 = arith.constant 0 : index
    %8 = vector.load %arg7[%c0_6, %c0_7] : memref<128x128xf32, #tpu.memory_space<vmem>>, vector<128x128xf32>
    tpu.vector_store %arg7[%c0_6, %c0_7], %7 {strides = array<i32>} : memref<128x128xf32, #tpu.memory_space<vmem>>, vector<128x128xf32>,
    %c0_i32_8 = arith.constant 0 : i32
    %9 = arith.cmpi eq, %arg2, %c0_i32_8 : i32
    %10 = arith.extui %9 : i1 to i32
    %c0_i32_9 = arith.constant 0 : i32
    %11 = arith.cmpi ne, %10, %c0_i32_9 : i32
    scf.if %11 {
      %c0_10 = arith.constant 0 : index
      %c0_11 = arith.constant 0 : index
      %12 = vector.load %arg7[%c0_10, %c0_11] : memref<128x128xf32, #tpu.memory_space<vmem>>, vector<128x128xf32>
      %c0_12 = arith.constant 0 : index
      %c0_13 = arith.constant 0 : index
      %13 = vector.load %arg5[%c0_12, %c0_13] : memref<1x128xf32, #tpu.memory_space<vmem>>, vector<1x128xf32>
      %14 = vector.broadcast %13 : vector<1x128xf32> to vector<128x128xf32>
      %15 = arith.addf %12, %14 : vector<128x128xf32>
      %cst_14 = arith.constant 1.702000e+00 : f32
      %16 = vector.broadcast %cst_14 : f32 to vector<128x128xf32>
      %17 = arith.mulf %16, %15 : vector<128x128xf32>
      %18 = arith.negf %17 : vector<128x128xf32>
      %19 = math.exp %18 : vector<128x128xf32>
      %cst_15 = arith.constant 1.000000e+00 : f32
      %20 = vector.broadcast %cst_15 : f32 to vector<128x128xf32>
      %21 = arith.addf %20, %19 : vector<128x128xf32>
      %22 = arith.divf %20, %21 : vector<128x128xf32>
      %23 = arith.mulf %15, %22 : vector<128x128xf32>
      %24 = arith.truncf %23 : vector<128x128xf32> to vector<128x128xbf16>
      %c0_16 = arith.constant 0 : index
      %c0_17 = arith.constant 0 : index
      %25 = vector.load %arg6[%c0_16, %c0_17] : memref<128x128xbf16, #tpu.memory_space<vmem>>, vector<128x128xbf16>
      tpu.vector_store %arg6[%c0_16, %c0_17], %24 {strides = array<i32>} : memref<128x128xbf16, #tpu.memory_space<vmem>>, vector<128x128xbf16>,
    } else {
    }
    return
  }
  func.func @transform_0(%arg0: i32, %arg1: i32, %arg2: i32) -> (i32, i32) {
    %c0_i32 = arith.constant 0 : i32
    return %arg0, %arg2 : i32, i32
  }
  func.func @transform_1(%arg0: i32, %arg1: i32, %arg2: i32) -> (i32, i32) {
    %c0_i32 = arith.constant 0 : i32
    return %arg2, %arg1 : i32, i32
  }
  func.func @transform_2(%arg0: i32, %arg1: i32, %arg2: i32) -> (i32, i32) {
    %c0_i32 = arith.constant 0 : i32
    %c0_i32_0 = arith.constant 0 : i32
    return %c0_i32, %arg1 : i32, i32
  }
  func.func @transform_3(%arg0: i32, %arg1: i32, %arg2: i32) -> (i32, i32) {
    %c0_i32 = arith.constant 0 : i32
    return %arg0, %arg1 : i32, i32
  }
}

module attributes {stable_mosaic.version = 11 : i64} {
  func.func @_residual_kernel(%arg0: i32, %arg1: memref<128x1152xbf16, #tpu.memory_space<vmem>>, %arg2: memref<128x128xbf16, #tpu.memory_space<vmem>>, %arg3: memref<1152x128xbf16, #tpu.memory_space<vmem>>, %arg4: memref<1x128xf32, #tpu.memory_space<vmem>>, %arg5: memref<128x128xbf16, #tpu.memory_space<vmem>>, %arg6: memref<1x128xf32, #tpu.memory_space<vmem>>, %arg7: memref<128x128xbf16, #tpu.memory_space<vmem>>) attributes {dimension_semantics = [#tpu.dimension_semantics<parallel>], iteration_bounds = array<i64: 1>, scalar_prefetch = 0 : i64, scratch_operands = 0 : i64, tpu.core_type = #tpu.core_type<tc>, window_params = [{transform_indices = @transform_0, window_bounds = array<i64: 128, 1152>}, {transform_indices = @transform_1, window_bounds = array<i64: 128, 128>}, {pipeline_mode = #tpu.pipeline_mode<synchronous>, transform_indices = @transform_2, window_bounds = array<i64: 1152, 128>}, {pipeline_mode = #tpu.pipeline_mode<synchronous>, transform_indices = @transform_3, window_bounds = array<i64: 1, 128>}, {pipeline_mode = #tpu.pipeline_mode<synchronous>, transform_indices = @transform_4, window_bounds = array<i64: 128, 128>}, {pipeline_mode = #tpu.pipeline_mode<synchronous>, transform_indices = @transform_5, window_bounds = array<i64: 1, 128>}, {transform_indices = @transform_6, window_bounds = array<i64: 128, 128>}]} {
    %c0 = arith.constant 0 : index
    %c0_0 = arith.constant 0 : index
    %0 = vector.load %arg1[%c0, %c0_0] : memref<128x1152xbf16, #tpu.memory_space<vmem>>, vector<128x1152xbf16>
    %c0_1 = arith.constant 0 : index
    %c0_2 = arith.constant 0 : index
    %1 = vector.load %arg3[%c0_1, %c0_2] : memref<1152x128xbf16, #tpu.memory_space<vmem>>, vector<1152x128xbf16>
    %cst = arith.constant dense<0.000000e+00> : vector<128x128xf32>
    %2 = tpu.matmul %0, %1, %cst {dimension_numbers = #tpu.dot_dimension_numbers<[1], [0], [0], [1], [0, 0, 1, 1], [], []>} : vector<128x1152xbf16>, vector<1152x128xbf16>, vector<128x128xf32> -> vector<128x128xf32>
    %c0_3 = arith.constant 0 : index
    %c0_4 = arith.constant 0 : index
    %3 = vector.load %arg4[%c0_3, %c0_4] : memref<1x128xf32, #tpu.memory_space<vmem>>, vector<1x128xf32>
    %4 = vector.broadcast %3 : vector<1x128xf32> to vector<128x128xf32>
    %5 = arith.addf %2, %4 : vector<128x128xf32>
    %cst_5 = arith.constant 0.000000e+00 : f32
    %6 = vector.broadcast %cst_5 : f32 to vector<128x128xf32>
    %7 = arith.cmpf oge, %5, %6 : vector<128x128xf32>
    %cst_6 = arith.constant 0.00999999977 : f32
    %8 = vector.broadcast %cst_6 : f32 to vector<128x128xf32>
    %9 = arith.mulf %8, %5 : vector<128x128xf32>
    %10 = arith.select %7, %5, %9 : vector<128x128xi1>, vector<128x128xf32>
    %11 = arith.truncf %10 : vector<128x128xf32> to vector<128x128xbf16>
    %c0_7 = arith.constant 0 : index
    %c0_8 = arith.constant 0 : index
    %12 = vector.load %arg5[%c0_7, %c0_8] : memref<128x128xbf16, #tpu.memory_space<vmem>>, vector<128x128xbf16>
    %cst_9 = arith.constant dense<0.000000e+00> : vector<128x128xf32>
    %13 = tpu.matmul %11, %12, %cst_9 {dimension_numbers = #tpu.dot_dimension_numbers<[1], [0], [0], [1], [0, 0, 1, 1], [], []>} : vector<128x128xbf16>, vector<128x128xbf16>, vector<128x128xf32> -> vector<128x128xf32>
    %c0_10 = arith.constant 0 : index
    %c0_11 = arith.constant 0 : index
    %14 = vector.load %arg6[%c0_10, %c0_11] : memref<1x128xf32, #tpu.memory_space<vmem>>, vector<1x128xf32>
    %15 = vector.broadcast %14 : vector<1x128xf32> to vector<128x128xf32>
    %16 = arith.addf %13, %15 : vector<128x128xf32>
    %c0_12 = arith.constant 0 : index
    %c0_13 = arith.constant 0 : index
    %17 = vector.load %arg2[%c0_12, %c0_13] : memref<128x128xbf16, #tpu.memory_space<vmem>>, vector<128x128xbf16>
    %18 = arith.extf %17 : vector<128x128xbf16> to vector<128x128xf32>
    %19 = arith.addf %18, %16 : vector<128x128xf32>
    %cst_14 = arith.constant 1.702000e+00 : f32
    %20 = vector.broadcast %cst_14 : f32 to vector<128x128xf32>
    %21 = arith.mulf %20, %19 : vector<128x128xf32>
    %22 = arith.negf %21 : vector<128x128xf32>
    %23 = math.exp %22 : vector<128x128xf32>
    %cst_15 = arith.constant 1.000000e+00 : f32
    %24 = vector.broadcast %cst_15 : f32 to vector<128x128xf32>
    %25 = arith.addf %24, %23 : vector<128x128xf32>
    %26 = arith.divf %24, %25 : vector<128x128xf32>
    %27 = arith.mulf %19, %26 : vector<128x128xf32>
    %28 = arith.truncf %27 : vector<128x128xf32> to vector<128x128xbf16>
    %c0_16 = arith.constant 0 : index
    %c0_17 = arith.constant 0 : index
    %29 = vector.load %arg7[%c0_16, %c0_17] : memref<128x128xbf16, #tpu.memory_space<vmem>>, vector<128x128xbf16>
    tpu.vector_store %arg7[%c0_16, %c0_17], %28 {strides = array<i32>} : memref<128x128xbf16, #tpu.memory_space<vmem>>, vector<128x128xbf16>,
    return
  }
  func.func @transform_0(%arg0: i32) -> (i32, i32) {
    %c0_i32 = arith.constant 0 : i32
    %c0_i32_0 = arith.constant 0 : i32
    return %arg0, %c0_i32 : i32, i32
  }
  func.func @transform_1(%arg0: i32) -> (i32, i32) {
    %c0_i32 = arith.constant 0 : i32
    %c0_i32_0 = arith.constant 0 : i32
    return %arg0, %c0_i32 : i32, i32
  }
  func.func @transform_2(%arg0: i32) -> (i32, i32) {
    %c0_i32 = arith.constant 0 : i32
    %c0_i32_0 = arith.constant 0 : i32
    %c0_i32_1 = arith.constant 0 : i32
    return %c0_i32, %c0_i32_0 : i32, i32
  }
  func.func @transform_3(%arg0: i32) -> (i32, i32) {
    %c0_i32 = arith.constant 0 : i32
    %c0_i32_0 = arith.constant 0 : i32
    %c0_i32_1 = arith.constant 0 : i32
    return %c0_i32, %c0_i32_0 : i32, i32
  }
  func.func @transform_4(%arg0: i32) -> (i32, i32) {
    %c0_i32 = arith.constant 0 : i32
    %c0_i32_0 = arith.constant 0 : i32
    %c0_i32_1 = arith.constant 0 : i32
    return %c0_i32, %c0_i32_0 : i32, i32
  }
  func.func @transform_5(%arg0: i32) -> (i32, i32) {
    %c0_i32 = arith.constant 0 : i32
    %c0_i32_0 = arith.constant 0 : i32
    %c0_i32_1 = arith.constant 0 : i32
    return %c0_i32, %c0_i32_0 : i32, i32
  }
  func.func @transform_6(%arg0: i32) -> (i32, i32) {
    %c0_i32 = arith.constant 0 : i32
    %c0_i32_0 = arith.constant 0 : i32
    return %arg0, %c0_i32 : i32, i32
  }
}

module attributes {stable_mosaic.version = 11 : i64} {
  func.func @_conv_kernel(%arg0: i32, %arg1: i32, %arg2: i32, %arg3: memref<32x1024xbf16, #tpu.memory_space<vmem>>, %arg4: memref<1024x128xbf16, #tpu.memory_space<vmem>>, %arg5: memref<1x128xf32, #tpu.memory_space<vmem>>, %arg6: memref<32x128xbf16, #tpu.memory_space<vmem>>, %arg7: memref<32x128xf32, #tpu.memory_space<vmem>>) attributes {dimension_semantics = [#tpu.dimension_semantics<parallel>, #tpu.dimension_semantics<parallel>, #tpu.dimension_semantics<arbitrary>], iteration_bounds = array<i64: 1, 1, 2>, scalar_prefetch = 0 : i64, scratch_operands = 1 : i64, tpu.core_type = #tpu.core_type<tc>, window_params = [{transform_indices = @transform_0, window_bounds = array<i64: 32, 1024>}, {transform_indices = @transform_1, window_bounds = array<i64: 1024, 128>}, {transform_indices = @transform_2, window_bounds = array<i64: 1, 128>}, {transform_indices = @transform_3, window_bounds = array<i64: 32, 128>}]} {
    %c0_i32 = arith.constant 0 : i32
    %0 = arith.cmpi eq, %arg2, %c0_i32 : i32
    %1 = arith.extui %0 : i1 to i32
    %c0_i32_0 = arith.constant 0 : i32
    %2 = arith.cmpi ne, %1, %c0_i32_0 : i32
    scf.if %2 {
      %cst_9 = arith.constant 0.000000e+00 : f32
      %12 = vector.broadcast %cst_9 : f32 to vector<32x128xf32>
      %c0_10 = arith.constant 0 : index
      %c0_11 = arith.constant 0 : index
      %13 = vector.load %arg7[%c0_10, %c0_11] : memref<32x128xf32, #tpu.memory_space<vmem>>, vector<32x128xf32>
      tpu.vector_store %arg7[%c0_10, %c0_11], %12 {strides = array<i32>} : memref<32x128xf32, #tpu.memory_space<vmem>>, vector<32x128xf32>,
    } else {
    }
    %c0 = arith.constant 0 : index
    %c0_1 = arith.constant 0 : index
    %3 = vector.load %arg7[%c0, %c0_1] : memref<32x128xf32, #tpu.memory_space<vmem>>, vector<32x128xf32>
    %c0_2 = arith.constant 0 : index
    %c0_3 = arith.constant 0 : index
    %4 = vector.load %arg3[%c0_2, %c0_3] : memref<32x1024xbf16, #tpu.memory_space<vmem>>, vector<32x1024xbf16>
    %c0_4 = arith.constant 0 : index
    %c0_5 = arith.constant 0 : index
    %5 = vector.load %arg4[%c0_4, %c0_5] : memref<1024x128xbf16, #tpu.memory_space<vmem>>, vector<1024x128xbf16>
    %cst = arith.constant dense<0.000000e+00> : vector<32x128xf32>
    %6 = tpu.matmul %4, %5, %cst {dimension_numbers = #tpu.dot_dimension_numbers<[1], [0], [0], [1], [0, 0, 1, 1], [], []>} : vector<32x1024xbf16>, vector<1024x128xbf16>, vector<32x128xf32> -> vector<32x128xf32>
    %7 = arith.addf %3, %6 : vector<32x128xf32>
    %c0_6 = arith.constant 0 : index
    %c0_7 = arith.constant 0 : index
    %8 = vector.load %arg7[%c0_6, %c0_7] : memref<32x128xf32, #tpu.memory_space<vmem>>, vector<32x128xf32>
    tpu.vector_store %arg7[%c0_6, %c0_7], %7 {strides = array<i32>} : memref<32x128xf32, #tpu.memory_space<vmem>>, vector<32x128xf32>,
    %c1_i32 = arith.constant 1 : i32
    %9 = arith.cmpi eq, %arg2, %c1_i32 : i32
    %10 = arith.extui %9 : i1 to i32
    %c0_i32_8 = arith.constant 0 : i32
    %11 = arith.cmpi ne, %10, %c0_i32_8 : i32
    scf.if %11 {
      %c0_9 = arith.constant 0 : index
      %c0_10 = arith.constant 0 : index
      %12 = vector.load %arg7[%c0_9, %c0_10] : memref<32x128xf32, #tpu.memory_space<vmem>>, vector<32x128xf32>
      %c0_11 = arith.constant 0 : index
      %c0_12 = arith.constant 0 : index
      %13 = vector.load %arg5[%c0_11, %c0_12] : memref<1x128xf32, #tpu.memory_space<vmem>>, vector<1x128xf32>
      %14 = vector.broadcast %13 : vector<1x128xf32> to vector<32x128xf32>
      %15 = arith.addf %12, %14 : vector<32x128xf32>
      %cst_13 = arith.constant 1.702000e+00 : f32
      %16 = vector.broadcast %cst_13 : f32 to vector<32x128xf32>
      %17 = arith.mulf %16, %15 : vector<32x128xf32>
      %18 = arith.negf %17 : vector<32x128xf32>
      %19 = math.exp %18 : vector<32x128xf32>
      %cst_14 = arith.constant 1.000000e+00 : f32
      %20 = vector.broadcast %cst_14 : f32 to vector<32x128xf32>
      %21 = arith.addf %20, %19 : vector<32x128xf32>
      %22 = arith.divf %20, %21 : vector<32x128xf32>
      %23 = arith.mulf %15, %22 : vector<32x128xf32>
      %24 = arith.truncf %23 : vector<32x128xf32> to vector<32x128xbf16>
      %c0_15 = arith.constant 0 : index
      %c0_16 = arith.constant 0 : index
      %25 = vector.load %arg6[%c0_15, %c0_16] : memref<32x128xbf16, #tpu.memory_space<vmem>>, vector<32x128xbf16>
      tpu.vector_store %arg6[%c0_15, %c0_16], %24 {strides = array<i32>} : memref<32x128xbf16, #tpu.memory_space<vmem>>, vector<32x128xbf16>,
    } else {
    }
    return
  }
  func.func @transform_0(%arg0: i32, %arg1: i32, %arg2: i32) -> (i32, i32) {
    %c0_i32 = arith.constant 0 : i32
    return %arg0, %arg2 : i32, i32
  }
  func.func @transform_1(%arg0: i32, %arg1: i32, %arg2: i32) -> (i32, i32) {
    %c0_i32 = arith.constant 0 : i32
    return %arg2, %arg1 : i32, i32
  }
  func.func @transform_2(%arg0: i32, %arg1: i32, %arg2: i32) -> (i32, i32) {
    %c0_i32 = arith.constant 0 : i32
    %c0_i32_0 = arith.constant 0 : i32
    return %c0_i32, %arg1 : i32, i32
  }
  func.func @transform_3(%arg0: i32, %arg1: i32, %arg2: i32) -> (i32, i32) {
    %c0_i32 = arith.constant 0 : i32
    return %arg0, %arg1 : i32, i32
  }
}

module attributes {stable_mosaic.version = 11 : i64} {
  func.func @_residual_kernel(%arg0: i32, %arg1: memref<32x1152xbf16, #tpu.memory_space<vmem>>, %arg2: memref<32x128xbf16, #tpu.memory_space<vmem>>, %arg3: memref<1152x128xbf16, #tpu.memory_space<vmem>>, %arg4: memref<1x128xf32, #tpu.memory_space<vmem>>, %arg5: memref<128x128xbf16, #tpu.memory_space<vmem>>, %arg6: memref<1x128xf32, #tpu.memory_space<vmem>>, %arg7: memref<32x128xbf16, #tpu.memory_space<vmem>>) attributes {dimension_semantics = [#tpu.dimension_semantics<parallel>], iteration_bounds = array<i64: 1>, scalar_prefetch = 0 : i64, scratch_operands = 0 : i64, tpu.core_type = #tpu.core_type<tc>, window_params = [{transform_indices = @transform_0, window_bounds = array<i64: 32, 1152>}, {transform_indices = @transform_1, window_bounds = array<i64: 32, 128>}, {pipeline_mode = #tpu.pipeline_mode<synchronous>, transform_indices = @transform_2, window_bounds = array<i64: 1152, 128>}, {pipeline_mode = #tpu.pipeline_mode<synchronous>, transform_indices = @transform_3, window_bounds = array<i64: 1, 128>}, {pipeline_mode = #tpu.pipeline_mode<synchronous>, transform_indices = @transform_4, window_bounds = array<i64: 128, 128>}, {pipeline_mode = #tpu.pipeline_mode<synchronous>, transform_indices = @transform_5, window_bounds = array<i64: 1, 128>}, {transform_indices = @transform_6, window_bounds = array<i64: 32, 128>}]} {
    %c0 = arith.constant 0 : index
    %c0_0 = arith.constant 0 : index
    %0 = vector.load %arg1[%c0, %c0_0] : memref<32x1152xbf16, #tpu.memory_space<vmem>>, vector<32x1152xbf16>
    %c0_1 = arith.constant 0 : index
    %c0_2 = arith.constant 0 : index
    %1 = vector.load %arg3[%c0_1, %c0_2] : memref<1152x128xbf16, #tpu.memory_space<vmem>>, vector<1152x128xbf16>
    %cst = arith.constant dense<0.000000e+00> : vector<32x128xf32>
    %2 = tpu.matmul %0, %1, %cst {dimension_numbers = #tpu.dot_dimension_numbers<[1], [0], [0], [1], [0, 0, 1, 1], [], []>} : vector<32x1152xbf16>, vector<1152x128xbf16>, vector<32x128xf32> -> vector<32x128xf32>
    %c0_3 = arith.constant 0 : index
    %c0_4 = arith.constant 0 : index
    %3 = vector.load %arg4[%c0_3, %c0_4] : memref<1x128xf32, #tpu.memory_space<vmem>>, vector<1x128xf32>
    %4 = vector.broadcast %3 : vector<1x128xf32> to vector<32x128xf32>
    %5 = arith.addf %2, %4 : vector<32x128xf32>
    %cst_5 = arith.constant 0.000000e+00 : f32
    %6 = vector.broadcast %cst_5 : f32 to vector<32x128xf32>
    %7 = arith.cmpf oge, %5, %6 : vector<32x128xf32>
    %cst_6 = arith.constant 0.00999999977 : f32
    %8 = vector.broadcast %cst_6 : f32 to vector<32x128xf32>
    %9 = arith.mulf %8, %5 : vector<32x128xf32>
    %10 = arith.select %7, %5, %9 : vector<32x128xi1>, vector<32x128xf32>
    %11 = arith.truncf %10 : vector<32x128xf32> to vector<32x128xbf16>
    %c0_7 = arith.constant 0 : index
    %c0_8 = arith.constant 0 : index
    %12 = vector.load %arg5[%c0_7, %c0_8] : memref<128x128xbf16, #tpu.memory_space<vmem>>, vector<128x128xbf16>
    %cst_9 = arith.constant dense<0.000000e+00> : vector<32x128xf32>
    %13 = tpu.matmul %11, %12, %cst_9 {dimension_numbers = #tpu.dot_dimension_numbers<[1], [0], [0], [1], [0, 0, 1, 1], [], []>} : vector<32x128xbf16>, vector<128x128xbf16>, vector<32x128xf32> -> vector<32x128xf32>
    %c0_10 = arith.constant 0 : index
    %c0_11 = arith.constant 0 : index
    %14 = vector.load %arg6[%c0_10, %c0_11] : memref<1x128xf32, #tpu.memory_space<vmem>>, vector<1x128xf32>
    %15 = vector.broadcast %14 : vector<1x128xf32> to vector<32x128xf32>
    %16 = arith.addf %13, %15 : vector<32x128xf32>
    %c0_12 = arith.constant 0 : index
    %c0_13 = arith.constant 0 : index
    %17 = vector.load %arg2[%c0_12, %c0_13] : memref<32x128xbf16, #tpu.memory_space<vmem>>, vector<32x128xbf16>
    %18 = arith.extf %17 : vector<32x128xbf16> to vector<32x128xf32>
    %19 = arith.addf %18, %16 : vector<32x128xf32>
    %cst_14 = arith.constant 1.702000e+00 : f32
    %20 = vector.broadcast %cst_14 : f32 to vector<32x128xf32>
    %21 = arith.mulf %20, %19 : vector<32x128xf32>
    %22 = arith.negf %21 : vector<32x128xf32>
    %23 = math.exp %22 : vector<32x128xf32>
    %cst_15 = arith.constant 1.000000e+00 : f32
    %24 = vector.broadcast %cst_15 : f32 to vector<32x128xf32>
    %25 = arith.addf %24, %23 : vector<32x128xf32>
    %26 = arith.divf %24, %25 : vector<32x128xf32>
    %27 = arith.mulf %19, %26 : vector<32x128xf32>
    %28 = arith.truncf %27 : vector<32x128xf32> to vector<32x128xbf16>
    %c0_16 = arith.constant 0 : index
    %c0_17 = arith.constant 0 : index
    %29 = vector.load %arg7[%c0_16, %c0_17] : memref<32x128xbf16, #tpu.memory_space<vmem>>, vector<32x128xbf16>
    tpu.vector_store %arg7[%c0_16, %c0_17], %28 {strides = array<i32>} : memref<32x128xbf16, #tpu.memory_space<vmem>>, vector<32x128xbf16>,
    return
  }
  func.func @transform_0(%arg0: i32) -> (i32, i32) {
    %c0_i32 = arith.constant 0 : i32
    %c0_i32_0 = arith.constant 0 : i32
    return %arg0, %c0_i32 : i32, i32
  }
  func.func @transform_1(%arg0: i32) -> (i32, i32) {
    %c0_i32 = arith.constant 0 : i32
    %c0_i32_0 = arith.constant 0 : i32
    return %arg0, %c0_i32 : i32, i32
  }
  func.func @transform_2(%arg0: i32) -> (i32, i32) {
    %c0_i32 = arith.constant 0 : i32
    %c0_i32_0 = arith.constant 0 : i32
    %c0_i32_1 = arith.constant 0 : i32
    return %c0_i32, %c0_i32_0 : i32, i32
  }
  func.func @transform_3(%arg0: i32) -> (i32, i32) {
    %c0_i32 = arith.constant 0 : i32
    %c0_i32_0 = arith.constant 0 : i32
    %c0_i32_1 = arith.constant 0 : i32
    return %c0_i32, %c0_i32_0 : i32, i32
  }
  func.func @transform_4(%arg0: i32) -> (i32, i32) {
    %c0_i32 = arith.constant 0 : i32
    %c0_i32_0 = arith.constant 0 : i32
    %c0_i32_1 = arith.constant 0 : i32
    return %c0_i32, %c0_i32_0 : i32, i32
  }
  func.func @transform_5(%arg0: i32) -> (i32, i32) {
    %c0_i32 = arith.constant 0 : i32
    %c0_i32_0 = arith.constant 0 : i32
    %c0_i32_1 = arith.constant 0 : i32
    return %c0_i32, %c0_i32_0 : i32, i32
  }
  func.func @transform_6(%arg0: i32) -> (i32, i32) {
    %c0_i32 = arith.constant 0 : i32
    %c0_i32_0 = arith.constant 0 : i32
    return %arg0, %c0_i32 : i32, i32
  }
}

module attributes {stable_mosaic.version = 11 : i64} {
  func.func @_conv_kernel(%arg0: i32, %arg1: i32, %arg2: i32, %arg3: memref<32x128xbf16, #tpu.memory_space<vmem>>, %arg4: memref<128x128xbf16, #tpu.memory_space<vmem>>, %arg5: memref<1x128xf32, #tpu.memory_space<vmem>>, %arg6: memref<32x128xf32, #tpu.memory_space<vmem>>, %arg7: memref<32x128xf32, #tpu.memory_space<vmem>>) attributes {dimension_semantics = [#tpu.dimension_semantics<parallel>, #tpu.dimension_semantics<parallel>, #tpu.dimension_semantics<arbitrary>], iteration_bounds = array<i64: 1, 1, 1>, scalar_prefetch = 0 : i64, scratch_operands = 1 : i64, tpu.core_type = #tpu.core_type<tc>, window_params = [{transform_indices = @transform_0, window_bounds = array<i64: 32, 128>}, {transform_indices = @transform_1, window_bounds = array<i64: 128, 128>}, {transform_indices = @transform_2, window_bounds = array<i64: 1, 128>}, {transform_indices = @transform_3, window_bounds = array<i64: 32, 128>}]} {
    %c0_i32 = arith.constant 0 : i32
    %0 = arith.cmpi eq, %arg2, %c0_i32 : i32
    %1 = arith.extui %0 : i1 to i32
    %c0_i32_0 = arith.constant 0 : i32
    %2 = arith.cmpi ne, %1, %c0_i32_0 : i32
    scf.if %2 {
      %cst_10 = arith.constant 0.000000e+00 : f32
      %12 = vector.broadcast %cst_10 : f32 to vector<32x128xf32>
      %c0_11 = arith.constant 0 : index
      %c0_12 = arith.constant 0 : index
      %13 = vector.load %arg7[%c0_11, %c0_12] : memref<32x128xf32, #tpu.memory_space<vmem>>, vector<32x128xf32>
      tpu.vector_store %arg7[%c0_11, %c0_12], %12 {strides = array<i32>} : memref<32x128xf32, #tpu.memory_space<vmem>>, vector<32x128xf32>,
    } else {
    }
    %c0 = arith.constant 0 : index
    %c0_1 = arith.constant 0 : index
    %3 = vector.load %arg7[%c0, %c0_1] : memref<32x128xf32, #tpu.memory_space<vmem>>, vector<32x128xf32>
    %c0_2 = arith.constant 0 : index
    %c0_3 = arith.constant 0 : index
    %4 = vector.load %arg3[%c0_2, %c0_3] : memref<32x128xbf16, #tpu.memory_space<vmem>>, vector<32x128xbf16>
    %c0_4 = arith.constant 0 : index
    %c0_5 = arith.constant 0 : index
    %5 = vector.load %arg4[%c0_4, %c0_5] : memref<128x128xbf16, #tpu.memory_space<vmem>>, vector<128x128xbf16>
    %cst = arith.constant dense<0.000000e+00> : vector<32x128xf32>
    %6 = tpu.matmul %4, %5, %cst {dimension_numbers = #tpu.dot_dimension_numbers<[1], [0], [0], [1], [0, 0, 1, 1], [], []>} : vector<32x128xbf16>, vector<128x128xbf16>, vector<32x128xf32> -> vector<32x128xf32>
    %7 = arith.addf %3, %6 : vector<32x128xf32>
    %c0_6 = arith.constant 0 : index
    %c0_7 = arith.constant 0 : index
    %8 = vector.load %arg7[%c0_6, %c0_7] : memref<32x128xf32, #tpu.memory_space<vmem>>, vector<32x128xf32>
    tpu.vector_store %arg7[%c0_6, %c0_7], %7 {strides = array<i32>} : memref<32x128xf32, #tpu.memory_space<vmem>>, vector<32x128xf32>,
    %c0_i32_8 = arith.constant 0 : i32
    %9 = arith.cmpi eq, %arg2, %c0_i32_8 : i32
    %10 = arith.extui %9 : i1 to i32
    %c0_i32_9 = arith.constant 0 : i32
    %11 = arith.cmpi ne, %10, %c0_i32_9 : i32
    scf.if %11 {
      %c0_10 = arith.constant 0 : index
      %c0_11 = arith.constant 0 : index
      %12 = vector.load %arg7[%c0_10, %c0_11] : memref<32x128xf32, #tpu.memory_space<vmem>>, vector<32x128xf32>
      %c0_12 = arith.constant 0 : index
      %c0_13 = arith.constant 0 : index
      %13 = vector.load %arg5[%c0_12, %c0_13] : memref<1x128xf32, #tpu.memory_space<vmem>>, vector<1x128xf32>
      %14 = vector.broadcast %13 : vector<1x128xf32> to vector<32x128xf32>
      %15 = arith.addf %12, %14 : vector<32x128xf32>
      %c0_14 = arith.constant 0 : index
      %c0_15 = arith.constant 0 : index
      %16 = vector.load %arg6[%c0_14, %c0_15] : memref<32x128xf32, #tpu.memory_space<vmem>>, vector<32x128xf32>
      tpu.vector_store %arg6[%c0_14, %c0_15], %15 {strides = array<i32>} : memref<32x128xf32, #tpu.memory_space<vmem>>, vector<32x128xf32>,
    } else {
    }
    return
  }
  func.func @transform_0(%arg0: i32, %arg1: i32, %arg2: i32) -> (i32, i32) {
    %c0_i32 = arith.constant 0 : i32
    return %arg0, %arg2 : i32, i32
  }
  func.func @transform_1(%arg0: i32, %arg1: i32, %arg2: i32) -> (i32, i32) {
    %c0_i32 = arith.constant 0 : i32
    return %arg2, %arg1 : i32, i32
  }
  func.func @transform_2(%arg0: i32, %arg1: i32, %arg2: i32) -> (i32, i32) {
    %c0_i32 = arith.constant 0 : i32
    %c0_i32_0 = arith.constant 0 : i32
    return %c0_i32, %arg1 : i32, i32
  }
  func.func @transform_3(%arg0: i32, %arg1: i32, %arg2: i32) -> (i32, i32) {
    %c0_i32 = arith.constant 0 : i32
    return %arg0, %arg1 : i32, i32
  }
}

</mosaic_0001>

<llo_original>
// kernel: vqvae_encoder_forward.5
$region0: #{vqvae_encoder_forward.5}
  #allocation0 [shape = 'u32[]', space=smem, size = 0x4, offset = 0x4, fixed_abs, tag = 'smem constant byte address 0x4 - core index']
  #allocation1 [shape = 'u32[144,128]{1,0:T(1,128)}', space=vmem, size = 0x12000, scoped, tag = 'internal scratch']
  #allocation2 [shape = 'f32[128,128]{1,0:T(8,128)}', space=vmem, size = 0x10000, scoped, tag = 'scratch operand']
  %s0 = inlined_call_operand.vmem [shape: bf16[128,128], index: 0, kind: input, shape index: {}]
  %s1 = inlined_call_operand.vmem [shape: bf16[128,128], index: 1, kind: input, shape index: {}]
  %s2 = inlined_call_operand.vmem [shape: f32[1,128], index: 2, kind: input, shape index: {}]
  %s3 = inlined_call_operand.vmem [shape: bf16[128,128], index: 3, kind: output, shape index: {}]
  %s4 = sld [smem:[#allocation0]]
  $region30: #{vqvae_encoder_forward.5} parent=0
    _
  %s6 = ssub.s32 1, %s4
  %s7 = scalar_select 0, %s6, %s4
  // Predicated region
  $region2: #{vqvae_encoder_forward.5} parent=0 // pred_check
    _
  $region3: #{vqvae_encoder_forward.5} parent=0 // pred_check_branch
    %9 = sbr.rel (0) target = $region5
  $region4: #{vqvae_encoder_forward.5} parent=0 // pred_region
    _
  $region5: #{vqvae_encoder_forward.5} parent=0 // pred_fallthru
    _
  // Predicated region
  $region6: #{vqvae_encoder_forward.5} parent=0 // pred_check
    _
  $region7: #{vqvae_encoder_forward.5} parent=0 // pred_check_branch
    %11 = sbr.rel (0) target = $region9
  $region8: #{vqvae_encoder_forward.5} parent=0 // pred_region
    _
  $region9: #{vqvae_encoder_forward.5} parent=0 // pred_fallthru
    _
  // Predicated region
  $region10: #{vqvae_encoder_forward.5} parent=0 // pred_check
    _
  $region11: #{vqvae_encoder_forward.5} parent=0 // pred_check_branch
    %13 = sbr.rel (0) target = $region13
  $region12: #{vqvae_encoder_forward.5} parent=0 // pred_region
    _
  $region13: #{vqvae_encoder_forward.5} parent=0 // pred_fallthru
    _
  %p15 = scmp.eq.s32.totalorder 0, 0
  // Predicated region
  $region14: #{vqvae_encoder_forward.5} parent=0 // pred_check
    %p16 = pneg %p15
  $region15: #{vqvae_encoder_forward.5} parent=0 // pred_check_branch
    %18 = sbr.rel (%p16) target = $region17
  $region16: #{vqvae_encoder_forward.5} parent=0 // pred_region
    %19 = vst [vmem:[#allocation2] sm:$0xff] 0.0
    %20 = vst [vmem:[#allocation2 + $0x8] sm:$0xff] 0.0
    %21 = vst [vmem:[#allocation2 + $0x10] sm:$0xff] 0.0
    %22 = vst [vmem:[#allocation2 + $0x18] sm:$0xff] 0.0
    %23 = vst [vmem:[#allocation2 + $0x20] sm:$0xff] 0.0
    %24 = vst [vmem:[#allocation2 + $0x28] sm:$0xff] 0.0
    %25 = vst [vmem:[#allocation2 + $0x30] sm:$0xff] 0.0
    %26 = vst [vmem:[#allocation2 + $0x38] sm:$0xff] 0.0
    %27 = vst [vmem:[#allocation2 + $0x40] sm:$0xff] 0.0
    %28 = vst [vmem:[#allocation2 + $0x48] sm:$0xff] 0.0
    %29 = vst [vmem:[#allocation2 + $0x50] sm:$0xff] 0.0
    %30 = vst [vmem:[#allocation2 + $0x58] sm:$0xff] 0.0
    %31 = vst [vmem:[#allocation2 + $0x60] sm:$0xff] 0.0
    %32 = vst [vmem:[#allocation2 + $0x68] sm:$0xff] 0.0
    %33 = vst [vmem:[#allocation2 + $0x70] sm:$0xff] 0.0
    %34 = vst [vmem:[#allocation2 + $0x78] sm:$0xff] 0.0
  $region17: #{vqvae_encoder_forward.5} parent=0 // pred_fallthru
    _
  %v35 = vld [vmem:[#allocation2] sm:$0xff]
  %v36 = vld [vmem:[#allocation2 + $0x8] sm:$0xff]
  %v37 = vld [vmem:[#allocation2 + $0x10] sm:$0xff]
  %v38 = vld [vmem:[#allocation2 + $0x18] sm:$0xff]
  %v39 = vld [vmem:[#allocation2 + $0x20] sm:$0xff]
  %v40 = vld [vmem:[#allocation2 + $0x28] sm:$0xff]
  %v41 = vld [vmem:[#allocation2 + $0x30] sm:$0xff]
  %v42 = vld [vmem:[#allocation2 + $0x38] sm:$0xff]
  %v43 = vld [vmem:[#allocation2 + $0x40] sm:$0xff]
  %v44 = vld [vmem:[#allocation2 + $0x48] sm:$0xff]
  %v45 = vld [vmem:[#allocation2 + $0x50] sm:$0xff]
  %v46 = vld [vmem:[#allocation2 + $0x58] sm:$0xff]
  %v47 = vld [vmem:[#allocation2 + $0x60] sm:$0xff]
  %v48 = vld [vmem:[#allocation2 + $0x68] sm:$0xff]
  %v49 = vld [vmem:[#allocation2 + $0x70] sm:$0xff]
  %v50 = vld [vmem:[#allocation2 + $0x78] sm:$0xff]
  %v51 = vld [vmem:[%s0] sm:$0xf]
  %v52 = vld [vmem:[%s0 + $0x4] sm:$0xf]
  %v53 = vld [vmem:[%s0 + $0x8] sm:$0xf]
  %v54 = vld [vmem:[%s0 + $0xc] sm:$0xf]
  %v55 = vld [vmem:[%s0 + $0x10] sm:$0xf]
  %v56 = vld [vmem:[%s0 + $0x14] sm:$0xf]
  %v57 = vld [vmem:[%s0 + $0x18] sm:$0xf]
  %v58 = vld [vmem:[%s0 + $0x1c] sm:$0xf]
  %v59 = vld [vmem:[%s0 + $0x20] sm:$0xf]
  %v60 = vld [vmem:[%s0 + $0x24] sm:$0xf]
  %v61 = vld [vmem:[%s0 + $0x28] sm:$0xf]
  %v62 = vld [vmem:[%s0 + $0x2c] sm:$0xf]
  %v63 = vld [vmem:[%s0 + $0x30] sm:$0xf]
  %v64 = vld [vmem:[%s0 + $0x34] sm:$0xf]
  %v65 = vld [vmem:[%s0 + $0x38] sm:$0xf]
  %v66 = vld [vmem:[%s0 + $0x3c] sm:$0xf]
  %v67 = vld [vmem:[%s1] sm:$0xf]
  %v68 = vld [vmem:[%s1 + $0x4] sm:$0xf]
  %v69 = vld [vmem:[%s1 + $0x8] sm:$0xf]
  %v70 = vld [vmem:[%s1 + $0xc] sm:$0xf]
  %v71 = vld [vmem:[%s1 + $0x10] sm:$0xf]
  %v72 = vld [vmem:[%s1 + $0x14] sm:$0xf]
  %v73 = vld [vmem:[%s1 + $0x18] sm:$0xf]
  %v74 = vld [vmem:[%s1 + $0x1c] sm:$0xf]
  %v75 = vld [vmem:[%s1 + $0x20] sm:$0xf]
  %v76 = vld [vmem:[%s1 + $0x24] sm:$0xf]
  %v77 = vld [vmem:[%s1 + $0x28] sm:$0xf]
  %v78 = vld [vmem:[%s1 + $0x2c] sm:$0xf]
  %v79 = vld [vmem:[%s1 + $0x30] sm:$0xf]
  %v80 = vld [vmem:[%s1 + $0x34] sm:$0xf]
  %v81 = vld [vmem:[%s1 + $0x38] sm:$0xf]
  %v82 = vld [vmem:[%s1 + $0x3c] sm:$0xf]
  %v99 = vunpack.c.l.b16 %v51
  %v100 = vunpack.c.l.b16 %v52
  %v101 = vunpack.c.l.b16 %v53
  %v102 = vunpack.c.l.b16 %v54
  %v103 = vunpack.c.l.b16 %v55
  %v104 = vunpack.c.l.b16 %v56
  %v105 = vunpack.c.l.b16 %v57
  %v106 = vunpack.c.l.b16 %v58
  %v107 = vunpack.c.l.b16 %v59
  %v108 = vunpack.c.l.b16 %v60
  %v109 = vunpack.c.l.b16 %v61
  %v110 = vunpack.c.l.b16 %v62
  %v111 = vunpack.c.l.b16 %v63
  %v112 = vunpack.c.l.b16 %v64
  %v113 = vunpack.c.l.b16 %v65
  %v114 = vunpack.c.l.b16 %v66
  %v115 = vpack.c.b16 %v100, %v99
  %v116 = vpack.c.b16 %v102, %v101
  %v117 = vpack.c.b16 %v104, %v103
  %v118 = vpack.c.b16 %v106, %v105
  %v119 = vpack.c.b16 %v108, %v107
  %v120 = vpack.c.b16 %v110, %v109
  %v121 = vpack.c.b16 %v112, %v111
  %v122 = vpack.c.b16 %v114, %v113
  %v147 = vunpack.c.l.b16 %v67
  %v148 = vunpack.c.l.b16 %v68
  %v149 = vunpack.c.l.b16 %v69
  %v150 = vunpack.c.l.b16 %v70
  %v151 = vunpack.c.l.b16 %v71
  %v152 = vunpack.c.l.b16 %v72
  %v153 = vunpack.c.l.b16 %v73
  %v154 = vunpack.c.l.b16 %v74
  %v155 = vunpack.c.l.b16 %v75
  %v156 = vunpack.c.l.b16 %v76
  %v157 = vunpack.c.l.b16 %v77
  %v158 = vunpack.c.l.b16 %v78
  %v159 = vunpack.c.l.b16 %v79
  %v160 = vunpack.c.l.b16 %v80
  %v161 = vunpack.c.l.b16 %v81
  %v162 = vunpack.c.l.b16 %v82
  %v163 = vpack.c.b16 %v148, %v147
  %v164 = vpack.c.b16 %v150, %v149
  %v165 = vpack.c.b16 %v152, %v151
  %v166 = vpack.c.b16 %v154, %v153
  %v167 = vpack.c.b16 %v156, %v155
  %v168 = vpack.c.b16 %v158, %v157
  %v169 = vpack.c.b16 %v160, %v159
  %v170 = vpack.c.b16 %v162, %v161
  %179 = vmatprep.subr.bf16.mxu0 0
  %180 = vmatpush1.bf16.msra.mxu0 %v170
  %181 = vmatprep.subr.bf16.mxu0 0
  %182 = vmatpush1.bf16.msra.mxu0 %v169
  %183 = vmatprep.subr.bf16.mxu0 0
  %184 = vmatpush1.bf16.msra.mxu0 %v168
  %185 = vmatprep.subr.bf16.mxu0 0
  %186 = vmatpush1.bf16.msra.mxu0 %v167
  %187 = vmatprep.subr.bf16.mxu0 0
  %188 = vmatpush1.bf16.msra.mxu0 %v166
  %189 = vmatprep.subr.bf16.mxu0 0
  %190 = vmatpush1.bf16.msra.mxu0 %v165
  %191 = vmatprep.subr.bf16.mxu0 0
  %192 = vmatpush1.bf16.msra.mxu0 %v164
  %193 = vmatprep.subr.bf16.mxu0 0
  %194 = vmatpush1.bf16.msra.mxu0 %v163
  %195 = vmatprep.subr.bf16.mxu0 0
  %196 = vmatpush2.bf16.msra.mxu0 0
  %197 = vmatprep.subr.bf16.mxu0 0
  %198 = vmatpush2.bf16.msra.mxu0 0
  %199 = vmatprep.subr.bf16.mxu0 0
  %200 = vmatpush2.bf16.msra.mxu0 0
  %201 = vmatprep.subr.bf16.mxu0 0
  %202 = vmatpush2.bf16.msra.mxu0 0
  %203 = vmatprep.subr.bf16.mxu0 0
  %204 = vmatpush2.bf16.msra.mxu0 0
  %205 = vmatprep.subr.bf16.mxu0 0
  %206 = vmatpush2.bf16.msra.mxu0 0
  %207 = vmatprep.subr.bf16.mxu0 0
  %208 = vmatpush2.bf16.msra.mxu0 0
  %209 = vmatprep.subr.bf16.mxu0 0
  %210 = vmatpush2.bf16.msra.mxu0 0
  %211 = vmatprep.mubr.bf16.mxu0 0
  %212 = vmatmul.mubr.bf16.gmra.mxu0 %v115
  %v213 = vpop.f32.mrf.mxu0
  %v214 = vadd.f32 0.0, %v213
  %v215 = vpop.f32.mrf.mxu0
  %v216 = vpop.f32.mrf.mxu0
  %v217 = vadd.f32 0.0, %v216
  %v218 = vpop.f32.mrf.mxu0
  %219 = vmatprep.mubr.bf16.mxu0 0
  %220 = vmatmul.mubr.bf16.gmra.mxu0 %v116
  %v221 = vpop.f32.mrf.mxu0
  %v222 = vadd.f32 0.0, %v221
  %v223 = vpop.f32.mrf.mxu0
  %v224 = vpop.f32.mrf.mxu0
  %v225 = vadd.f32 0.0, %v224
  %v226 = vpop.f32.mrf.mxu0
  %227 = vmatprep.mubr.bf16.mxu0 0
  %228 = vmatmul.mubr.bf16.gmra.mxu0 %v117
  %v229 = vpop.f32.mrf.mxu0
  %v230 = vadd.f32 0.0, %v229
  %v231 = vpop.f32.mrf.mxu0
  %v232 = vpop.f32.mrf.mxu0
  %v233 = vadd.f32 0.0, %v232
  %v234 = vpop.f32.mrf.mxu0
  %235 = vmatprep.mubr.bf16.mxu0 0
  %236 = vmatmul.mubr.bf16.gmra.mxu0 %v118
  %v237 = vpop.f32.mrf.mxu0
  %v238 = vadd.f32 0.0, %v237
  %v239 = vpop.f32.mrf.mxu0
  %v240 = vpop.f32.mrf.mxu0
  %v241 = vadd.f32 0.0, %v240
  %v242 = vpop.f32.mrf.mxu0
  %243 = vmatprep.mubr.bf16.mxu0 0
  %244 = vmatmul.mubr.bf16.gmra.mxu0 %v119
  %v245 = vpop.f32.mrf.mxu0
  %v246 = vadd.f32 0.0, %v245
  %v247 = vpop.f32.mrf.mxu0
  %v248 = vpop.f32.mrf.mxu0
  %v249 = vadd.f32 0.0, %v248
  %v250 = vpop.f32.mrf.mxu0
  %251 = vmatprep.mubr.bf16.mxu0 0
  %252 = vmatmul.mubr.bf16.gmra.mxu0 %v120
  %v253 = vpop.f32.mrf.mxu0
  %v254 = vadd.f32 0.0, %v253
  %v255 = vpop.f32.mrf.mxu0
  %v256 = vpop.f32.mrf.mxu0
  %v257 = vadd.f32 0.0, %v256
  %v258 = vpop.f32.mrf.mxu0
  %259 = vmatprep.mubr.bf16.mxu0 0
  %260 = vmatmul.mubr.bf16.gmra.mxu0 %v121
  %v261 = vpop.f32.mrf.mxu0
  %v262 = vadd.f32 0.0, %v261
  %v263 = vpop.f32.mrf.mxu0
  %v264 = vpop.f32.mrf.mxu0
  %v265 = vadd.f32 0.0, %v264
  %v266 = vpop.f32.mrf.mxu0
  %267 = vmatprep.mubr.bf16.mxu0 0
  %268 = vmatmul.mubr.bf16.gmra.mxu0 %v122
  %v269 = vpop.f32.mrf.mxu0
  %v270 = vadd.f32 0.0, %v269
  %v271 = vpop.f32.mrf.mxu0
  %v272 = vpop.f32.mrf.mxu0
  %v273 = vadd.f32 0.0, %v272
  %v274 = vpop.f32.mrf.mxu0
  %275 = vdwg.mxu0
  %v276 = vadd.f32 %v35, %v214
  %v277 = vadd.f32 %v36, %v217
  %v278 = vadd.f32 %v37, %v222
  %v279 = vadd.f32 %v38, %v225
  %v280 = vadd.f32 %v39, %v230
  %v281 = vadd.f32 %v40, %v233
  %v282 = vadd.f32 %v41, %v238
  %v283 = vadd.f32 %v42, %v241
  %v284 = vadd.f32 %v43, %v246
  %v285 = vadd.f32 %v44, %v249
  %v286 = vadd.f32 %v45, %v254
  %v287 = vadd.f32 %v46, %v257
  %v288 = vadd.f32 %v47, %v262
  %v289 = vadd.f32 %v48, %v265
  %v290 = vadd.f32 %v49, %v270
  %v291 = vadd.f32 %v50, %v273
  %292 = vst [vmem:[#allocation2] sm:$0xff] %v276
  %293 = vst [vmem:[#allocation2 + $0x8] sm:$0xff] %v277
  %294 = vst [vmem:[#allocation2 + $0x10] sm:$0xff] %v278
  %295 = vst [vmem:[#allocation2 + $0x18] sm:$0xff] %v279
  %296 = vst [vmem:[#allocation2 + $0x20] sm:$0xff] %v280
  %297 = vst [vmem:[#allocation2 + $0x28] sm:$0xff] %v281
  %298 = vst [vmem:[#allocation2 + $0x30] sm:$0xff] %v282
  %299 = vst [vmem:[#allocation2 + $0x38] sm:$0xff] %v283
  %300 = vst [vmem:[#allocation2 + $0x40] sm:$0xff] %v284
  %301 = vst [vmem:[#allocation2 + $0x48] sm:$0xff] %v285
  %302 = vst [vmem:[#allocation2 + $0x50] sm:$0xff] %v286
  %303 = vst [vmem:[#allocation2 + $0x58] sm:$0xff] %v287
  %304 = vst [vmem:[#allocation2 + $0x60] sm:$0xff] %v288
  %305 = vst [vmem:[#allocation2 + $0x68] sm:$0xff] %v289
  %306 = vst [vmem:[#allocation2 + $0x70] sm:$0xff] %v290
  %307 = vst [vmem:[#allocation2 + $0x78] sm:$0xff] %v291
  // Predicated region
  $region18: #{vqvae_encoder_forward.5} parent=0 // pred_check
    %p308 = pneg %p15
  $region19: #{vqvae_encoder_forward.5} parent=0 // pred_check_branch
    %310 = sbr.rel (%p308) target = $region21
  $region20: #{vqvae_encoder_forward.5} parent=0 // pred_region
    %v311 = vld [vmem:[#allocation2] sm:$0xff]
    %v312 = vld [vmem:[#allocation2 + $0x8] sm:$0xff]
    %v313 = vld [vmem:[#allocation2 + $0x10] sm:$0xff]
    %v314 = vld [vmem:[#allocation2 + $0x18] sm:$0xff]
    %v315 = vld [vmem:[#allocation2 + $0x20] sm:$0xff]
    %v316 = vld [vmem:[#allocation2 + $0x28] sm:$0xff]
    %v317 = vld [vmem:[#allocation2 + $0x30] sm:$0xff]
    %v318 = vld [vmem:[#allocation2 + $0x38] sm:$0xff]
    %v319 = vld [vmem:[#allocation2 + $0x40] sm:$0xff]
    %v320 = vld [vmem:[#allocation2 + $0x48] sm:$0xff]
    %v321 = vld [vmem:[#allocation2 + $0x50] sm:$0xff]
    %v322 = vld [vmem:[#allocation2 + $0x58] sm:$0xff]
    %v323 = vld [vmem:[#allocation2 + $0x60] sm:$0xff]
    %v324 = vld [vmem:[#allocation2 + $0x68] sm:$0xff]
    %v325 = vld [vmem:[#allocation2 + $0x70] sm:$0xff]
    %v326 = vld [vmem:[#allocation2 + $0x78] sm:$0xff]
    %v327 = vld [vmem:[%s2] sm:$0x1]
    %v329 = vlaneseq
    %v330 = vshrl.u32 %v329, 7
    %v331 = vsub.s32 0, %v330
    %v332 = vrot.slane %v327, %v331
    %v334 = vadd.f32 %v311, %v332
    %v335 = vadd.f32 %v312, %v332
    %v336 = vadd.f32 %v313, %v332
    %v337 = vadd.f32 %v314, %v332
    %v338 = vadd.f32 %v315, %v332
    %v339 = vadd.f32 %v316, %v332
    %v340 = vadd.f32 %v317, %v332
    %v341 = vadd.f32 %v318, %v332
    %v342 = vadd.f32 %v319, %v332
    %v343 = vadd.f32 %v320, %v332
    %v344 = vadd.f32 %v321, %v332
    %v345 = vadd.f32 %v322, %v332
    %v346 = vadd.f32 %v323, %v332
    %v347 = vadd.f32 %v324, %v332
    %v348 = vadd.f32 %v325, %v332
    %v349 = vadd.f32 %v326, %v332
    %v350 = vmul.f32 %v334, 1.702
    %v351 = vmul.f32 %v335, 1.702
    %v352 = vmul.f32 %v336, 1.702
    %v353 = vmul.f32 %v337, 1.702
    %v354 = vmul.f32 %v338, 1.702
    %v355 = vmul.f32 %v339, 1.702
    %v356 = vmul.f32 %v340, 1.702
    %v357 = vmul.f32 %v341, 1.702
    %v358 = vmul.f32 %v342, 1.702
    %v359 = vmul.f32 %v343, 1.702
    %v360 = vmul.f32 %v344, 1.702
    %v361 = vmul.f32 %v345, 1.702
    %v362 = vmul.f32 %v346, 1.702
    %v363 = vmul.f32 %v347, 1.702
    %v364 = vmul.f32 %v348, 1.702
    %v365 = vmul.f32 %v349, 1.702
    %v366 = vxor.u32 %v350, 2147483648
    %v367 = vxor.u32 %v351, 2147483648
    %v368 = vxor.u32 %v352, 2147483648
    %v369 = vxor.u32 %v353, 2147483648
    %v370 = vxor.u32 %v354, 2147483648
    %v371 = vxor.u32 %v355, 2147483648
    %v372 = vxor.u32 %v356, 2147483648
    %v373 = vxor.u32 %v357, 2147483648
    %v374 = vxor.u32 %v358, 2147483648
    %v375 = vxor.u32 %v359, 2147483648
    %v376 = vxor.u32 %v360, 2147483648
    %v377 = vxor.u32 %v361, 2147483648
    %v378 = vxor.u32 %v362, 2147483648
    %v379 = vxor.u32 %v363, 2147483648
    %v380 = vxor.u32 %v364, 2147483648
    %v381 = vxor.u32 %v365, 2147483648
    %v382 = vmul.f32 %v366, 1.442695
    %v383 = vpow.pop %v382
    %v384 = vmul.f32 %v367, 1.442695
    %v385 = vpow.pop %v384
    %v386 = vmul.f32 %v368, 1.442695
    %v387 = vpow.pop %v386
    %v388 = vmul.f32 %v369, 1.442695
    %v389 = vpow.pop %v388
    %v390 = vmul.f32 %v370, 1.442695
    %v391 = vpow.pop %v390
    %v392 = vmul.f32 %v371, 1.442695
    %v393 = vpow.pop %v392
    %v394 = vmul.f32 %v372, 1.442695
    %v395 = vpow.pop %v394
    %v396 = vmul.f32 %v373, 1.442695
    %v397 = vpow.pop %v396
    %v398 = vmul.f32 %v374, 1.442695
    %v399 = vpow.pop %v398
    %v400 = vmul.f32 %v375, 1.442695
    %v401 = vpow.pop %v400
    %v402 = vmul.f32 %v376, 1.442695
    %v403 = vpow.pop %v402
    %v404 = vmul.f32 %v377, 1.442695
    %v405 = vpow.pop %v404
    %v406 = vmul.f32 %v378, 1.442695
    %v407 = vpow.pop %v406
    %v408 = vmul.f32 %v379, 1.442695
    %v409 = vpow.pop %v408
    %v410 = vmul.f32 %v380, 1.442695
    %v411 = vpow.pop %v410
    %v412 = vmul.f32 %v381, 1.442695
    %v413 = vpow.pop %v412
    %v414 = vadd.f32 %v383, 1.0
    %v415 = vadd.f32 %v385, 1.0
    %v416 = vadd.f32 %v387, 1.0
    %v417 = vadd.f32 %v389, 1.0
    %v418 = vadd.f32 %v391, 1.0
    %v419 = vadd.f32 %v393, 1.0
    %v420 = vadd.f32 %v395, 1.0
    %v421 = vadd.f32 %v397, 1.0
    %v422 = vadd.f32 %v399, 1.0
    %v423 = vadd.f32 %v401, 1.0
    %v424 = vadd.f32 %v403, 1.0
    %v425 = vadd.f32 %v405, 1.0
    %v426 = vadd.f32 %v407, 1.0
    %v427 = vadd.f32 %v409, 1.0
    %v428 = vadd.f32 %v411, 1.0
    %v429 = vadd.f32 %v413, 1.0
    %v430 = vrcp.pop %v414
    %v431 = vmul.f32 1.0, %v430
    %v432 = vrcp.pop %v415
    %v433 = vmul.f32 1.0, %v432
    %v434 = vrcp.pop %v416
    %v435 = vmul.f32 1.0, %v434
    %v436 = vrcp.pop %v417
    %v437 = vmul.f32 1.0, %v436
    %v438 = vrcp.pop %v418
    %v439 = vmul.f32 1.0, %v438
    %v440 = vrcp.pop %v419
    %v441 = vmul.f32 1.0, %v440
    %v442 = vrcp.pop %v420
    %v443 = vmul.f32 1.0, %v442
    %v444 = vrcp.pop %v421
    %v445 = vmul.f32 1.0, %v444
    %v446 = vrcp.pop %v422
    %v447 = vmul.f32 1.0, %v446
    %v448 = vrcp.pop %v423
    %v449 = vmul.f32 1.0, %v448
    %v450 = vrcp.pop %v424
    %v451 = vmul.f32 1.0, %v450
    %v452 = vrcp.pop %v425
    %v453 = vmul.f32 1.0, %v452
    %v454 = vrcp.pop %v426
    %v455 = vmul.f32 1.0, %v454
    %v456 = vrcp.pop %v427
    %v457 = vmul.f32 1.0, %v456
    %v458 = vrcp.pop %v428
    %v459 = vmul.f32 1.0, %v458
    %v460 = vrcp.pop %v429
    %v461 = vmul.f32 1.0, %v460
    %v462 = vmul.f32 %v334, %v431
    %v463 = vmul.f32 %v335, %v433
    %v464 = vmul.f32 %v336, %v435
    %v465 = vmul.f32 %v337, %v437
    %v466 = vmul.f32 %v338, %v439
    %v467 = vmul.f32 %v339, %v441
    %v468 = vmul.f32 %v340, %v443
    %v469 = vmul.f32 %v341, %v445
    %v470 = vmul.f32 %v342, %v447
    %v471 = vmul.f32 %v343, %v449
    %v472 = vmul.f32 %v344, %v451
    %v473 = vmul.f32 %v345, %v453
    %v474 = vmul.f32 %v346, %v455
    %v475 = vmul.f32 %v347, %v457
    %v476 = vmul.f32 %v348, %v459
    %v477 = vmul.f32 %v349, %v461
    %v478 = vpack.c.bf16 %v463, %v462
    %v479 = vpack.c.bf16 %v465, %v464
    %v480 = vpack.c.bf16 %v467, %v466
    %v481 = vpack.c.bf16 %v469, %v468
    %v482 = vpack.c.bf16 %v471, %v470
    %v483 = vpack.c.bf16 %v473, %v472
    %v484 = vpack.c.bf16 %v475, %v474
    %v485 = vpack.c.bf16 %v477, %v476
    %v494 = vunpack.c.l.b16 %v478
    %v495 = vunpack.c.h.b16 %v478
    %v496 = vunpack.c.l.b16 %v479
    %v497 = vunpack.c.h.b16 %v479
    %v498 = vunpack.c.l.b16 %v480
    %v499 = vunpack.c.h.b16 %v480
    %v500 = vunpack.c.l.b16 %v481
    %v501 = vunpack.c.h.b16 %v481
    %v502 = vunpack.c.l.b16 %v482
    %v503 = vunpack.c.h.b16 %v482
    %v504 = vunpack.c.l.b16 %v483
    %v505 = vunpack.c.h.b16 %v483
    %v506 = vunpack.c.l.b16 %v484
    %v507 = vunpack.c.h.b16 %v484
    %v508 = vunpack.c.l.b16 %v485
    %v509 = vunpack.c.h.b16 %v485
    %v510 = vpack.c.b16 %v494, %v494
    %v511 = vpack.c.b16 %v495, %v495
    %v512 = vpack.c.b16 %v496, %v496
    %v513 = vpack.c.b16 %v497, %v497
    %v514 = vpack.c.b16 %v498, %v498
    %v515 = vpack.c.b16 %v499, %v499
    %v516 = vpack.c.b16 %v500, %v500
    %v517 = vpack.c.b16 %v501, %v501
    %v518 = vpack.c.b16 %v502, %v502
    %v519 = vpack.c.b16 %v503, %v503
    %v520 = vpack.c.b16 %v504, %v504
    %v521 = vpack.c.b16 %v505, %v505
    %v522 = vpack.c.b16 %v506, %v506
    %v523 = vpack.c.b16 %v507, %v507
    %v524 = vpack.c.b16 %v508, %v508
    %v525 = vpack.c.b16 %v509, %v509
    %542 = vst [vmem:[%s3] sm:$0xf] %v510
    %543 = vst [vmem:[%s3 + $0x4] sm:$0xf] %v511
    %544 = vst [vmem:[%s3 + $0x8] sm:$0xf] %v512
    %545 = vst [vmem:[%s3 + $0xc] sm:$0xf] %v513
    %546 = vst [vmem:[%s3 + $0x10] sm:$0xf] %v514
    %547 = vst [vmem:[%s3 + $0x14] sm:$0xf] %v515
    %548 = vst [vmem:[%s3 + $0x18] sm:$0xf] %v516
    %549 = vst [vmem:[%s3 + $0x1c] sm:$0xf] %v517
    %550 = vst [vmem:[%s3 + $0x20] sm:$0xf] %v518
    %551 = vst [vmem:[%s3 + $0x24] sm:$0xf] %v519
    %552 = vst [vmem:[%s3 + $0x28] sm:$0xf] %v520
    %553 = vst [vmem:[%s3 + $0x2c] sm:$0xf] %v521
    %554 = vst [vmem:[%s3 + $0x30] sm:$0xf] %v522
    %555 = vst [vmem:[%s3 + $0x34] sm:$0xf] %v523
    %556 = vst [vmem:[%s3 + $0x38] sm:$0xf] %v524
    %557 = vst [vmem:[%s3 + $0x3c] sm:$0xf] %v525
  $region21: #{vqvae_encoder_forward.5} parent=0 // pred_fallthru
    _
  // Predicated region
  $region22: #{vqvae_encoder_forward.5} parent=0 // pred_check
    _
  $region23: #{vqvae_encoder_forward.5} parent=0 // pred_check_branch
    %559 = sbr.rel (0) target = $region25
  $region24: #{vqvae_encoder_forward.5} parent=0 // pred_region
    _
  $region25: #{vqvae_encoder_forward.5} parent=0 // pred_fallthru
    _
  // Predicated region
  $region26: #{vqvae_encoder_forward.5} parent=0 // pred_check
    _
  $region27: #{vqvae_encoder_forward.5} parent=0 // pred_check_branch
    %561 = sbr.rel (0) target = $region29
  $region28: #{vqvae_encoder_forward.5} parent=0 // pred_region
    _
  $region29: #{vqvae_encoder_forward.5} parent=0 // pred_fallthru
    _

// kernel: vqvae_encoder_forward.6
$region0: #{vqvae_encoder_forward.6}
  #allocation0 [shape = 'u32[]', space=smem, size = 0x4, offset = 0x4, fixed_abs, tag = 'smem constant byte address 0x4 - core index']
  #allocation1 [shape = 'u32[144,128]{1,0:T(1,128)}', space=vmem, size = 0x12000, scoped, tag = 'internal scratch']
  %s0 = inlined_call_operand.vmem [shape: bf16[128,1152], index: 0, kind: input, shape index: {}]
  %s1 = inlined_call_operand.vmem [shape: bf16[128,128], index: 1, kind: input, shape index: {}]
  %s2 = inlined_call_operand.vmem [shape: bf16[1152,128], index: 2, kind: input, shape index: {}]
  %s3 = inlined_call_operand.vmem [shape: f32[1,128], index: 3, kind: input, shape index: {}]
  %s4 = inlined_call_operand.vmem [shape: bf16[128,128], index: 4, kind: input, shape index: {}]
  %s5 = inlined_call_operand.vmem [shape: f32[1,128], index: 5, kind: input, shape index: {}]
  %s6 = inlined_call_operand.vmem [shape: bf16[128,128], index: 6, kind: output, shape index: {}]
  %s7 = sld [smem:[#allocation0]]
  $region34: #{vqvae_encoder_forward.6} parent=0
    _
  %s9 = ssub.s32 1, %s7
  %s10 = scalar_select 0, %s9, %s7
  // Predicated region
  $region2: #{vqvae_encoder_forward.6} parent=0 // pred_check
    _
  $region3: #{vqvae_encoder_forward.6} parent=0 // pred_check_branch
    %12 = sbr.rel (0) target = $region5
  $region4: #{vqvae_encoder_forward.6} parent=0 // pred_region
    _
  $region5: #{vqvae_encoder_forward.6} parent=0 // pred_fallthru
    _
  // Predicated region
  $region6: #{vqvae_encoder_forward.6} parent=0 // pred_check
    _
  $region7: #{vqvae_encoder_forward.6} parent=0 // pred_check_branch
    %14 = sbr.rel (0) target = $region9
  $region8: #{vqvae_encoder_forward.6} parent=0 // pred_region
    _
  $region9: #{vqvae_encoder_forward.6} parent=0 // pred_fallthru
    _
  // Predicated region
  $region10: #{vqvae_encoder_forward.6} parent=0 // pred_check
    _
  $region11: #{vqvae_encoder_forward.6} parent=0 // pred_check_branch
    %16 = sbr.rel (0) target = $region13
  $region12: #{vqvae_encoder_forward.6} parent=0 // pred_region
    _
  $region13: #{vqvae_encoder_forward.6} parent=0 // pred_fallthru
    _
  // Predicated region
  $region14: #{vqvae_encoder_forward.6} parent=0 // pred_check
    _
  $region15: #{vqvae_encoder_forward.6} parent=0 // pred_check_branch
    %18 = sbr.rel (0) target = $region17
  $region16: #{vqvae_encoder_forward.6} parent=0 // pred_region
    _
  $region17: #{vqvae_encoder_forward.6} parent=0 // pred_fallthru
    _
  // Predicated region
  $region18: #{vqvae_encoder_forward.6} parent=0 // pred_check
    _
  $region19: #{vqvae_encoder_forward.6} parent=0 // pred_check_branch
    %20 = sbr.rel (0) target = $region21
  $region20: #{vqvae_encoder_forward.6} parent=0 // pred_region
    _
  $region21: #{vqvae_encoder_forward.6} parent=0 // pred_fallthru
    _
  // Predicated region
  $region22: #{vqvae_encoder_forward.6} parent=0 // pred_check
    _
  $region23: #{vqvae_encoder_forward.6} parent=0 // pred_check_branch
    %22 = sbr.rel (0) target = $region25
  $region24: #{vqvae_encoder_forward.6} parent=0 // pred_region
    _
  $region25: #{vqvae_encoder_forward.6} parent=0 // pred_fallthru
    _
  %v24 = vld [vmem:[%s0] sm:$0xff]
  %v25 = vld [vmem:[%s0 + $0x8] sm:$0xff]
  %v26 = vld [vmem:[%s0 + $0x10] sm:$0xff]
  %v27 = vld [vmem:[%s0 + $0x18] sm:$0xff]
  %v28 = vld [vmem:[%s0 + $0x20] sm:$0xf]
  %v29 = vld [vmem:[%s0 + $0x24] sm:$0xff]
  %v30 = vld [vmem:[%s0 + $0x2c] sm:$0xff]
  %v31 = vld [vmem:[%s0 + $0x34] sm:$0xff]
  %v32 = vld [vmem:[%s0 + $0x3c] sm:$0xff]
  %v33 = vld [vmem:[%s0 + $0x44] sm:$0xf]
  %v34 = vld [vmem:[%s0 + $0x48] sm:$0xff]
  %v35 = vld [vmem:[%s0 + $0x50] sm:$0xff]
  %v36 = vld [vmem:[%s0 + $0x58] sm:$0xff]
  %v37 = vld [vmem:[%s0 + $0x60] sm:$0xff]
  %v38 = vld [vmem:[%s0 + $0x68] sm:$0xf]
  %v39 = vld [vmem:[%s0 + $0x6c] sm:$0xff]
  %v40 = vld [vmem:[%s0 + $0x74] sm:$0xff]
  %v41 = vld [vmem:[%s0 + $0x7c] sm:$0xff]
  %v42 = vld [vmem:[%s0 + $0x84] sm:$0xff]
  %v43 = vld [vmem:[%s0 + $0x8c] sm:$0xf]
  %v44 = vld [vmem:[%s0 + $0x90] sm:$0xff]
  %v45 = vld [vmem:[%s0 + $0x98] sm:$0xff]
  %v46 = vld [vmem:[%s0 + $0xa0] sm:$0xff]
  %v47 = vld [vmem:[%s0 + $0xa8] sm:$0xff]
  %v48 = vld [vmem:[%s0 + $0xb0] sm:$0xf]
  %v49 = vld [vmem:[%s0 + $0xb4] sm:$0xff]
  %v50 = vld [vmem:[%s0 + $0xbc] sm:$0xff]
  %v51 = vld [vmem:[%s0 + $0xc4] sm:$0xff]
  %v52 = vld [vmem:[%s0 + $0xcc] sm:$0xff]
  %v53 = vld [vmem:[%s0 + $0xd4] sm:$0xf]
  %v54 = vld [vmem:[%s0 + $0xd8] sm:$0xff]
  %v55 = vld [vmem:[%s0 + $0xe0] sm:$0xff]
  %v56 = vld [vmem:[%s0 + $0xe8] sm:$0xff]
  %v57 = vld [vmem:[%s0 + $0xf0] sm:$0xff]
  %v58 = vld [vmem:[%s0 + $0xf8] sm:$0xf]
  %v59 = vld [vmem:[%s0 + $0xfc] sm:$0xff]
  %v60 = vld [vmem:[%s0 + $0x104] sm:$0xff]
  %v61 = vld [vmem:[%s0 + $0x10c] sm:$0xff]
  %v62 = vld [vmem:[%s0 + $0x114] sm:$0xff]
  %v63 = vld [vmem:[%s0 + $0x11c] sm:$0xf]
  %v64 = vld [vmem:[%s0 + $0x120] sm:$0xff]
  %v65 = vld [vmem:[%s0 + $0x128] sm:$0xff]
  %v66 = vld [vmem:[%s0 + $0x130] sm:$0xff]
  %v67 = vld [vmem:[%s0 + $0x138] sm:$0xff]
  %v68 = vld [vmem:[%s0 + $0x140] sm:$0xf]
  %v69 = vld [vmem:[%s0 + $0x144] sm:$0xff]
  %v70 = vld [vmem:[%s0 + $0x14c] sm:$0xff]
  %v71 = vld [vmem:[%s0 + $0x154] sm:$0xff]
  %v72 = vld [vmem:[%s0 + $0x15c] sm:$0xff]
  %v73 = vld [vmem:[%s0 + $0x164] sm:$0xf]
  %v74 = vld [vmem:[%s0 + $0x168] sm:$0xff]
  %v75 = vld [vmem:[%s0 + $0x170] sm:$0xff]
  %v76 = vld [vmem:[%s0 + $0x178] sm:$0xff]
  %v77 = vld [vmem:[%s0 + $0x180] sm:$0xff]
  %v78 = vld [vmem:[%s0 + $0x188] sm:$0xf]
  %v79 = vld [vmem:[%s0 + $0x18c] sm:$0xff]
  %v80 = vld [vmem:[%s0 + $0x194] sm:$0xff]
  %v81 = vld [vmem:[%s0 + $0x19c] sm:$0xff]
  %v82 = vld [vmem:[%s0 + $0x1a4] sm:$0xff]
  %v83 = vld [vmem:[%s0 + $0x1ac] sm:$0xf]
  %v84 = vld [vmem:[%s0 + $0x1b0] sm:$0xff]
  %v85 = vld [vmem:[%s0 + $0x1b8] sm:$0xff]
  %v86 = vld [vmem:[%s0 + $0x1c0] sm:$0xff]
  %v87 = vld [vmem:[%s0 + $0x1c8] sm:$0xff]
  %v88 = vld [vmem:[%s0 + $0x1d0] sm:$0xf]
  %v89 = vld [vmem:[%s0 + $0x1d4] sm:$0xff]
  %v90 = vld [vmem:[%s0 + $0x1dc] sm:$0xff]
  %v91 = vld [vmem:[%s0 + $0x1e4] sm:$0xff]
  %v92 = vld [vmem:[%s0 + $0x1ec] sm:$0xff]
  %v93 = vld [vmem:[%s0 + $0x1f4] sm:$0xf]
  %v94 = vld [vmem:[%s0 + $0x1f8] sm:$0xff]
  %v95 = vld [vmem:[%s0 + $0x200] sm:$0xff]
  %v96 = vld [vmem:[%s0 + $0x208] sm:$0xff]
  %v97 = vld [vmem:[%s0 + $0x210] sm:$0xff]
  %v98 = vld [vmem:[%s0 + $0x218] sm:$0xf]
  %v99 = vld [vmem:[%s0 + $0x21c] sm:$0xff]
  %v100 = vld [vmem:[%s0 + $0x224] sm:$0xff]
  %v101 = vld [vmem:[%s0 + $0x22c] sm:$0xff]
  %v102 = vld [vmem:[%s0 + $0x234] sm:$0xff]
  %v103 = vld [vmem:[%s0 + $0x23c] sm:$0xf]
  %v104 = vld [vmem:[%s2] sm:$0xf]
  %v105 = vld [vmem:[%s2 + $0x4] sm:$0xf]
  %v106 = vld [vmem:[%s2 + $0x8] sm:$0xf]
  %v107 = vld [vmem:[%s2 + $0xc] sm:$0xf]
  %v108 = vld [vmem:[%s2 + $0x10] sm:$0xf]
  %v109 = vld [vmem:[%s2 + $0x14] sm:$0xf]
  %v110 = vld [vmem:[%s2 + $0x18] sm:$0xf]
  %v111 = vld [vmem:[%s2 + $0x1c] sm:$0xf]
  %v112 = vld [vmem:[%s2 + $0x20] sm:$0xf]
  %v113 = vld [vmem:[%s2 + $0x24] sm:$0xf]
  %v114 = vld [vmem:[%s2 + $0x28] sm:$0xf]
  %v115 = vld [vmem:[%s2 + $0x2c] sm:$0xf]
  %v116 = vld [vmem:[%s2 + $0x30] sm:$0xf]
  %v117 = vld [vmem:[%s2 + $0x34] sm:$0xf]
  %v118 = vld [vmem:[%s2 + $0x38] sm:$0xf]
  %v119 = vld [vmem:[%s2 + $0x3c] sm:$0xf]
  %v120 = vld [vmem:[%s2 + $0x40] sm:$0xf]
  %v121 = vld [vmem:[%s2 + $0x44] sm:$0xf]
  %v122 = vld [vmem:[%s2 + $0x48] sm:$0xf]
  %v123 = vld [vmem:[%s2 + $0x4c] sm:$0xf]
  %v124 = vld [vmem:[%s2 + $0x50] sm:$0xf]
  %v125 = vld [vmem:[%s2 + $0x54] sm:$0xf]
  %v126 = vld [vmem:[%s2 + $0x58] sm:$0xf]
  %v127 = vld [vmem:[%s2 + $0x5c] sm:$0xf]
  %v128 = vld [vmem:[%s2 + $0x60] sm:$0xf]
  %v129 = vld [vmem:[%s2 + $0x64] sm:$0xf]
  %v130 = vld [vmem:[%s2 + $0x68] sm:$0xf]
  %v131 = vld [vmem:[%s2 + $0x6c] sm:$0xf]
  %v132 = vld [vmem:[%s2 + $0x70] sm:$0xf]
  %v133 = vld [vmem:[%s2 + $0x74] sm:$0xf]
  %v134 = vld [vmem:[%s2 + $0x78] sm:$0xf]
  %v135 = vld [vmem:[%s2 + $0x7c] sm:$0xf]
  %v136 = vld [vmem:[%s2 + $0x80] sm:$0xf]
  %v137 = vld [vmem:[%s2 + $0x84] sm:$0xf]
  %v138 = vld [vmem:[%s2 + $0x88] sm:$0xf]
  %v139 = vld [vmem:[%s2 + $0x8c] sm:$0xf]
  %v140 = vld [vmem:[%s2 + $0x90] sm:$0xf]
  %v141 = vld [vmem:[%s2 + $0x94] sm:$0xf]
  %v142 = vld [vmem:[%s2 + $0x98] sm:$0xf]
  %v143 = vld [vmem:[%s2 + $0x9c] sm:$0xf]
  %v144 = vld [vmem:[%s2 + $0xa0] sm:$0xf]
  %v145 = vld [vmem:[%s2 + $0xa4] sm:$0xf]
  %v146 = vld [vmem:[%s2 + $0xa8] sm:$0xf]
  %v147 = vld [vmem:[%s2 + $0xac] sm:$0xf]
  %v148 = vld [vmem:[%s2 + $0xb0] sm:$0xf]
  %v149 = vld [vmem:[%s2 + $0xb4] sm:$0xf]
  %v150 = vld [vmem:[%s2 + $0xb8] sm:$0xf]
  %v151 = vld [vmem:[%s2 + $0xbc] sm:$0xf]
  %v152 = vld [vmem:[%s2 + $0xc0] sm:$0xf]
  %v153 = vld [vmem:[%s2 + $0xc4] sm:$0xf]
  %v154 = vld [vmem:[%s2 + $0xc8] sm:$0xf]
  %v155 = vld [vmem:[%s2 + $0xcc] sm:$0xf]
  %v156 = vld [vmem:[%s2 + $0xd0] sm:$0xf]
  %v157 = vld [vmem:[%s2 + $0xd4] sm:$0xf]
  %v158 = vld [vmem:[%s2 + $0xd8] sm:$0xf]
  %v159 = vld [vmem:[%s2 + $0xdc] sm:$0xf]
  %v160 = vld [vmem:[%s2 + $0xe0] sm:$0xf]
  %v161 = vld [vmem:[%s2 + $0xe4] sm:$0xf]
  %v162 = vld [vmem:[%s2 + $0xe8] sm:$0xf]
  %v163 = vld [vmem:[%s2 + $0xec] sm:$0xf]
  %v164 = vld [vmem:[%s2 + $0xf0] sm:$0xf]
  %v165 = vld [vmem:[%s2 + $0xf4] sm:$0xf]
  %v166 = vld [vmem:[%s2 + $0xf8] sm:$0xf]
  %v167 = vld [vmem:[%s2 + $0xfc] sm:$0xf]
  %v168 = vld [vmem:[%s2 + $0x100] sm:$0xf]
  %v169 = vld [vmem:[%s2 + $0x104] sm:$0xf]
  %v170 = vld [vmem:[%s2 + $0x108] sm:$0xf]
  %v171 = vld [vmem:[%s2 + $0x10c] sm:$0xf]
  %v172 = vld [vmem:[%s2 + $0x110] sm:$0xf]
  %v173 = vld [vmem:[%s2 + $0x114] sm:$0xf]
  %v174 = vld [vmem:[%s2 + $0x118] sm:$0xf]
  %v175 = vld [vmem:[%s2 + $0x11c] sm:$0xf]
  %v176 = vld [vmem:[%s2 + $0x120] sm:$0xf]
  %v177 = vld [vmem:[%s2 + $0x124] sm:$0xf]
  %v178 = vld [vmem:[%s2 + $0x128] sm:$0xf]
  %v179 = vld [vmem:[%s2 + $0x12c] sm:$0xf]
  %v180 = vld [vmem:[%s2 + $0x130] sm:$0xf]
  %v181 = vld [vmem:[%s2 + $0x134] sm:$0xf]
  %v182 = vld [vmem:[%s2 + $0x138] sm:$0xf]
  %v183 = vld [vmem:[%s2 + $0x13c] sm:$0xf]
  %v184 = vld [vmem:[%s2 + $0x140] sm:$0xf]
  %v185 = vld [vmem:[%s2 + $0x144] sm:$0xf]
  %v186 = vld [vmem:[%s2 + $0x148] sm:$0xf]
  %v187 = vld [vmem:[%s2 + $0x14c] sm:$0xf]
  %v188 = vld [vmem:[%s2 + $0x150] sm:$0xf]
  %v189 = vld [vmem:[%s2 + $0x154] sm:$0xf]
  %v190 = vld [vmem:[%s2 + $0x158] sm:$0xf]
  %v191 = vld [vmem:[%s2 + $0x15c] sm:$0xf]
  %v192 = vld [vmem:[%s2 + $0x160] sm:$0xf]
  %v193 = vld [vmem:[%s2 + $0x164] sm:$0xf]
  %v194 = vld [vmem:[%s2 + $0x168] sm:$0xf]
  %v195 = vld [vmem:[%s2 + $0x16c] sm:$0xf]
  %v196 = vld [vmem:[%s2 + $0x170] sm:$0xf]
  %v197 = vld [vmem:[%s2 + $0x174] sm:$0xf]
  %v198 = vld [vmem:[%s2 + $0x178] sm:$0xf]
  %v199 = vld [vmem:[%s2 + $0x17c] sm:$0xf]
  %v200 = vld [vmem:[%s2 + $0x180] sm:$0xf]
  %v201 = vld [vmem:[%s2 + $0x184] sm:$0xf]
  %v202 = vld [vmem:[%s2 + $0x188] sm:$0xf]
  %v203 = vld [vmem:[%s2 + $0x18c] sm:$0xf]
  %v204 = vld [vmem:[%s2 + $0x190] sm:$0xf]
  %v205 = vld [vmem:[%s2 + $0x194] sm:$0xf]
  %v206 = vld [vmem:[%s2 + $0x198] sm:$0xf]
  %v207 = vld [vmem:[%s2 + $0x19c] sm:$0xf]
  %v208 = vld [vmem:[%s2 + $0x1a0] sm:$0xf]
  %v209 = vld [vmem:[%s2 + $0x1a4] sm:$0xf]
  %v210 = vld [vmem:[%s2 + $0x1a8] sm:$0xf]
  %v211 = vld [vmem:[%s2 + $0x1ac] sm:$0xf]
  %v212 = vld [vmem:[%s2 + $0x1b0] sm:$0xf]
  %v213 = vld [vmem:[%s2 + $0x1b4] sm:$0xf]
  %v214 = vld [vmem:[%s2 + $0x1b8] sm:$0xf]
  %v215 = vld [vmem:[%s2 + $0x1bc] sm:$0xf]
  %v216 = vld [vmem:[%s2 + $0x1c0] sm:$0xf]
  %v217 = vld [vmem:[%s2 + $0x1c4] sm:$0xf]
  %v218 = vld [vmem:[%s2 + $0x1c8] sm:$0xf]
  %v219 = vld [vmem:[%s2 + $0x1cc] sm:$0xf]
  %v220 = vld [vmem:[%s2 + $0x1d0] sm:$0xf]
  %v221 = vld [vmem:[%s2 + $0x1d4] sm:$0xf]
  %v222 = vld [vmem:[%s2 + $0x1d8] sm:$0xf]
  %v223 = vld [vmem:[%s2 + $0x1dc] sm:$0xf]
  %v224 = vld [vmem:[%s2 + $0x1e0] sm:$0xf]
  %v225 = vld [vmem:[%s2 + $0x1e4] sm:$0xf]
  %v226 = vld [vmem:[%s2 + $0x1e8] sm:$0xf]
  %v227 = vld [vmem:[%s2 + $0x1ec] sm:$0xf]
  %v228 = vld [vmem:[%s2 + $0x1f0] sm:$0xf]
  %v229 = vld [vmem:[%s2 + $0x1f4] sm:$0xf]
  %v230 = vld [vmem:[%s2 + $0x1f8] sm:$0xf]
  %v231 = vld [vmem:[%s2 + $0x1fc] sm:$0xf]
  %v232 = vld [vmem:[%s2 + $0x200] sm:$0xf]
  %v233 = vld [vmem:[%s2 + $0x204] sm:$0xf]
  %v234 = vld [vmem:[%s2 + $0x208] sm:$0xf]
  %v235 = vld [vmem:[%s2 + $0x20c] sm:$0xf]
  %v236 = vld [vmem:[%s2 + $0x210] sm:$0xf]
  %v237 = vld [vmem:[%s2 + $0x214] sm:$0xf]
  %v238 = vld [vmem:[%s2 + $0x218] sm:$0xf]
  %v239 = vld [vmem:[%s2 + $0x21c] sm:$0xf]
  %v240 = vld [vmem:[%s2 + $0x220] sm:$0xf]
  %v241 = vld [vmem:[%s2 + $0x224] sm:$0xf]
  %v242 = vld [vmem:[%s2 + $0x228] sm:$0xf]
  %v243 = vld [vmem:[%s2 + $0x22c] sm:$0xf]
  %v244 = vld [vmem:[%s2 + $0x230] sm:$0xf]
  %v245 = vld [vmem:[%s2 + $0x234] sm:$0xf]
  %v246 = vld [vmem:[%s2 + $0x238] sm:$0xf]
  %v247 = vld [vmem:[%s2 + $0x23c] sm:$0xf]
  %v248 = vld [vmem:[%s3] sm:$0x1]
  %v250 = vlaneseq
  %v251 = vshrl.u32 %v250, 7
  %v252 = vsub.s32 0, %v251
  %v253 = vrot.slane %v248, %v252
  %v335 = vunpack.c.l.b16 %v24
  %v336 = vunpack.c.h.b16 %v24
  %v337 = vunpack.c.l.b16 %v25
  %v338 = vunpack.c.h.b16 %v25
  %v339 = vunpack.c.l.b16 %v26
  %v340 = vunpack.c.h.b16 %v26
  %v341 = vunpack.c.l.b16 %v27
  %v342 = vunpack.c.h.b16 %v27
  %v343 = vunpack.c.l.b16 %v28
  %v344 = vunpack.c.l.b16 %v29
  %v345 = vunpack.c.h.b16 %v29
  %v346 = vunpack.c.l.b16 %v30
  %v347 = vunpack.c.h.b16 %v30
  %v348 = vunpack.c.l.b16 %v31
  %v349 = vunpack.c.h.b16 %v31
  %v350 = vunpack.c.l.b16 %v32
  %v351 = vunpack.c.h.b16 %v32
  %v352 = vunpack.c.l.b16 %v33
  %v353 = vunpack.c.l.b16 %v34
  %v354 = vunpack.c.h.b16 %v34
  %v355 = vunpack.c.l.b16 %v35
  %v356 = vunpack.c.h.b16 %v35
  %v357 = vunpack.c.l.b16 %v36
  %v358 = vunpack.c.h.b16 %v36
  %v359 = vunpack.c.l.b16 %v37
  %v360 = vunpack.c.h.b16 %v37
  %v361 = vunpack.c.l.b16 %v38
  %v362 = vunpack.c.l.b16 %v39
  %v363 = vunpack.c.h.b16 %v39
  %v364 = vunpack.c.l.b16 %v40
  %v365 = vunpack.c.h.b16 %v40
  %v366 = vunpack.c.l.b16 %v41
  %v367 = vunpack.c.h.b16 %v41
  %v368 = vunpack.c.l.b16 %v42
  %v369 = vunpack.c.h.b16 %v42
  %v370 = vunpack.c.l.b16 %v43
  %v371 = vunpack.c.l.b16 %v44
  %v372 = vunpack.c.h.b16 %v44
  %v373 = vunpack.c.l.b16 %v45
  %v374 = vunpack.c.h.b16 %v45
  %v375 = vunpack.c.l.b16 %v46
  %v376 = vunpack.c.h.b16 %v46
  %v377 = vunpack.c.l.b16 %v47
  %v378 = vunpack.c.h.b16 %v47
  %v379 = vunpack.c.l.b16 %v48
  %v380 = vunpack.c.l.b16 %v49
  %v381 = vunpack.c.h.b16 %v49
  %v382 = vunpack.c.l.b16 %v50
  %v383 = vunpack.c.h.b16 %v50
  %v384 = vunpack.c.l.b16 %v51
  %v385 = vunpack.c.h.b16 %v51
  %v386 = vunpack.c.l.b16 %v52
  %v387 = vunpack.c.h.b16 %v52
  %v388 = vunpack.c.l.b16 %v53
  %v389 = vunpack.c.l.b16 %v54
  %v390 = vunpack.c.h.b16 %v54
  %v391 = vunpack.c.l.b16 %v55
  %v392 = vunpack.c.h.b16 %v55
  %v393 = vunpack.c.l.b16 %v56
  %v394 = vunpack.c.h.b16 %v56
  %v395 = vunpack.c.l.b16 %v57
  %v396 = vunpack.c.h.b16 %v57
  %v397 = vunpack.c.l.b16 %v58
  %v398 = vunpack.c.l.b16 %v59
  %v399 = vunpack.c.h.b16 %v59
  %v400 = vunpack.c.l.b16 %v60
  %v401 = vunpack.c.h.b16 %v60
  %v402 = vunpack.c.l.b16 %v61
  %v403 = vunpack.c.h.b16 %v61
  %v404 = vunpack.c.l.b16 %v62
  %v405 = vunpack.c.h.b16 %v62
  %v406 = vunpack.c.l.b16 %v63
  %v407 = vunpack.c.l.b16 %v64
  %v408 = vunpack.c.h.b16 %v64
  %v409 = vunpack.c.l.b16 %v65
  %v410 = vunpack.c.h.b16 %v65
  %v411 = vunpack.c.l.b16 %v66
  %v412 = vunpack.c.h.b16 %v66
  %v413 = vunpack.c.l.b16 %v67
  %v414 = vunpack.c.h.b16 %v67
  %v415 = vunpack.c.l.b16 %v68
  %v416 = vunpack.c.l.b16 %v69
  %v417 = vunpack.c.h.b16 %v69
  %v418 = vunpack.c.l.b16 %v70
  %v419 = vunpack.c.h.b16 %v70
  %v420 = vunpack.c.l.b16 %v71
  %v421 = vunpack.c.h.b16 %v71
  %v422 = vunpack.c.l.b16 %v72
  %v423 = vunpack.c.h.b16 %v72
  %v424 = vunpack.c.l.b16 %v73
  %v425 = vunpack.c.l.b16 %v74
  %v426 = vunpack.c.h.b16 %v74
  %v427 = vunpack.c.l.b16 %v75
  %v428 = vunpack.c.h.b16 %v75
  %v429 = vunpack.c.l.b16 %v76
  %v430 = vunpack.c.h.b16 %v76
  %v431 = vunpack.c.l.b16 %v77
  %v432 = vunpack.c.h.b16 %v77
  %v433 = vunpack.c.l.b16 %v78
  %v434 = vunpack.c.l.b16 %v79
  %v435 = vunpack.c.h.b16 %v79
  %v436 = vunpack.c.l.b16 %v80
  %v437 = vunpack.c.h.b16 %v80
  %v438 = vunpack.c.l.b16 %v81
  %v439 = vunpack.c.h.b16 %v81
  %v440 = vunpack.c.l.b16 %v82
  %v441 = vunpack.c.h.b16 %v82
  %v442 = vunpack.c.l.b16 %v83
  %v443 = vunpack.c.l.b16 %v84
  %v444 = vunpack.c.h.b16 %v84
  %v445 = vunpack.c.l.b16 %v85
  %v446 = vunpack.c.h.b16 %v85
  %v447 = vunpack.c.l.b16 %v86
  %v448 = vunpack.c.h.b16 %v86
  %v449 = vunpack.c.l.b16 %v87
  %v450 = vunpack.c.h.b16 %v87
  %v451 = vunpack.c.l.b16 %v88
  %v452 = vunpack.c.l.b16 %v89
  %v453 = vunpack.c.h.b16 %v89
  %v454 = vunpack.c.l.b16 %v90
  %v455 = vunpack.c.h.b16 %v90
  %v456 = vunpack.c.l.b16 %v91
  %v457 = vunpack.c.h.b16 %v91
  %v458 = vunpack.c.l.b16 %v92
  %v459 = vunpack.c.h.b16 %v92
  %v460 = vunpack.c.l.b16 %v93
  %v461 = vunpack.c.l.b16 %v94
  %v462 = vunpack.c.h.b16 %v94
  %v463 = vunpack.c.l.b16 %v95
  %v464 = vunpack.c.h.b16 %v95
  %v465 = vunpack.c.l.b16 %v96
  %v466 = vunpack.c.h.b16 %v96
  %v467 = vunpack.c.l.b16 %v97
  %v468 = vunpack.c.h.b16 %v97
  %v469 = vunpack.c.l.b16 %v98
  %v470 = vunpack.c.l.b16 %v99
  %v471 = vunpack.c.h.b16 %v99
  %v472 = vunpack.c.l.b16 %v100
  %v473 = vunpack.c.h.b16 %v100
  %v474 = vunpack.c.l.b16 %v101
  %v475 = vunpack.c.h.b16 %v101
  %v476 = vunpack.c.l.b16 %v102
  %v477 = vunpack.c.h.b16 %v102
  %v478 = vunpack.c.l.b16 %v103
  %v479 = vpack.c.b16 %v344, %v335
  %v480 = vpack.c.b16 %v345, %v336
  %v481 = vpack.c.b16 %v346, %v337
  %v482 = vpack.c.b16 %v347, %v338
  %v483 = vpack.c.b16 %v348, %v339
  %v484 = vpack.c.b16 %v349, %v340
  %v485 = vpack.c.b16 %v350, %v341
  %v486 = vpack.c.b16 %v351, %v342
  %v487 = vpack.c.b16 %v352, %v343
  %v488 = vpack.c.b16 %v362, %v353
  %v489 = vpack.c.b16 %v363, %v354
  %v490 = vpack.c.b16 %v364, %v355
  %v491 = vpack.c.b16 %v365, %v356
  %v492 = vpack.c.b16 %v366, %v357
  %v493 = vpack.c.b16 %v367, %v358
  %v494 = vpack.c.b16 %v368, %v359
  %v495 = vpack.c.b16 %v369, %v360
  %v496 = vpack.c.b16 %v370, %v361
  %v497 = vpack.c.b16 %v380, %v371
  %v498 = vpack.c.b16 %v381, %v372
  %v499 = vpack.c.b16 %v382, %v373
  %v500 = vpack.c.b16 %v383, %v374
  %v501 = vpack.c.b16 %v384, %v375
  %v502 = vpack.c.b16 %v385, %v376
  %v503 = vpack.c.b16 %v386, %v377
  %v504 = vpack.c.b16 %v387, %v378
  %v505 = vpack.c.b16 %v388, %v379
  %v506 = vpack.c.b16 %v398, %v389
  %v507 = vpack.c.b16 %v399, %v390
  %v508 = vpack.c.b16 %v400, %v391
  %v509 = vpack.c.b16 %v401, %v392
  %v510 = vpack.c.b16 %v402, %v393
  %v511 = vpack.c.b16 %v403, %v394
  %v512 = vpack.c.b16 %v404, %v395
  %v513 = vpack.c.b16 %v405, %v396
  %v514 = vpack.c.b16 %v406, %v397
  %v515 = vpack.c.b16 %v416, %v407
  %v516 = vpack.c.b16 %v417, %v408
  %v517 = vpack.c.b16 %v418, %v409
  %v518 = vpack.c.b16 %v419, %v410
  %v519 = vpack.c.b16 %v420, %v411
  %v520 = vpack.c.b16 %v421, %v412
  %v521 = vpack.c.b16 %v422, %v413
  %v522 = vpack.c.b16 %v423, %v414
  %v523 = vpack.c.b16 %v424, %v415
  %v524 = vpack.c.b16 %v434, %v425
  %v525 = vpack.c.b16 %v435, %v426
  %v526 = vpack.c.b16 %v436, %v427
  %v527 = vpack.c.b16 %v437, %v428
  %v528 = vpack.c.b16 %v438, %v429
  %v529 = vpack.c.b16 %v439, %v430
  %v530 = vpack.c.b16 %v440, %v431
  %v531 = vpack.c.b16 %v441, %v432
  %v532 = vpack.c.b16 %v442, %v433
  %v533 = vpack.c.b16 %v452, %v443
  %v534 = vpack.c.b16 %v453, %v444
  %v535 = vpack.c.b16 %v454, %v445
  %v536 = vpack.c.b16 %v455, %v446
  %v537 = vpack.c.b16 %v456, %v447
  %v538 = vpack.c.b16 %v457, %v448
  %v539 = vpack.c.b16 %v458, %v449
  %v540 = vpack.c.b16 %v459, %v450
  %v541 = vpack.c.b16 %v460, %v451
  %v542 = vpack.c.b16 %v470, %v461
  %v543 = vpack.c.b16 %v471, %v462
  %v544 = vpack.c.b16 %v472, %v463
  %v545 = vpack.c.b16 %v473, %v464
  %v546 = vpack.c.b16 %v474, %v465
  %v547 = vpack.c.b16 %v475, %v466
  %v548 = vpack.c.b16 %v476, %v467
  %v549 = vpack.c.b16 %v477, %v468
  %v550 = vpack.c.b16 %v478, %v469
  %v767 = vunpack.c.l.b16 %v104
  %v768 = vunpack.c.l.b16 %v105
  %v769 = vunpack.c.l.b16 %v106
  %v770 = vunpack.c.l.b16 %v107
  %v771 = vunpack.c.l.b16 %v108
  %v772 = vunpack.c.l.b16 %v109
  %v773 = vunpack.c.l.b16 %v110
  %v774 = vunpack.c.l.b16 %v111
  %v775 = vunpack.c.l.b16 %v112
  %v776 = vunpack.c.l.b16 %v113
  %v777 = vunpack.c.l.b16 %v114
  %v778 = vunpack.c.l.b16 %v115
  %v779 = vunpack.c.l.b16 %v116
  %v780 = vunpack.c.l.b16 %v117
  %v781 = vunpack.c.l.b16 %v118
  %v782 = vunpack.c.l.b16 %v119
  %v783 = vunpack.c.l.b16 %v120
  %v784 = vunpack.c.l.b16 %v121
  %v785 = vunpack.c.l.b16 %v122
  %v786 = vunpack.c.l.b16 %v123
  %v787 = vunpack.c.l.b16 %v124
  %v788 = vunpack.c.l.b16 %v125
  %v789 = vunpack.c.l.b16 %v126
  %v790 = vunpack.c.l.b16 %v127
  %v791 = vunpack.c.l.b16 %v128
  %v792 = vunpack.c.l.b16 %v129
  %v793 = vunpack.c.l.b16 %v130
  %v794 = vunpack.c.l.b16 %v131
  %v795 = vunpack.c.l.b16 %v132
  %v796 = vunpack.c.l.b16 %v133
  %v797 = vunpack.c.l.b16 %v134
  %v798 = vunpack.c.l.b16 %v135
  %v799 = vunpack.c.l.b16 %v136
  %v800 = vunpack.c.l.b16 %v137
  %v801 = vunpack.c.l.b16 %v138
  %v802 = vunpack.c.l.b16 %v139
  %v803 = vunpack.c.l.b16 %v140
  %v804 = vunpack.c.l.b16 %v141
  %v805 = vunpack.c.l.b16 %v142
  %v806 = vunpack.c.l.b16 %v143
  %v807 = vunpack.c.l.b16 %v144
  %v808 = vunpack.c.l.b16 %v145
  %v809 = vunpack.c.l.b16 %v146
  %v810 = vunpack.c.l.b16 %v147
  %v811 = vunpack.c.l.b16 %v148
  %v812 = vunpack.c.l.b16 %v149
  %v813 = vunpack.c.l.b16 %v150
  %v814 = vunpack.c.l.b16 %v151
  %v815 = vunpack.c.l.b16 %v152
  %v816 = vunpack.c.l.b16 %v153
  %v817 = vunpack.c.l.b16 %v154
  %v818 = vunpack.c.l.b16 %v155
  %v819 = vunpack.c.l.b16 %v156
  %v820 = vunpack.c.l.b16 %v157
  %v821 = vunpack.c.l.b16 %v158
  %v822 = vunpack.c.l.b16 %v159
  %v823 = vunpack.c.l.b16 %v160
  %v824 = vunpack.c.l.b16 %v161
  %v825 = vunpack.c.l.b16 %v162
  %v826 = vunpack.c.l.b16 %v163
  %v827 = vunpack.c.l.b16 %v164
  %v828 = vunpack.c.l.b16 %v165
  %v829 = vunpack.c.l.b16 %v166
  %v830 = vunpack.c.l.b16 %v167
  %v831 = vunpack.c.l.b16 %v168
  %v832 = vunpack.c.l.b16 %v169
  %v833 = vunpack.c.l.b16 %v170
  %v834 = vunpack.c.l.b16 %v171
  %v835 = vunpack.c.l.b16 %v172
  %v836 = vunpack.c.l.b16 %v173
  %v837 = vunpack.c.l.b16 %v174
  %v838 = vunpack.c.l.b16 %v175
  %v839 = vunpack.c.l.b16 %v176
  %v840 = vunpack.c.l.b16 %v177
  %v841 = vunpack.c.l.b16 %v178
  %v842 = vunpack.c.l.b16 %v179
  %v843 = vunpack.c.l.b16 %v180
  %v844 = vunpack.c.l.b16 %v181
  %v845 = vunpack.c.l.b16 %v182
  %v846 = vunpack.c.l.b16 %v183
  %v847 = vunpack.c.l.b16 %v184
  %v848 = vunpack.c.l.b16 %v185
  %v849 = vunpack.c.l.b16 %v186
  %v850 = vunpack.c.l.b16 %v187
  %v851 = vunpack.c.l.b16 %v188
  %v852 = vunpack.c.l.b16 %v189
  %v853 = vunpack.c.l.b16 %v190
  %v854 = vunpack.c.l.b16 %v191
  %v855 = vunpack.c.l.b16 %v192
  %v856 = vunpack.c.l.b16 %v193
  %v857 = vunpack.c.l.b16 %v194
  %v858 = vunpack.c.l.b16 %v195
  %v859 = vunpack.c.l.b16 %v196
  %v860 = vunpack.c.l.b16 %v197
  %v861 = vunpack.c.l.b16 %v198
  %v862 = vunpack.c.l.b16 %v199
  %v863 = vunpack.c.l.b16 %v200
  %v864 = vunpack.c.l.b16 %v201
  %v865 = vunpack.c.l.b16 %v202
  %v866 = vunpack.c.l.b16 %v203
  %v867 = vunpack.c.l.b16 %v204
  %v868 = vunpack.c.l.b16 %v205
  %v869 = vunpack.c.l.b16 %v206
  %v870 = vunpack.c.l.b16 %v207
  %v871 = vunpack.c.l.b16 %v208
  %v872 = vunpack.c.l.b16 %v209
  %v873 = vunpack.c.l.b16 %v210
  %v874 = vunpack.c.l.b16 %v211
  %v875 = vunpack.c.l.b16 %v212
  %v876 = vunpack.c.l.b16 %v213
  %v877 = vunpack.c.l.b16 %v214
  %v878 = vunpack.c.l.b16 %v215
  %v879 = vunpack.c.l.b16 %v216
  %v880 = vunpack.c.l.b16 %v217
  %v881 = vunpack.c.l.b16 %v218
  %v882 = vunpack.c.l.b16 %v219
  %v883 = vunpack.c.l.b16 %v220
  %v884 = vunpack.c.l.b16 %v221
  %v885 = vunpack.c.l.b16 %v222
  %v886 = vunpack.c.l.b16 %v223
  %v887 = vunpack.c.l.b16 %v224
  %v888 = vunpack.c.l.b16 %v225
  %v889 = vunpack.c.l.b16 %v226
  %v890 = vunpack.c.l.b16 %v227
  %v891 = vunpack.c.l.b16 %v228
  %v892 = vunpack.c.l.b16 %v229
  %v893 = vunpack.c.l.b16 %v230
  %v894 = vunpack.c.l.b16 %v231
  %v895 = vunpack.c.l.b16 %v232
  %v896 = vunpack.c.l.b16 %v233
  %v897 = vunpack.c.l.b16 %v234
  %v898 = vunpack.c.l.b16 %v235
  %v899 = vunpack.c.l.b16 %v236
  %v900 = vunpack.c.l.b16 %v237
  %v901 = vunpack.c.l.b16 %v238
  %v902 = vunpack.c.l.b16 %v239
  %v903 = vunpack.c.l.b16 %v240
  %v904 = vunpack.c.l.b16 %v241
  %v905 = vunpack.c.l.b16 %v242
  %v906 = vunpack.c.l.b16 %v243
  %v907 = vunpack.c.l.b16 %v244
  %v908 = vunpack.c.l.b16 %v245
  %v909 = vunpack.c.l.b16 %v246
  %v910 = vunpack.c.l.b16 %v247
  %v911 = vpack.c.b16 %v768, %v767
  %v912 = vpack.c.b16 %v770, %v769
  %v913 = vpack.c.b16 %v772, %v771
  %v914 = vpack.c.b16 %v774, %v773
  %v915 = vpack.c.b16 %v776, %v775
  %v916 = vpack.c.b16 %v778, %v777
  %v917 = vpack.c.b16 %v780, %v779
  %v918 = vpack.c.b16 %v782, %v781
  %v919 = vpack.c.b16 %v784, %v783
  %v920 = vpack.c.b16 %v786, %v785
  %v921 = vpack.c.b16 %v788, %v787
  %v922 = vpack.c.b16 %v790, %v789
  %v923 = vpack.c.b16 %v792, %v791
  %v924 = vpack.c.b16 %v794, %v793
  %v925 = vpack.c.b16 %v796, %v795
  %v926 = vpack.c.b16 %v798, %v797
  %v927 = vpack.c.b16 %v800, %v799
  %v928 = vpack.c.b16 %v802, %v801
  %v929 = vpack.c.b16 %v804, %v803
  %v930 = vpack.c.b16 %v806, %v805
  %v931 = vpack.c.b16 %v808, %v807
  %v932 = vpack.c.b16 %v810, %v809
  %v933 = vpack.c.b16 %v812, %v811
  %v934 = vpack.c.b16 %v814, %v813
  %v935 = vpack.c.b16 %v816, %v815
  %v936 = vpack.c.b16 %v818, %v817
  %v937 = vpack.c.b16 %v820, %v819
  %v938 = vpack.c.b16 %v822, %v821
  %v939 = vpack.c.b16 %v824, %v823
  %v940 = vpack.c.b16 %v826, %v825
  %v941 = vpack.c.b16 %v828, %v827
  %v942 = vpack.c.b16 %v830, %v829
  %v943 = vpack.c.b16 %v832, %v831
  %v944 = vpack.c.b16 %v834, %v833
  %v945 = vpack.c.b16 %v836, %v835
  %v946 = vpack.c.b16 %v838, %v837
  %v947 = vpack.c.b16 %v840, %v839
  %v948 = vpack.c.b16 %v842, %v841
  %v949 = vpack.c.b16 %v844, %v843
  %v950 = vpack.c.b16 %v846, %v845
  %v951 = vpack.c.b16 %v848, %v847
  %v952 = vpack.c.b16 %v850, %v849
  %v953 = vpack.c.b16 %v852, %v851
  %v954 = vpack.c.b16 %v854, %v853
  %v955 = vpack.c.b16 %v856, %v855
  %v956 = vpack.c.b16 %v858, %v857
  %v957 = vpack.c.b16 %v860, %v859
  %v958 = vpack.c.b16 %v862, %v861
  %v959 = vpack.c.b16 %v864, %v863
  %v960 = vpack.c.b16 %v866, %v865
  %v961 = vpack.c.b16 %v868, %v867
  %v962 = vpack.c.b16 %v870, %v869
  %v963 = vpack.c.b16 %v872, %v871
  %v964 = vpack.c.b16 %v874, %v873
  %v965 = vpack.c.b16 %v876, %v875
  %v966 = vpack.c.b16 %v878, %v877
  %v967 = vpack.c.b16 %v880, %v879
  %v968 = vpack.c.b16 %v882, %v881
  %v969 = vpack.c.b16 %v884, %v883
  %v970 = vpack.c.b16 %v886, %v885
  %v971 = vpack.c.b16 %v888, %v887
  %v972 = vpack.c.b16 %v890, %v889
  %v973 = vpack.c.b16 %v892, %v891
  %v974 = vpack.c.b16 %v894, %v893
  %v975 = vpack.c.b16 %v896, %v895
  %v976 = vpack.c.b16 %v898, %v897
  %v977 = vpack.c.b16 %v900, %v899
  %v978 = vpack.c.b16 %v902, %v901
  %v979 = vpack.c.b16 %v904, %v903
  %v980 = vpack.c.b16 %v906, %v905
  %v981 = vpack.c.b16 %v908, %v907
  %v982 = vpack.c.b16 %v910, %v909
  %1055 = vmatprep.subr.bf16.mxu0 0
  %1056 = vmatpush1.bf16.msra.mxu0 %v918
  %1057 = vmatprep.subr.bf16.mxu0 0
  %1058 = vmatpush1.bf16.msra.mxu0 %v917
  %1059 = vmatprep.subr.bf16.mxu0 0
  %1060 = vmatpush1.bf16.msra.mxu0 %v916
  %1061 = vmatprep.subr.bf16.mxu0 0
  %1062 = vmatpush1.bf16.msra.mxu0 %v915
  %1063 = vmatprep.subr.bf16.mxu0 0
  %1064 = vmatpush1.bf16.msra.mxu0 %v914
  %1065 = vmatprep.subr.bf16.mxu0 0
  %1066 = vmatpush1.bf16.msra.mxu0 %v913
  %1067 = vmatprep.subr.bf16.mxu0 0
  %1068 = vmatpush1.bf16.msra.mxu0 %v912
  %1069 = vmatprep.subr.bf16.mxu0 0
  %1070 = vmatpush1.bf16.msra.mxu0 %v911
  %1071 = vmatprep.subr.bf16.mxu0 0
  %1072 = vmatpush2.bf16.msra.mxu0 %v926
  %1073 = vmatprep.subr.bf16.mxu0 0
  %1074 = vmatpush2.bf16.msra.mxu0 %v925
  %1075 = vmatprep.subr.bf16.mxu0 0
  %1076 = vmatpush2.bf16.msra.mxu0 %v924
  %1077 = vmatprep.subr.bf16.mxu0 0
  %1078 = vmatpush2.bf16.msra.mxu0 %v923
  %1079 = vmatprep.subr.bf16.mxu0 0
  %1080 = vmatpush2.bf16.msra.mxu0 %v922
  %1081 = vmatprep.subr.bf16.mxu0 0
  %1082 = vmatpush2.bf16.msra.mxu0 %v921
  %1083 = vmatprep.subr.bf16.mxu0 0
  %1084 = vmatpush2.bf16.msra.mxu0 %v920
  %1085 = vmatprep.subr.bf16.mxu0 0
  %1086 = vmatpush2.bf16.msra.mxu0 %v919
  %1087 = vmatprep.mubr.bf16.mxu0 %v480
  %1088 = vmatmul.mubr.bf16.gmra.mxu0 %v479
  %v1089 = vpop.f32.mrf.mxu0
  %v1090 = vadd.f32 %v253, %v1089
  %v1091 = vpop.f32.mrf.mxu0
  %v1092 = vpop.f32.mrf.mxu0
  %v1093 = vadd.f32 %v253, %v1092
  %v1094 = vpop.f32.mrf.mxu0
  %1095 = vmatprep.mubr.bf16.mxu0 %v489
  %1096 = vmatmul.mubr.bf16.gmra.mxu0 %v488
  %v1097 = vpop.f32.mrf.mxu0
  %v1098 = vadd.f32 %v253, %v1097
  %v1099 = vpop.f32.mrf.mxu0
  %v1100 = vpop.f32.mrf.mxu0
  %v1101 = vadd.f32 %v253, %v1100
  %v1102 = vpop.f32.mrf.mxu0
  %1103 = vmatprep.mubr.bf16.mxu0 %v498
  %1104 = vmatmul.mubr.bf16.gmra.mxu0 %v497
  %v1105 = vpop.f32.mrf.mxu0
  %v1106 = vadd.f32 %v253, %v1105
  %v1107 = vpop.f32.mrf.mxu0
  %v1108 = vpop.f32.mrf.mxu0
  %v1109 = vadd.f32 %v253, %v1108
  %v1110 = vpop.f32.mrf.mxu0
  %1111 = vmatprep.mubr.bf16.mxu0 %v507
  %1112 = vmatmul.mubr.bf16.gmra.mxu0 %v506
  %v1113 = vpop.f32.mrf.mxu0
  %v1114 = vadd.f32 %v253, %v1113
  %v1115 = vpop.f32.mrf.mxu0
  %v1116 = vpop.f32.mrf.mxu0
  %v1117 = vadd.f32 %v253, %v1116
  %v1118 = vpop.f32.mrf.mxu0
  %1119 = vmatprep.mubr.bf16.mxu0 %v516
  %1120 = vmatmul.mubr.bf16.gmra.mxu0 %v515
  %v1121 = vpop.f32.mrf.mxu0
  %v1122 = vadd.f32 %v253, %v1121
  %v1123 = vpop.f32.mrf.mxu0
  %v1124 = vpop.f32.mrf.mxu0
  %v1125 = vadd.f32 %v253, %v1124
  %v1126 = vpop.f32.mrf.mxu0
  %1127 = vmatprep.mubr.bf16.mxu0 %v525
  %1128 = vmatmul.mubr.bf16.gmra.mxu0 %v524
  %v1129 = vpop.f32.mrf.mxu0
  %v1130 = vadd.f32 %v253, %v1129
  %v1131 = vpop.f32.mrf.mxu0
  %v1132 = vpop.f32.mrf.mxu0
  %v1133 = vadd.f32 %v253, %v1132
  %v1134 = vpop.f32.mrf.mxu0
  %1135 = vmatprep.mubr.bf16.mxu0 %v534
  %1136 = vmatmul.mubr.bf16.gmra.mxu0 %v533
  %v1137 = vpop.f32.mrf.mxu0
  %v1138 = vadd.f32 %v253, %v1137
  %v1139 = vpop.f32.mrf.mxu0
  %v1140 = vpop.f32.mrf.mxu0
  %v1141 = vadd.f32 %v253, %v1140
  %v1142 = vpop.f32.mrf.mxu0
  %1143 = vmatprep.mubr.bf16.mxu0 %v543
  %1144 = vmatmul.mubr.bf16.gmra.mxu0 %v542
  %v1145 = vpop.f32.mrf.mxu0
  %v1146 = vadd.f32 %v253, %v1145
  %v1147 = vpop.f32.mrf.mxu0
  %v1148 = vpop.f32.mrf.mxu0
  %v1149 = vadd.f32 %v253, %v1148
  %v1150 = vpop.f32.mrf.mxu0
  %1151 = vdwg.mxu0
  %1152 = vmatprep.subr.bf16.mxu0 0
  %1153 = vmatpush1.bf16.msra.mxu0 %v934
  %1154 = vmatprep.subr.bf16.mxu0 0
  %1155 = vmatpush1.bf16.msra.mxu0 %v933
  %1156 = vmatprep.subr.bf16.mxu0 0
  %1157 = vmatpush1.bf16.msra.mxu0 %v932
  %1158 = vmatprep.subr.bf16.mxu0 0
  %1159 = vmatpush1.bf16.msra.mxu0 %v931
  %1160 = vmatprep.subr.bf16.mxu0 0
  %1161 = vmatpush1.bf16.msra.mxu0 %v930
  %1162 = vmatprep.subr.bf16.mxu0 0
  %1163 = vmatpush1.bf16.msra.mxu0 %v929
  %1164 = vmatprep.subr.bf16.mxu0 0
  %1165 = vmatpush1.bf16.msra.mxu0 %v928
  %1166 = vmatprep.subr.bf16.mxu0 0
  %1167 = vmatpush1.bf16.msra.mxu0 %v927
  %1168 = vmatprep.subr.bf16.mxu0 0
  %1169 = vmatpush2.bf16.msra.mxu0 %v942
  %1170 = vmatprep.subr.bf16.mxu0 0
  %1171 = vmatpush2.bf16.msra.mxu0 %v941
  %1172 = vmatprep.subr.bf16.mxu0 0
  %1173 = vmatpush2.bf16.msra.mxu0 %v940
  %1174 = vmatprep.subr.bf16.mxu0 0
  %1175 = vmatpush2.bf16.msra.mxu0 %v939
  %1176 = vmatprep.subr.bf16.mxu0 0
  %1177 = vmatpush2.bf16.msra.mxu0 %v938
  %1178 = vmatprep.subr.bf16.mxu0 0
  %1179 = vmatpush2.bf16.msra.mxu0 %v937
  %1180 = vmatprep.subr.bf16.mxu0 0
  %1181 = vmatpush2.bf16.msra.mxu0 %v936
  %1182 = vmatprep.subr.bf16.mxu0 0
  %1183 = vmatpush2.bf16.msra.mxu0 %v935
  %1184 = vmatprep.mubr.bf16.mxu0 %v482
  %1185 = vmatmul.mubr.bf16.gmra.mxu0 %v481
  %v1186 = vpop.f32.mrf.mxu0
  %v1187 = vadd.f32 %v1090, %v1186
  %v1188 = vpop.f32.mrf.mxu0
  %v1189 = vpop.f32.mrf.mxu0
  %v1190 = vadd.f32 %v1093, %v1189
  %v1191 = vpop.f32.mrf.mxu0
  %1192 = vmatprep.mubr.bf16.mxu0 %v491
  %1193 = vmatmul.mubr.bf16.gmra.mxu0 %v490
  %v1194 = vpop.f32.mrf.mxu0
  %v1195 = vadd.f32 %v1098, %v1194
  %v1196 = vpop.f32.mrf.mxu0
  %v1197 = vpop.f32.mrf.mxu0
  %v1198 = vadd.f32 %v1101, %v1197
  %v1199 = vpop.f32.mrf.mxu0
  %1200 = vmatprep.mubr.bf16.mxu0 %v500
  %1201 = vmatmul.mubr.bf16.gmra.mxu0 %v499
  %v1202 = vpop.f32.mrf.mxu0
  %v1203 = vadd.f32 %v1106, %v1202
  %v1204 = vpop.f32.mrf.mxu0
  %v1205 = vpop.f32.mrf.mxu0
  %v1206 = vadd.f32 %v1109, %v1205
  %v1207 = vpop.f32.mrf.mxu0
  %1208 = vmatprep.mubr.bf16.mxu0 %v509
  %1209 = vmatmul.mubr.bf16.gmra.mxu0 %v508
  %v1210 = vpop.f32.mrf.mxu0
  %v1211 = vadd.f32 %v1114, %v1210
  %v1212 = vpop.f32.mrf.mxu0
  %v1213 = vpop.f32.mrf.mxu0
  %v1214 = vadd.f32 %v1117, %v1213
  %v1215 = vpop.f32.mrf.mxu0
  %1216 = vmatprep.mubr.bf16.mxu0 %v518
  %1217 = vmatmul.mubr.bf16.gmra.mxu0 %v517
  %v1218 = vpop.f32.mrf.mxu0
  %v1219 = vadd.f32 %v1122, %v1218
  %v1220 = vpop.f32.mrf.mxu0
  %v1221 = vpop.f32.mrf.mxu0
  %v1222 = vadd.f32 %v1125, %v1221
  %v1223 = vpop.f32.mrf.mxu0
  %1224 = vmatprep.mubr.bf16.mxu0 %v527
  %1225 = vmatmul.mubr.bf16.gmra.mxu0 %v526
  %v1226 = vpop.f32.mrf.mxu0
  %v1227 = vadd.f32 %v1130, %v1226
  %v1228 = vpop.f32.mrf.mxu0
  %v1229 = vpop.f32.mrf.mxu0
  %v1230 = vadd.f32 %v1133, %v1229
  %v1231 = vpop.f32.mrf.mxu0
  %1232 = vmatprep.mubr.bf16.mxu0 %v536
  %1233 = vmatmul.mubr.bf16.gmra.mxu0 %v535
  %v1234 = vpop.f32.mrf.mxu0
  %v1235 = vadd.f32 %v1138, %v1234
  %v1236 = vpop.f32.mrf.mxu0
  %v1237 = vpop.f32.mrf.mxu0
  %v1238 = vadd.f32 %v1141, %v1237
  %v1239 = vpop.f32.mrf.mxu0
  %1240 = vmatprep.mubr.bf16.mxu0 %v545
  %1241 = vmatmul.mubr.bf16.gmra.mxu0 %v544
  %v1242 = vpop.f32.mrf.mxu0
  %v1243 = vadd.f32 %v1146, %v1242
  %v1244 = vpop.f32.mrf.mxu0
  %v1245 = vpop.f32.mrf.mxu0
  %v1246 = vadd.f32 %v1149, %v1245
  %v1247 = vpop.f32.mrf.mxu0
  %1248 = vdwg.mxu0
  %1249 = vmatprep.subr.bf16.mxu0 0
  %1250 = vmatpush1.bf16.msra.mxu0 %v950
  %1251 = vmatprep.subr.bf16.mxu0 0
  %1252 = vmatpush1.bf16.msra.mxu0 %v949
  %1253 = vmatprep.subr.bf16.mxu0 0
  %1254 = vmatpush1.bf16.msra.mxu0 %v948
  %1255 = vmatprep.subr.bf16.mxu0 0
  %1256 = vmatpush1.bf16.msra.mxu0 %v947
  %1257 = vmatprep.subr.bf16.mxu0 0
  %1258 = vmatpush1.bf16.msra.mxu0 %v946
  %1259 = vmatprep.subr.bf16.mxu0 0
  %1260 = vmatpush1.bf16.msra.mxu0 %v945
  %1261 = vmatprep.subr.bf16.mxu0 0
  %1262 = vmatpush1.bf16.msra.mxu0 %v944
  %1263 = vmatprep.subr.bf16.mxu0 0
  %1264 = vmatpush1.bf16.msra.mxu0 %v943
  %1265 = vmatprep.subr.bf16.mxu0 0
  %1266 = vmatpush2.bf16.msra.mxu0 %v958
  %1267 = vmatprep.subr.bf16.mxu0 0
  %1268 = vmatpush2.bf16.msra.mxu0 %v957
  %1269 = vmatprep.subr.bf16.mxu0 0
  %1270 = vmatpush2.bf16.msra.mxu0 %v956
  %1271 = vmatprep.subr.bf16.mxu0 0
  %1272 = vmatpush2.bf16.msra.mxu0 %v955
  %1273 = vmatprep.subr.bf16.mxu0 0
  %1274 = vmatpush2.bf16.msra.mxu0 %v954
  %1275 = vmatprep.subr.bf16.mxu0 0
  %1276 = vmatpush2.bf16.msra.mxu0 %v953
  %1277 = vmatprep.subr.bf16.mxu0 0
  %1278 = vmatpush2.bf16.msra.mxu0 %v952
  %1279 = vmatprep.subr.bf16.mxu0 0
  %1280 = vmatpush2.bf16.msra.mxu0 %v951
  %1281 = vmatprep.mubr.bf16.mxu0 %v484
  %1282 = vmatmul.mubr.bf16.gmra.mxu0 %v483
  %v1283 = vpop.f32.mrf.mxu0
  %v1284 = vadd.f32 %v1187, %v1283
  %v1285 = vpop.f32.mrf.mxu0
  %v1286 = vpop.f32.mrf.mxu0
  %v1287 = vadd.f32 %v1190, %v1286
  %v1288 = vpop.f32.mrf.mxu0
  %1289 = vmatprep.mubr.bf16.mxu0 %v493
  %1290 = vmatmul.mubr.bf16.gmra.mxu0 %v492
  %v1291 = vpop.f32.mrf.mxu0
  %v1292 = vadd.f32 %v1195, %v1291
  %v1293 = vpop.f32.mrf.mxu0
  %v1294 = vpop.f32.mrf.mxu0
  %v1295 = vadd.f32 %v1198, %v1294
  %v1296 = vpop.f32.mrf.mxu0
  %1297 = vmatprep.mubr.bf16.mxu0 %v502
  %1298 = vmatmul.mubr.bf16.gmra.mxu0 %v501
  %v1299 = vpop.f32.mrf.mxu0
  %v1300 = vadd.f32 %v1203, %v1299
  %v1301 = vpop.f32.mrf.mxu0
  %v1302 = vpop.f32.mrf.mxu0
  %v1303 = vadd.f32 %v1206, %v1302
  %v1304 = vpop.f32.mrf.mxu0
  %1305 = vmatprep.mubr.bf16.mxu0 %v511
  %1306 = vmatmul.mubr.bf16.gmra.mxu0 %v510
  %v1307 = vpop.f32.mrf.mxu0
  %v1308 = vadd.f32 %v1211, %v1307
  %v1309 = vpop.f32.mrf.mxu0
  %v1310 = vpop.f32.mrf.mxu0
  %v1311 = vadd.f32 %v1214, %v1310
  %v1312 = vpop.f32.mrf.mxu0
  %1313 = vmatprep.mubr.bf16.mxu0 %v520
  %1314 = vmatmul.mubr.bf16.gmra.mxu0 %v519
  %v1315 = vpop.f32.mrf.mxu0
  %v1316 = vadd.f32 %v1219, %v1315
  %v1317 = vpop.f32.mrf.mxu0
  %v1318 = vpop.f32.mrf.mxu0
  %v1319 = vadd.f32 %v1222, %v1318
  %v1320 = vpop.f32.mrf.mxu0
  %1321 = vmatprep.mubr.bf16.mxu0 %v529
  %1322 = vmatmul.mubr.bf16.gmra.mxu0 %v528
  %v1323 = vpop.f32.mrf.mxu0
  %v1324 = vadd.f32 %v1227, %v1323
  %v1325 = vpop.f32.mrf.mxu0
  %v1326 = vpop.f32.mrf.mxu0
  %v1327 = vadd.f32 %v1230, %v1326
  %v1328 = vpop.f32.mrf.mxu0
  %1329 = vmatprep.mubr.bf16.mxu0 %v538
  %1330 = vmatmul.mubr.bf16.gmra.mxu0 %v537
  %v1331 = vpop.f32.mrf.mxu0
  %v1332 = vadd.f32 %v1235, %v1331
  %v1333 = vpop.f32.mrf.mxu0
  %v1334 = vpop.f32.mrf.mxu0
  %v1335 = vadd.f32 %v1238, %v1334
  %v1336 = vpop.f32.mrf.mxu0
  %1337 = vmatprep.mubr.bf16.mxu0 %v547
  %1338 = vmatmul.mubr.bf16.gmra.mxu0 %v546
  %v1339 = vpop.f32.mrf.mxu0
  %v1340 = vadd.f32 %v1243, %v1339
  %v1341 = vpop.f32.mrf.mxu0
  %v1342 = vpop.f32.mrf.mxu0
  %v1343 = vadd.f32 %v1246, %v1342
  %v1344 = vpop.f32.mrf.mxu0
  %1345 = vdwg.mxu0
  %1346 = vmatprep.subr.bf16.mxu0 0
  %1347 = vmatpush1.bf16.msra.mxu0 %v966
  %1348 = vmatprep.subr.bf16.mxu0 0
  %1349 = vmatpush1.bf16.msra.mxu0 %v965
  %1350 = vmatprep.subr.bf16.mxu0 0
  %1351 = vmatpush1.bf16.msra.mxu0 %v964
  %1352 = vmatprep.subr.bf16.mxu0 0
  %1353 = vmatpush1.bf16.msra.mxu0 %v963
  %1354 = vmatprep.subr.bf16.mxu0 0
  %1355 = vmatpush1.bf16.msra.mxu0 %v962
  %1356 = vmatprep.subr.bf16.mxu0 0
  %1357 = vmatpush1.bf16.msra.mxu0 %v961
  %1358 = vmatprep.subr.bf16.mxu0 0
  %1359 = vmatpush1.bf16.msra.mxu0 %v960
  %1360 = vmatprep.subr.bf16.mxu0 0
  %1361 = vmatpush1.bf16.msra.mxu0 %v959
  %1362 = vmatprep.subr.bf16.mxu0 0
  %1363 = vmatpush2.bf16.msra.mxu0 %v974
  %1364 = vmatprep.subr.bf16.mxu0 0
  %1365 = vmatpush2.bf16.msra.mxu0 %v973
  %1366 = vmatprep.subr.bf16.mxu0 0
  %1367 = vmatpush2.bf16.msra.mxu0 %v972
  %1368 = vmatprep.subr.bf16.mxu0 0
  %1369 = vmatpush2.bf16.msra.mxu0 %v971
  %1370 = vmatprep.subr.bf16.mxu0 0
  %1371 = vmatpush2.bf16.msra.mxu0 %v970
  %1372 = vmatprep.subr.bf16.mxu0 0
  %1373 = vmatpush2.bf16.msra.mxu0 %v969
  %1374 = vmatprep.subr.bf16.mxu0 0
  %1375 = vmatpush2.bf16.msra.mxu0 %v968
  %1376 = vmatprep.subr.bf16.mxu0 0
  %1377 = vmatpush2.bf16.msra.mxu0 %v967
  %1378 = vmatprep.mubr.bf16.mxu0 %v486
  %1379 = vmatmul.mubr.bf16.gmra.mxu0 %v485
  %v1380 = vpop.f32.mrf.mxu0
  %v1381 = vadd.f32 %v1284, %v1380
  %v1382 = vpop.f32.mrf.mxu0
  %v1383 = vpop.f32.mrf.mxu0
  %v1384 = vadd.f32 %v1287, %v1383
  %v1385 = vpop.f32.mrf.mxu0
  %1386 = vmatprep.mubr.bf16.mxu0 %v495
  %1387 = vmatmul.mubr.bf16.gmra.mxu0 %v494
  %v1388 = vpop.f32.mrf.mxu0
  %v1389 = vadd.f32 %v1292, %v1388
  %v1390 = vpop.f32.mrf.mxu0
  %v1391 = vpop.f32.mrf.mxu0
  %v1392 = vadd.f32 %v1295, %v1391
  %v1393 = vpop.f32.mrf.mxu0
  %1394 = vmatprep.mubr.bf16.mxu0 %v504
  %1395 = vmatmul.mubr.bf16.gmra.mxu0 %v503
  %v1396 = vpop.f32.mrf.mxu0
  %v1397 = vadd.f32 %v1300, %v1396
  %v1398 = vpop.f32.mrf.mxu0
  %v1399 = vpop.f32.mrf.mxu0
  %v1400 = vadd.f32 %v1303, %v1399
  %v1401 = vpop.f32.mrf.mxu0
  %1402 = vmatprep.mubr.bf16.mxu0 %v513
  %1403 = vmatmul.mubr.bf16.gmra.mxu0 %v512
  %v1404 = vpop.f32.mrf.mxu0
  %v1405 = vadd.f32 %v1308, %v1404
  %v1406 = vpop.f32.mrf.mxu0
  %v1407 = vpop.f32.mrf.mxu0
  %v1408 = vadd.f32 %v1311, %v1407
  %v1409 = vpop.f32.mrf.mxu0
  %1410 = vmatprep.mubr.bf16.mxu0 %v522
  %1411 = vmatmul.mubr.bf16.gmra.mxu0 %v521
  %v1412 = vpop.f32.mrf.mxu0
  %v1413 = vadd.f32 %v1316, %v1412
  %v1414 = vpop.f32.mrf.mxu0
  %v1415 = vpop.f32.mrf.mxu0
  %v1416 = vadd.f32 %v1319, %v1415
  %v1417 = vpop.f32.mrf.mxu0
  %1418 = vmatprep.mubr.bf16.mxu0 %v531
  %1419 = vmatmul.mubr.bf16.gmra.mxu0 %v530
  %v1420 = vpop.f32.mrf.mxu0
  %v1421 = vadd.f32 %v1324, %v1420
  %v1422 = vpop.f32.mrf.mxu0
  %v1423 = vpop.f32.mrf.mxu0
  %v1424 = vadd.f32 %v1327, %v1423
  %v1425 = vpop.f32.mrf.mxu0
  %1426 = vmatprep.mubr.bf16.mxu0 %v540
  %1427 = vmatmul.mubr.bf16.gmra.mxu0 %v539
  %v1428 = vpop.f32.mrf.mxu0
  %v1429 = vadd.f32 %v1332, %v1428
  %v1430 = vpop.f32.mrf.mxu0
  %v1431 = vpop.f32.mrf.mxu0
  %v1432 = vadd.f32 %v1335, %v1431
  %v1433 = vpop.f32.mrf.mxu0
  %1434 = vmatprep.mubr.bf16.mxu0 %v549
  %1435 = vmatmul.mubr.bf16.gmra.mxu0 %v548
  %v1436 = vpop.f32.mrf.mxu0
  %v1437 = vadd.f32 %v1340, %v1436
  %v1438 = vpop.f32.mrf.mxu0
  %v1439 = vpop.f32.mrf.mxu0
  %v1440 = vadd.f32 %v1343, %v1439
  %v1441 = vpop.f32.mrf.mxu0
  %1442 = vdwg.mxu0
  %1443 = vmatprep.subr.bf16.mxu0 0
  %1444 = vmatpush1.bf16.msra.mxu0 %v982
  %1445 = vmatprep.subr.bf16.mxu0 0
  %1446 = vmatpush1.bf16.msra.mxu0 %v981
  %1447 = vmatprep.subr.bf16.mxu0 0
  %1448 = vmatpush1.bf16.msra.mxu0 %v980
  %1449 = vmatprep.subr.bf16.mxu0 0
  %1450 = vmatpush1.bf16.msra.mxu0 %v979
  %1451 = vmatprep.subr.bf16.mxu0 0
  %1452 = vmatpush1.bf16.msra.mxu0 %v978
  %1453 = vmatprep.subr.bf16.mxu0 0
  %1454 = vmatpush1.bf16.msra.mxu0 %v977
  %1455 = vmatprep.subr.bf16.mxu0 0
  %1456 = vmatpush1.bf16.msra.mxu0 %v976
  %1457 = vmatprep.subr.bf16.mxu0 0
  %1458 = vmatpush1.bf16.msra.mxu0 %v975
  %1459 = vmatprep.subr.bf16.mxu0 0
  %1460 = vmatpush2.bf16.msra.mxu0 0
  %1461 = vmatprep.subr.bf16.mxu0 0
  %1462 = vmatpush2.bf16.msra.mxu0 0
  %1463 = vmatprep.subr.bf16.mxu0 0
  %1464 = vmatpush2.bf16.msra.mxu0 0
  %1465 = vmatprep.subr.bf16.mxu0 0
  %1466 = vmatpush2.bf16.msra.mxu0 0
  %1467 = vmatprep.subr.bf16.mxu0 0
  %1468 = vmatpush2.bf16.msra.mxu0 0
  %1469 = vmatprep.subr.bf16.mxu0 0
  %1470 = vmatpush2.bf16.msra.mxu0 0
  %1471 = vmatprep.subr.bf16.mxu0 0
  %1472 = vmatpush2.bf16.msra.mxu0 0
  %1473 = vmatprep.subr.bf16.mxu0 0
  %1474 = vmatpush2.bf16.msra.mxu0 0
  %1475 = vmatprep.mubr.bf16.mxu0 0
  %1476 = vmatmul.mubr.bf16.gmra.mxu0 %v487
  %v1477 = vpop.f32.mrf.mxu0
  %v1478 = vadd.f32 %v1381, %v1477
  %v1479 = vpop.f32.mrf.mxu0
  %v1480 = vpop.f32.mrf.mxu0
  %v1481 = vadd.f32 %v1384, %v1480
  %v1482 = vpop.f32.mrf.mxu0
  %1483 = vmatprep.mubr.bf16.mxu0 0
  %1484 = vmatmul.mubr.bf16.gmra.mxu0 %v496
  %v1485 = vpop.f32.mrf.mxu0
  %v1486 = vadd.f32 %v1389, %v1485
  %v1487 = vpop.f32.mrf.mxu0
  %v1488 = vpop.f32.mrf.mxu0
  %v1489 = vadd.f32 %v1392, %v1488
  %v1490 = vpop.f32.mrf.mxu0
  %1491 = vmatprep.mubr.bf16.mxu0 0
  %1492 = vmatmul.mubr.bf16.gmra.mxu0 %v505
  %v1493 = vpop.f32.mrf.mxu0
  %v1494 = vadd.f32 %v1397, %v1493
  %v1495 = vpop.f32.mrf.mxu0
  %v1496 = vpop.f32.mrf.mxu0
  %v1497 = vadd.f32 %v1400, %v1496
  %v1498 = vpop.f32.mrf.mxu0
  %1499 = vmatprep.mubr.bf16.mxu0 0
  %1500 = vmatmul.mubr.bf16.gmra.mxu0 %v514
  %v1501 = vpop.f32.mrf.mxu0
  %v1502 = vadd.f32 %v1405, %v1501
  %v1503 = vpop.f32.mrf.mxu0
  %v1504 = vpop.f32.mrf.mxu0
  %v1505 = vadd.f32 %v1408, %v1504
  %v1506 = vpop.f32.mrf.mxu0
  %1507 = vmatprep.mubr.bf16.mxu0 0
  %1508 = vmatmul.mubr.bf16.gmra.mxu0 %v523
  %v1509 = vpop.f32.mrf.mxu0
  %v1510 = vadd.f32 %v1413, %v1509
  %v1511 = vpop.f32.mrf.mxu0
  %v1512 = vpop.f32.mrf.mxu0
  %v1513 = vadd.f32 %v1416, %v1512
  %v1514 = vpop.f32.mrf.mxu0
  %1515 = vmatprep.mubr.bf16.mxu0 0
  %1516 = vmatmul.mubr.bf16.gmra.mxu0 %v532
  %v1517 = vpop.f32.mrf.mxu0
  %v1518 = vadd.f32 %v1421, %v1517
  %v1519 = vpop.f32.mrf.mxu0
  %v1520 = vpop.f32.mrf.mxu0
  %v1521 = vadd.f32 %v1424, %v1520
  %v1522 = vpop.f32.mrf.mxu0
  %1523 = vmatprep.mubr.bf16.mxu0 0
  %1524 = vmatmul.mubr.bf16.gmra.mxu0 %v541
  %v1525 = vpop.f32.mrf.mxu0
  %v1526 = vadd.f32 %v1429, %v1525
  %v1527 = vpop.f32.mrf.mxu0
  %v1528 = vpop.f32.mrf.mxu0
  %v1529 = vadd.f32 %v1432, %v1528
  %v1530 = vpop.f32.mrf.mxu0
  %1531 = vmatprep.mubr.bf16.mxu0 0
  %1532 = vmatmul.mubr.bf16.gmra.mxu0 %v550
  %v1533 = vpop.f32.mrf.mxu0
  %v1534 = vadd.f32 %v1437, %v1533
  %v1535 = vpop.f32.mrf.mxu0
  %v1536 = vpop.f32.mrf.mxu0
  %v1537 = vadd.f32 %v1440, %v1536
  %v1538 = vpop.f32.mrf.mxu0
  %1539 = vdwg.mxu0
  %vm1540 = vcmp.ge.f32.partialorder %v1478, 0.0
  %vm1541 = vcmp.ge.f32.partialorder %v1481, 0.0
  %vm1542 = vcmp.ge.f32.partialorder %v1486, 0.0
  %vm1543 = vcmp.ge.f32.partialorder %v1489, 0.0
  %vm1544 = vcmp.ge.f32.partialorder %v1494, 0.0
  %vm1545 = vcmp.ge.f32.partialorder %v1497, 0.0
  %vm1546 = vcmp.ge.f32.partialorder %v1502, 0.0
  %vm1547 = vcmp.ge.f32.partialorder %v1505, 0.0
  %vm1548 = vcmp.ge.f32.partialorder %v1510, 0.0
  %vm1549 = vcmp.ge.f32.partialorder %v1513, 0.0
  %vm1550 = vcmp.ge.f32.partialorder %v1518, 0.0
  %vm1551 = vcmp.ge.f32.partialorder %v1521, 0.0
  %vm1552 = vcmp.ge.f32.partialorder %v1526, 0.0
  %vm1553 = vcmp.ge.f32.partialorder %v1529, 0.0
  %vm1554 = vcmp.ge.f32.partialorder %v1534, 0.0
  %vm1555 = vcmp.ge.f32.partialorder %v1537, 0.0
  %v1556 = vmul.f32 %v1478, 0.01
  %v1557 = vmul.f32 %v1481, 0.01
  %v1558 = vmul.f32 %v1486, 0.01
  %v1559 = vmul.f32 %v1489, 0.01
  %v1560 = vmul.f32 %v1494, 0.01
  %v1561 = vmul.f32 %v1497, 0.01
  %v1562 = vmul.f32 %v1502, 0.01
  %v1563 = vmul.f32 %v1505, 0.01
  %v1564 = vmul.f32 %v1510, 0.01
  %v1565 = vmul.f32 %v1513, 0.01
  %v1566 = vmul.f32 %v1518, 0.01
  %v1567 = vmul.f32 %v1521, 0.01
  %v1568 = vmul.f32 %v1526, 0.01
  %v1569 = vmul.f32 %v1529, 0.01
  %v1570 = vmul.f32 %v1534, 0.01
  %v1571 = vmul.f32 %v1537, 0.01
  %v1572 = vsel %vm1540, %v1478, %v1556
  %v1573 = vsel %vm1541, %v1481, %v1557
  %v1574 = vsel %vm1542, %v1486, %v1558
  %v1575 = vsel %vm1543, %v1489, %v1559
  %v1576 = vsel %vm1544, %v1494, %v1560
  %v1577 = vsel %vm1545, %v1497, %v1561
  %v1578 = vsel %vm1546, %v1502, %v1562
  %v1579 = vsel %vm1547, %v1505, %v1563
  %v1580 = vsel %vm1548, %v1510, %v1564
  %v1581 = vsel %vm1549, %v1513, %v1565
  %v1582 = vsel %vm1550, %v1518, %v1566
  %v1583 = vsel %vm1551, %v1521, %v1567
  %v1584 = vsel %vm1552, %v1526, %v1568
  %v1585 = vsel %vm1553, %v1529, %v1569
  %v1586 = vsel %vm1554, %v1534, %v1570
  %v1587 = vsel %vm1555, %v1537, %v1571
  %v1588 = vpack.c.bf16 %v1573, %v1572
  %v1589 = vpack.c.bf16 %v1575, %v1574
  %v1590 = vpack.c.bf16 %v1577, %v1576
  %v1591 = vpack.c.bf16 %v1579, %v1578
  %v1592 = vpack.c.bf16 %v1581, %v1580
  %v1593 = vpack.c.bf16 %v1583, %v1582
  %v1594 = vpack.c.bf16 %v1585, %v1584
  %v1595 = vpack.c.bf16 %v1587, %v1586
  %v1596 = vld [vmem:[%s4] sm:$0xf]
  %v1597 = vld [vmem:[%s4 + $0x4] sm:$0xf]
  %v1598 = vld [vmem:[%s4 + $0x8] sm:$0xf]
  %v1599 = vld [vmem:[%s4 + $0xc] sm:$0xf]
  %v1600 = vld [vmem:[%s4 + $0x10] sm:$0xf]
  %v1601 = vld [vmem:[%s4 + $0x14] sm:$0xf]
  %v1602 = vld [vmem:[%s4 + $0x18] sm:$0xf]
  %v1603 = vld [vmem:[%s4 + $0x1c] sm:$0xf]
  %v1604 = vld [vmem:[%s4 + $0x20] sm:$0xf]
  %v1605 = vld [vmem:[%s4 + $0x24] sm:$0xf]
  %v1606 = vld [vmem:[%s4 + $0x28] sm:$0xf]
  %v1607 = vld [vmem:[%s4 + $0x2c] sm:$0xf]
  %v1608 = vld [vmem:[%s4 + $0x30] sm:$0xf]
  %v1609 = vld [vmem:[%s4 + $0x34] sm:$0xf]
  %v1610 = vld [vmem:[%s4 + $0x38] sm:$0xf]
  %v1611 = vld [vmem:[%s4 + $0x3c] sm:$0xf]
  %v1612 = vld [vmem:[%s5] sm:$0x1]
  %v1614 = vlaneseq
  %v1615 = vshrl.u32 %v1614, 7
  %v1616 = vsub.s32 0, %v1615
  %v1617 = vrot.slane %v1612, %v1616
  %v1635 = vunpack.c.l.b16 %v1596
  %v1636 = vunpack.c.l.b16 %v1597
  %v1637 = vunpack.c.l.b16 %v1598
  %v1638 = vunpack.c.l.b16 %v1599
  %v1639 = vunpack.c.l.b16 %v1600
  %v1640 = vunpack.c.l.b16 %v1601
  %v1641 = vunpack.c.l.b16 %v1602
  %v1642 = vunpack.c.l.b16 %v1603
  %v1643 = vunpack.c.l.b16 %v1604
  %v1644 = vunpack.c.l.b16 %v1605
  %v1645 = vunpack.c.l.b16 %v1606
  %v1646 = vunpack.c.l.b16 %v1607
  %v1647 = vunpack.c.l.b16 %v1608
  %v1648 = vunpack.c.l.b16 %v1609
  %v1649 = vunpack.c.l.b16 %v1610
  %v1650 = vunpack.c.l.b16 %v1611
  %v1651 = vpack.c.b16 %v1636, %v1635
  %v1652 = vpack.c.b16 %v1638, %v1637
  %v1653 = vpack.c.b16 %v1640, %v1639
  %v1654 = vpack.c.b16 %v1642, %v1641
  %v1655 = vpack.c.b16 %v1644, %v1643
  %v1656 = vpack.c.b16 %v1646, %v1645
  %v1657 = vpack.c.b16 %v1648, %v1647
  %v1658 = vpack.c.b16 %v1650, %v1649
  %1667 = vmatprep.subr.bf16.mxu0 0
  %1668 = vmatpush1.bf16.msra.mxu0 %v1658
  %1669 = vmatprep.subr.bf16.mxu0 0
  %1670 = vmatpush1.bf16.msra.mxu0 %v1657
  %1671 = vmatprep.subr.bf16.mxu0 0
  %1672 = vmatpush1.bf16.msra.mxu0 %v1656
  %1673 = vmatprep.subr.bf16.mxu0 0
  %1674 = vmatpush1.bf16.msra.mxu0 %v1655
  %1675 = vmatprep.subr.bf16.mxu0 0
  %1676 = vmatpush1.bf16.msra.mxu0 %v1654
  %1677 = vmatprep.subr.bf16.mxu0 0
  %1678 = vmatpush1.bf16.msra.mxu0 %v1653
  %1679 = vmatprep.subr.bf16.mxu0 0
  %1680 = vmatpush1.bf16.msra.mxu0 %v1652
  %1681 = vmatprep.subr.bf16.mxu0 0
  %1682 = vmatpush1.bf16.msra.mxu0 %v1651
  %1683 = vmatprep.subr.bf16.mxu0 0
  %1684 = vmatpush2.bf16.msra.mxu0 0
  %1685 = vmatprep.subr.bf16.mxu0 0
  %1686 = vmatpush2.bf16.msra.mxu0 0
  %1687 = vmatprep.subr.bf16.mxu0 0
  %1688 = vmatpush2.bf16.msra.mxu0 0
  %1689 = vmatprep.subr.bf16.mxu0 0
  %1690 = vmatpush2.bf16.msra.mxu0 0
  %1691 = vmatprep.subr.bf16.mxu0 0
  %1692 = vmatpush2.bf16.msra.mxu0 0
  %1693 = vmatprep.subr.bf16.mxu0 0
  %1694 = vmatpush2.bf16.msra.mxu0 0
  %1695 = vmatprep.subr.bf16.mxu0 0
  %1696 = vmatpush2.bf16.msra.mxu0 0
  %1697 = vmatprep.subr.bf16.mxu0 0
  %1698 = vmatpush2.bf16.msra.mxu0 0
  %1699 = vmatprep.mubr.bf16.mxu0 0
  %1700 = vmatmul.mubr.bf16.gmra.mxu0 %v1588
  %v1701 = vpop.f32.mrf.mxu0
  %v1702 = vadd.f32 %v1617, %v1701
  %v1703 = vpop.f32.mrf.mxu0
  %v1704 = vpop.f32.mrf.mxu0
  %v1705 = vadd.f32 %v1617, %v1704
  %v1706 = vpop.f32.mrf.mxu0
  %1707 = vmatprep.mubr.bf16.mxu0 0
  %1708 = vmatmul.mubr.bf16.gmra.mxu0 %v1589
  %v1709 = vpop.f32.mrf.mxu0
  %v1710 = vadd.f32 %v1617, %v1709
  %v1711 = vpop.f32.mrf.mxu0
  %v1712 = vpop.f32.mrf.mxu0
  %v1713 = vadd.f32 %v1617, %v1712
  %v1714 = vpop.f32.mrf.mxu0
  %1715 = vmatprep.mubr.bf16.mxu0 0
  %1716 = vmatmul.mubr.bf16.gmra.mxu0 %v1590
  %v1717 = vpop.f32.mrf.mxu0
  %v1718 = vadd.f32 %v1617, %v1717
  %v1719 = vpop.f32.mrf.mxu0
  %v1720 = vpop.f32.mrf.mxu0
  %v1721 = vadd.f32 %v1617, %v1720
  %v1722 = vpop.f32.mrf.mxu0
  %1723 = vmatprep.mubr.bf16.mxu0 0
  %1724 = vmatmul.mubr.bf16.gmra.mxu0 %v1591
  %v1725 = vpop.f32.mrf.mxu0
  %v1726 = vadd.f32 %v1617, %v1725
  %v1727 = vpop.f32.mrf.mxu0
  %v1728 = vpop.f32.mrf.mxu0
  %v1729 = vadd.f32 %v1617, %v1728
  %v1730 = vpop.f32.mrf.mxu0
  %1731 = vmatprep.mubr.bf16.mxu0 0
  %1732 = vmatmul.mubr.bf16.gmra.mxu0 %v1592
  %v1733 = vpop.f32.mrf.mxu0
  %v1734 = vadd.f32 %v1617, %v1733
  %v1735 = vpop.f32.mrf.mxu0
  %v1736 = vpop.f32.mrf.mxu0
  %v1737 = vadd.f32 %v1617, %v1736
  %v1738 = vpop.f32.mrf.mxu0
  %1739 = vmatprep.mubr.bf16.mxu0 0
  %1740 = vmatmul.mubr.bf16.gmra.mxu0 %v1593
  %v1741 = vpop.f32.mrf.mxu0
  %v1742 = vadd.f32 %v1617, %v1741
  %v1743 = vpop.f32.mrf.mxu0
  %v1744 = vpop.f32.mrf.mxu0
  %v1745 = vadd.f32 %v1617, %v1744
  %v1746 = vpop.f32.mrf.mxu0
  %1747 = vmatprep.mubr.bf16.mxu0 0
  %1748 = vmatmul.mubr.bf16.gmra.mxu0 %v1594
  %v1749 = vpop.f32.mrf.mxu0
  %v1750 = vadd.f32 %v1617, %v1749
  %v1751 = vpop.f32.mrf.mxu0
  %v1752 = vpop.f32.mrf.mxu0
  %v1753 = vadd.f32 %v1617, %v1752
  %v1754 = vpop.f32.mrf.mxu0
  %1755 = vmatprep.mubr.bf16.mxu0 0
  %1756 = vmatmul.mubr.bf16.gmra.mxu0 %v1595
  %v1757 = vpop.f32.mrf.mxu0
  %v1758 = vadd.f32 %v1617, %v1757
  %v1759 = vpop.f32.mrf.mxu0
  %v1760 = vpop.f32.mrf.mxu0
  %v1761 = vadd.f32 %v1617, %v1760
  %v1762 = vpop.f32.mrf.mxu0
  %1763 = vdwg.mxu0
  %v1764 = vld [vmem:[%s1] sm:$0xf]
  %v1765 = vld [vmem:[%s1 + $0x4] sm:$0xf]
  %v1766 = vld [vmem:[%s1 + $0x8] sm:$0xf]
  %v1767 = vld [vmem:[%s1 + $0xc] sm:$0xf]
  %v1768 = vld [vmem:[%s1 + $0x10] sm:$0xf]
  %v1769 = vld [vmem:[%s1 + $0x14] sm:$0xf]
  %v1770 = vld [vmem:[%s1 + $0x18] sm:$0xf]
  %v1771 = vld [vmem:[%s1 + $0x1c] sm:$0xf]
  %v1772 = vld [vmem:[%s1 + $0x20] sm:$0xf]
  %v1773 = vld [vmem:[%s1 + $0x24] sm:$0xf]
  %v1774 = vld [vmem:[%s1 + $0x28] sm:$0xf]
  %v1775 = vld [vmem:[%s1 + $0x2c] sm:$0xf]
  %v1776 = vld [vmem:[%s1 + $0x30] sm:$0xf]
  %v1777 = vld [vmem:[%s1 + $0x34] sm:$0xf]
  %v1778 = vld [vmem:[%s1 + $0x38] sm:$0xf]
  %v1779 = vld [vmem:[%s1 + $0x3c] sm:$0xf]
  %v1780 = vunpack.c.l.bf16 %v1764
  %v1781 = vunpack.c.l.bf16 %v1765
  %v1782 = vunpack.c.l.bf16 %v1766
  %v1783 = vunpack.c.l.bf16 %v1767
  %v1784 = vunpack.c.l.bf16 %v1768
  %v1785 = vunpack.c.l.bf16 %v1769
  %v1786 = vunpack.c.l.bf16 %v1770
  %v1787 = vunpack.c.l.bf16 %v1771
  %v1788 = vunpack.c.l.bf16 %v1772
  %v1789 = vunpack.c.l.bf16 %v1773
  %v1790 = vunpack.c.l.bf16 %v1774
  %v1791 = vunpack.c.l.bf16 %v1775
  %v1792 = vunpack.c.l.bf16 %v1776
  %v1793 = vunpack.c.l.bf16 %v1777
  %v1794 = vunpack.c.l.bf16 %v1778
  %v1795 = vunpack.c.l.bf16 %v1779
  %v1796 = vadd.f32 %v1780, %v1702
  %v1797 = vadd.f32 %v1781, %v1705
  %v1798 = vadd.f32 %v1782, %v1710
  %v1799 = vadd.f32 %v1783, %v1713
  %v1800 = vadd.f32 %v1784, %v1718
  %v1801 = vadd.f32 %v1785, %v1721
  %v1802 = vadd.f32 %v1786, %v1726
  %v1803 = vadd.f32 %v1787, %v1729
  %v1804 = vadd.f32 %v1788, %v1734
  %v1805 = vadd.f32 %v1789, %v1737
  %v1806 = vadd.f32 %v1790, %v1742
  %v1807 = vadd.f32 %v1791, %v1745
  %v1808 = vadd.f32 %v1792, %v1750
  %v1809 = vadd.f32 %v1793, %v1753
  %v1810 = vadd.f32 %v1794, %v1758
  %v1811 = vadd.f32 %v1795, %v1761
  %v1812 = vmul.f32 %v1796, 1.702
  %v1813 = vmul.f32 %v1797, 1.702
  %v1814 = vmul.f32 %v1798, 1.702
  %v1815 = vmul.f32 %v1799, 1.702
  %v1816 = vmul.f32 %v1800, 1.702
  %v1817 = vmul.f32 %v1801, 1.702
  %v1818 = vmul.f32 %v1802, 1.702
  %v1819 = vmul.f32 %v1803, 1.702
  %v1820 = vmul.f32 %v1804, 1.702
  %v1821 = vmul.f32 %v1805, 1.702
  %v1822 = vmul.f32 %v1806, 1.702
  %v1823 = vmul.f32 %v1807, 1.702
  %v1824 = vmul.f32 %v1808, 1.702
  %v1825 = vmul.f32 %v1809, 1.702
  %v1826 = vmul.f32 %v1810, 1.702
  %v1827 = vmul.f32 %v1811, 1.702
  %v1828 = vxor.u32 %v1812, 2147483648
  %v1829 = vxor.u32 %v1813, 2147483648
  %v1830 = vxor.u32 %v1814, 2147483648
  %v1831 = vxor.u32 %v1815, 2147483648
  %v1832 = vxor.u32 %v1816, 2147483648
  %v1833 = vxor.u32 %v1817, 2147483648
  %v1834 = vxor.u32 %v1818, 2147483648
  %v1835 = vxor.u32 %v1819, 2147483648
  %v1836 = vxor.u32 %v1820, 2147483648
  %v1837 = vxor.u32 %v1821, 2147483648
  %v1838 = vxor.u32 %v1822, 2147483648
  %v1839 = vxor.u32 %v1823, 2147483648
  %v1840 = vxor.u32 %v1824, 2147483648
  %v1841 = vxor.u32 %v1825, 2147483648
  %v1842 = vxor.u32 %v1826, 2147483648
  %v1843 = vxor.u32 %v1827, 2147483648
  %v1844 = vmul.f32 %v1828, 1.442695
  %v1845 = vpow.pop %v1844
  %v1846 = vmul.f32 %v1829, 1.442695
  %v1847 = vpow.pop %v1846
  %v1848 = vmul.f32 %v1830, 1.442695
  %v1849 = vpow.pop %v1848
  %v1850 = vmul.f32 %v1831, 1.442695
  %v1851 = vpow.pop %v1850
  %v1852 = vmul.f32 %v1832, 1.442695
  %v1853 = vpow.pop %v1852
  %v1854 = vmul.f32 %v1833, 1.442695
  %v1855 = vpow.pop %v1854
  %v1856 = vmul.f32 %v1834, 1.442695
  %v1857 = vpow.pop %v1856
  %v1858 = vmul.f32 %v1835, 1.442695
  %v1859 = vpow.pop %v1858
  %v1860 = vmul.f32 %v1836, 1.442695
  %v1861 = vpow.pop %v1860
  %v1862 = vmul.f32 %v1837, 1.442695
  %v1863 = vpow.pop %v1862
  %v1864 = vmul.f32 %v1838, 1.442695
  %v1865 = vpow.pop %v1864
  %v1866 = vmul.f32 %v1839, 1.442695
  %v1867 = vpow.pop %v1866
  %v1868 = vmul.f32 %v1840, 1.442695
  %v1869 = vpow.pop %v1868
  %v1870 = vmul.f32 %v1841, 1.442695
  %v1871 = vpow.pop %v1870
  %v1872 = vmul.f32 %v1842, 1.442695
  %v1873 = vpow.pop %v1872
  %v1874 = vmul.f32 %v1843, 1.442695
  %v1875 = vpow.pop %v1874
  %v1876 = vadd.f32 %v1845, 1.0
  %v1877 = vadd.f32 %v1847, 1.0
  %v1878 = vadd.f32 %v1849, 1.0
  %v1879 = vadd.f32 %v1851, 1.0
  %v1880 = vadd.f32 %v1853, 1.0
  %v1881 = vadd.f32 %v1855, 1.0
  %v1882 = vadd.f32 %v1857, 1.0
  %v1883 = vadd.f32 %v1859, 1.0
  %v1884 = vadd.f32 %v1861, 1.0
  %v1885 = vadd.f32 %v1863, 1.0
  %v1886 = vadd.f32 %v1865, 1.0
  %v1887 = vadd.f32 %v1867, 1.0
  %v1888 = vadd.f32 %v1869, 1.0
  %v1889 = vadd.f32 %v1871, 1.0
  %v1890 = vadd.f32 %v1873, 1.0
  %v1891 = vadd.f32 %v1875, 1.0
  %v1892 = vrcp.pop %v1876
  %v1893 = vmul.f32 1.0, %v1892
  %v1894 = vrcp.pop %v1877
  %v1895 = vmul.f32 1.0, %v1894
  %v1896 = vrcp.pop %v1878
  %v1897 = vmul.f32 1.0, %v1896
  %v1898 = vrcp.pop %v1879
  %v1899 = vmul.f32 1.0, %v1898
  %v1900 = vrcp.pop %v1880
  %v1901 = vmul.f32 1.0, %v1900
  %v1902 = vrcp.pop %v1881
  %v1903 = vmul.f32 1.0, %v1902
  %v1904 = vrcp.pop %v1882
  %v1905 = vmul.f32 1.0, %v1904
  %v1906 = vrcp.pop %v1883
  %v1907 = vmul.f32 1.0, %v1906
  %v1908 = vrcp.pop %v1884
  %v1909 = vmul.f32 1.0, %v1908
  %v1910 = vrcp.pop %v1885
  %v1911 = vmul.f32 1.0, %v1910
  %v1912 = vrcp.pop %v1886
  %v1913 = vmul.f32 1.0, %v1912
  %v1914 = vrcp.pop %v1887
  %v1915 = vmul.f32 1.0, %v1914
  %v1916 = vrcp.pop %v1888
  %v1917 = vmul.f32 1.0, %v1916
  %v1918 = vrcp.pop %v1889
  %v1919 = vmul.f32 1.0, %v1918
  %v1920 = vrcp.pop %v1890
  %v1921 = vmul.f32 1.0, %v1920
  %v1922 = vrcp.pop %v1891
  %v1923 = vmul.f32 1.0, %v1922
  %v1924 = vmul.f32 %v1796, %v1893
  %v1925 = vmul.f32 %v1797, %v1895
  %v1926 = vmul.f32 %v1798, %v1897
  %v1927 = vmul.f32 %v1799, %v1899
  %v1928 = vmul.f32 %v1800, %v1901
  %v1929 = vmul.f32 %v1801, %v1903
  %v1930 = vmul.f32 %v1802, %v1905
  %v1931 = vmul.f32 %v1803, %v1907
  %v1932 = vmul.f32 %v1804, %v1909
  %v1933 = vmul.f32 %v1805, %v1911
  %v1934 = vmul.f32 %v1806, %v1913
  %v1935 = vmul.f32 %v1807, %v1915
  %v1936 = vmul.f32 %v1808, %v1917
  %v1937 = vmul.f32 %v1809, %v1919
  %v1938 = vmul.f32 %v1810, %v1921
  %v1939 = vmul.f32 %v1811, %v1923
  %v1940 = vpack.c.bf16 %v1925, %v1924
  %v1941 = vpack.c.bf16 %v1927, %v1926
  %v1942 = vpack.c.bf16 %v1929, %v1928
  %v1943 = vpack.c.bf16 %v1931, %v1930
  %v1944 = vpack.c.bf16 %v1933, %v1932
  %v1945 = vpack.c.bf16 %v1935, %v1934
  %v1946 = vpack.c.bf16 %v1937, %v1936
  %v1947 = vpack.c.bf16 %v1939, %v1938
  %v1956 = vunpack.c.l.b16 %v1940
  %v1957 = vunpack.c.h.b16 %v1940
  %v1958 = vunpack.c.l.b16 %v1941
  %v1959 = vunpack.c.h.b16 %v1941
  %v1960 = vunpack.c.l.b16 %v1942
  %v1961 = vunpack.c.h.b16 %v1942
  %v1962 = vunpack.c.l.b16 %v1943
  %v1963 = vunpack.c.h.b16 %v1943
  %v1964 = vunpack.c.l.b16 %v1944
  %v1965 = vunpack.c.h.b16 %v1944
  %v1966 = vunpack.c.l.b16 %v1945
  %v1967 = vunpack.c.h.b16 %v1945
  %v1968 = vunpack.c.l.b16 %v1946
  %v1969 = vunpack.c.h.b16 %v1946
  %v1970 = vunpack.c.l.b16 %v1947
  %v1971 = vunpack.c.h.b16 %v1947
  %v1972 = vpack.c.b16 %v1956, %v1956
  %v1973 = vpack.c.b16 %v1957, %v1957
  %v1974 = vpack.c.b16 %v1958, %v1958
  %v1975 = vpack.c.b16 %v1959, %v1959
  %v1976 = vpack.c.b16 %v1960, %v1960
  %v1977 = vpack.c.b16 %v1961, %v1961
  %v1978 = vpack.c.b16 %v1962, %v1962
  %v1979 = vpack.c.b16 %v1963, %v1963
  %v1980 = vpack.c.b16 %v1964, %v1964
  %v1981 = vpack.c.b16 %v1965, %v1965
  %v1982 = vpack.c.b16 %v1966, %v1966
  %v1983 = vpack.c.b16 %v1967, %v1967
  %v1984 = vpack.c.b16 %v1968, %v1968
  %v1985 = vpack.c.b16 %v1969, %v1969
  %v1986 = vpack.c.b16 %v1970, %v1970
  %v1987 = vpack.c.b16 %v1971, %v1971
  %2004 = vst [vmem:[%s6] sm:$0xf] %v1972
  %2005 = vst [vmem:[%s6 + $0x4] sm:$0xf] %v1973
  %2006 = vst [vmem:[%s6 + $0x8] sm:$0xf] %v1974
  %2007 = vst [vmem:[%s6 + $0xc] sm:$0xf] %v1975
  %2008 = vst [vmem:[%s6 + $0x10] sm:$0xf] %v1976
  %2009 = vst [vmem:[%s6 + $0x14] sm:$0xf] %v1977
  %2010 = vst [vmem:[%s6 + $0x18] sm:$0xf] %v1978
  %2011 = vst [vmem:[%s6 + $0x1c] sm:$0xf] %v1979
  %2012 = vst [vmem:[%s6 + $0x20] sm:$0xf] %v1980
  %2013 = vst [vmem:[%s6 + $0x24] sm:$0xf] %v1981
  %2014 = vst [vmem:[%s6 + $0x28] sm:$0xf] %v1982
  %2015 = vst [vmem:[%s6 + $0x2c] sm:$0xf] %v1983
  %2016 = vst [vmem:[%s6 + $0x30] sm:$0xf] %v1984
  %2017 = vst [vmem:[%s6 + $0x34] sm:$0xf] %v1985
  %2018 = vst [vmem:[%s6 + $0x38] sm:$0xf] %v1986
  %2019 = vst [vmem:[%s6 + $0x3c] sm:$0xf] %v1987
  // Predicated region
  $region26: #{vqvae_encoder_forward.6} parent=0 // pred_check
    _
  $region27: #{vqvae_encoder_forward.6} parent=0 // pred_check_branch
    %2021 = sbr.rel (0) target = $region29
  $region28: #{vqvae_encoder_forward.6} parent=0 // pred_region
    _
  $region29: #{vqvae_encoder_forward.6} parent=0 // pred_fallthru
    _
  // Predicated region
  $region30: #{vqvae_encoder_forward.6} parent=0 // pred_check
    _
  $region31: #{vqvae_encoder_forward.6} parent=0 // pred_check_branch
    %2023 = sbr.rel (0) target = $region33
  $region32: #{vqvae_encoder_forward.6} parent=0 // pred_region
    _
  $region33: #{vqvae_encoder_forward.6} parent=0 // pred_fallthru
    _

// kernel: vqvae_encoder_forward.7
$region0: #{vqvae_encoder_forward.7}
  #allocation0 [shape = 'u32[]', space=smem, size = 0x4, offset = 0x4, fixed_abs, tag = 'smem constant byte address 0x4 - core index']
  #allocation1 [shape = 'u32[144,128]{1,0:T(1,128)}', space=vmem, size = 0x12000, scoped, tag = 'internal scratch']
  #allocation2 [shape = 'f32[32,128]{1,0:T(8,128)}', space=vmem, size = 0x4000, scoped, tag = 'scratch operand']
  %s0 = inlined_call_operand.vmem [shape: bf16[32,2048], index: 0, kind: input, shape index: {}]
  %s1 = inlined_call_operand.vmem [shape: bf16[2048,128], index: 1, kind: input, shape index: {}]
  %s2 = inlined_call_operand.vmem [shape: f32[1,128], index: 2, kind: input, shape index: {}]
  %s3 = inlined_call_operand.vmem [shape: bf16[32,128], index: 3, kind: output, shape index: {}]
  %s4 = sld [smem:[#allocation0]]
  $region76: #{vqvae_encoder_forward.7} parent=0
    _
  %s6 = ssub.s32 1, %s4
  %s7 = scalar_select 0, %s6, %s4
  $region1: #{vqvae_encoder_forward.7} parent=0
    #allocation3 [shape = 'u8[131072]{0}', space=vmem, size = 0x20000, scoped, tag = 'input window, operand 0']
    loop: start=0, step=1, limit=4
    $region2: #{vqvae_encoder_forward.7} parent=1 // loop_pre_header
      _
    $region3: #{vqvae_encoder_forward.7} parent=1 // loop_header
      %s9 = sphi 0, %s13
      %p10 = scmp.ge.s32.totalorder %s9, 4
      %s16 = sphi 0, %s35
      %s17 = sphi 0, %s31
      %s18 = sphi 0, %s27
      %s19 = sphi 0, %s16
      %s20 = sphi 0, %s17
      %s21 = sphi 0, %s18
      %s22 = sphi 0, %s19
      %s23 = sphi 0, %s20
      %s24 = sphi 0, %s21
      %s40 = sphi 0, %s42
      %s43 = sphi 0, %s40
      %s44 = sphi 0, %s43
      %s60 = sphi 0, %s44
      %s68 = sphi 0, %s70
      %s71 = sphi 0, %s68
      %s72 = sphi 0, %s71
      %s88 = sphi 0, %s72
      %s94 = sphi 0, %s96
      %s97 = sphi 0, %s94
      %s98 = sphi 0, %s97
      %s114 = sphi 0, %s98
      %s122 = sphi 0, %s124
      %s125 = sphi 0, %s122
      %s126 = sphi 0, %s125
      %s142 = sphi 0, %s126
    $region4: #{vqvae_encoder_forward.7} parent=1 // loop_header_branch
      %12 = sbr.rel (%p10) target = $region8
    $region5: #{vqvae_encoder_forward.7} parent=1 // loop_body
      %s14 = ssub.s32 %s9, 1
      %s15 = ssub.s32 %s9, 2
      %s25 = sadd.s32 1, %s18
      %p26 = scmp.ge.s32.totalorder %s25, 2
      %s27 = scalar_select %p26, 0, %s25
      %s28 = sadd.s32 1, %s17
      %s29 = scalar_select %p26, %s28, %s17
      %p30 = scmp.ge.s32.totalorder %s29, 1
      %s31 = scalar_select %p30, 0, %s29
      %s32 = sadd.s32 1, %s16
      %s33 = scalar_select %p30, %s32, %s16
      %p34 = scmp.ge.s32.totalorder %s33, 1
      %s35 = scalar_select %p34, 0, %s33
      %s36 = ssub.s32 %s16, %s35
      %s37 = ssub.s32 %s18, %s27
      %s38 = sor.u32 %s36, %s37
      %p39 = scmp.eq.s32.totalorder %s38, 0
      %s41 = sadd.s32 %s40, 1
      %s42 = scalar_select %p39, %s40, %s41
      %p45 = pneg %p39
      %p46 = scmp.eq.s32.totalorder %s9, 1
      %p47 = por %p45, %p46
      %p48 = scmp.ne.s32.totalorder %s40, %s43
      %p49 = scmp.eq.s32.totalorder %s9, 0
      %p50 = por %p48, %p49
      %p51 = scmp.ne.s32.totalorder %s40, %s43
      %p52 = scmp.eq.s32.totalorder %s14, 1
      %p53 = por %p51, %p52
      %p54 = scmp.ne.s32.totalorder %s43, %s44
      %p55 = scmp.eq.s32.totalorder %s14, 0
      %p56 = por %p54, %p55
      %p57 = scmp.ne.s32.totalorder %s43, %s44
      %p58 = scmp.eq.s32.totalorder %s15, 1
      %p59 = por %p57, %p58
      %p61 = scmp.ne.s32.totalorder %s44, %s60
      %p62 = scmp.eq.s32.totalorder %s15, 0
      %p63 = por %p61, %p62
      %s64 = ssub.s32 %s18, %s27
      %s65 = ssub.s32 %s17, %s31
      %s66 = sor.u32 %s64, %s65
      %p67 = scmp.eq.s32.totalorder %s66, 0
      %s69 = sadd.s32 %s68, 1
      %s70 = scalar_select %p67, %s68, %s69
      %p73 = pneg %p67
      %p74 = scmp.eq.s32.totalorder %s9, 1
      %p75 = por %p73, %p74
      %p76 = scmp.ne.s32.totalorder %s68, %s71
      %p77 = scmp.eq.s32.totalorder %s9, 0
      %p78 = por %p76, %p77
      %p79 = scmp.ne.s32.totalorder %s68, %s71
      %p80 = scmp.eq.s32.totalorder %s14, 1
      %p81 = por %p79, %p80
      %p82 = scmp.ne.s32.totalorder %s71, %s72
      %p83 = scmp.eq.s32.totalorder %s14, 0
      %p84 = por %p82, %p83
      %p85 = scmp.ne.s32.totalorder %s71, %s72
      %p86 = scmp.eq.s32.totalorder %s15, 1
      %p87 = por %p85, %p86
      %p89 = scmp.ne.s32.totalorder %s72, %s88
      %p90 = scmp.eq.s32.totalorder %s15, 0
      %p91 = por %p89, %p90
      %s92 = ssub.s32 %s17, %s31
      %p93 = scmp.eq.s32.totalorder %s92, 0
      %s95 = sadd.s32 %s94, 1
      %s96 = scalar_select %p93, %s94, %s95
      %p99 = pneg %p93
      %p100 = scmp.eq.s32.totalorder %s9, 1
      %p101 = por %p99, %p100
      %p102 = scmp.ne.s32.totalorder %s94, %s97
      %p103 = scmp.eq.s32.totalorder %s9, 0
      %p104 = por %p102, %p103
      %p105 = scmp.ne.s32.totalorder %s94, %s97
      %p106 = scmp.eq.s32.totalorder %s14, 1
      %p107 = por %p105, %p106
      %p108 = scmp.ne.s32.totalorder %s97, %s98
      %p109 = scmp.eq.s32.totalorder %s14, 0
      %p110 = por %p108, %p109
      %p111 = scmp.ne.s32.totalorder %s97, %s98
      %p112 = scmp.eq.s32.totalorder %s15, 1
      %p113 = por %p111, %p112
      %p115 = scmp.ne.s32.totalorder %s98, %s114
      %p116 = scmp.eq.s32.totalorder %s15, 0
      %p117 = por %p115, %p116
      %s118 = ssub.s32 %s16, %s35
      %s119 = ssub.s32 %s17, %s31
      %s120 = sor.u32 %s118, %s119
      %p121 = scmp.eq.s32.totalorder %s120, 0
      %s123 = sadd.s32 %s122, 1
      %s124 = scalar_select %p121, %s122, %s123
      %p127 = pneg %p121
      %p128 = scmp.eq.s32.totalorder %s9, 1
      %p129 = por %p127, %p128
      %p130 = scmp.ne.s32.totalorder %s122, %s125
      %p131 = scmp.eq.s32.totalorder %s9, 0
      %p132 = por %p130, %p131
      %p133 = scmp.ne.s32.totalorder %s122, %s125
      %p134 = scmp.eq.s32.totalorder %s14, 1
      %p135 = por %p133, %p134
      %p136 = scmp.ne.s32.totalorder %s125, %s126
      %p137 = scmp.eq.s32.totalorder %s14, 0
      %p138 = por %p136, %p137
      %p139 = scmp.ne.s32.totalorder %s125, %s126
      %p140 = scmp.eq.s32.totalorder %s15, 1
      %p141 = por %p139, %p140
      %p143 = scmp.ne.s32.totalorder %s126, %s142
      %p144 = scmp.eq.s32.totalorder %s15, 0
      %p145 = por %p143, %p144
      %p146 = scmp.le.s32.totalorder 1, %s9
      %p147 = scmp.lt.s32.totalorder %s9, 3
      %p148 = pnand %p146, %p147
      %p149 = pneg %p148
      // Predicated region
      $region9: #{vqvae_encoder_forward.7} parent=5 // pred_check
        _
      $region10: #{vqvae_encoder_forward.7} parent=5 // pred_check_branch
        %151 = sbr.rel (%p148) target = $region12
      $region11: #{vqvae_encoder_forward.7} parent=5 // pred_region
        %s152 = ssub.s32 %s9, 1
        // Predicated region
        $region13: #{vqvae_encoder_forward.7} parent=11 // pred_check
          %p153 = pneg %p110
        $region14: #{vqvae_encoder_forward.7} parent=11 // pred_check_branch
          %155 = sbr.rel (%p153) target = $region16
        $region15: #{vqvae_encoder_forward.7} parent=11 // pred_region
          %p156 = scmp.lt.s32.totalorder %s20, 0
          %s157 = scalar_select %p156, %s20, 0
          %s158 = scalar_lea.vmem %s2, %s157
        $region16: #{vqvae_encoder_forward.7} parent=11 // pred_fallthru
          _
      $region12: #{vqvae_encoder_forward.7} parent=5 // pred_fallthru
        _
      %p159 = scmp.lt.s32.totalorder %s9, 2
      // Predicated region
      $region17: #{vqvae_encoder_forward.7} parent=5 // pred_check
        %p160 = pneg %p159
      $region18: #{vqvae_encoder_forward.7} parent=5 // pred_check_branch
        %162 = sbr.rel (%p160) target = $region20
      $region19: #{vqvae_encoder_forward.7} parent=5 // pred_region
        // Predicated region
        $region21: #{vqvae_encoder_forward.7} parent=19 // pred_check
          %p163 = pneg %p50
        $region22: #{vqvae_encoder_forward.7} parent=19 // pred_check_branch
          %165 = sbr.rel (%p163) target = $region24
        $region23: #{vqvae_encoder_forward.7} parent=19 // pred_region
          %s166 = sand.u32 %s40, 1
          %s167 = sand.u32 %s40, 1
          %s168 = smul.addr %s167, 128
          %s169 = scalar_lea.vmem [#allocation3], %s168
          %s170 = smul.u32 4, %s16
          %s171 = smul.u32 8, %s18
          %s172 = smul.addr %s170, 16
          %s173 = sadd.s32 %s171, %s172
          %s174 = smul.addr %s173, 4
          %s175 = scalar_lea.vmem %s0, %s174
          // Predicated region
          $region25: #{vqvae_encoder_forward.7} parent=23 // pred_check
            _
          $region26: #{vqvae_encoder_forward.7} parent=23 // pred_check_branch
            %177 = sbr.rel (0) target = $region28
          $region27: #{vqvae_encoder_forward.7} parent=23 // pred_region
            // Predicated region
            $region29: #{vqvae_encoder_forward.7} parent=27 // pred_check
              _
            $region30: #{vqvae_encoder_forward.7} parent=27 // pred_check_branch
              %179 = sbr.rel (0) target = $region32
            $region31: #{vqvae_encoder_forward.7} parent=27 // pred_region
              loop: start=0, step=1, limit=1
              $region33: #{vqvae_encoder_forward.7} parent=31 // loop_pre_header
                _
              $region34: #{vqvae_encoder_forward.7} parent=31 // loop_header
                %s181 = sphi 0, %s185
                %p182 = scmp.ge.s32.totalorder %s181, 1
                %s186 = sphi %s175, %s175
                %s187 = sphi %s169, %s169
              $region35: #{vqvae_encoder_forward.7} parent=31 // loop_header_branch
                %184 = sbr.rel (%p182) target = $region39
              $region36: #{vqvae_encoder_forward.7} parent=31 // loop_body
                %v188 = vld [vmem:[%s186] sm:$0xff]
                %189 = vst [vmem:[%s187] sm:$0xff] %v188
                %v190 = vld [vmem:[%s186 + $0x8] sm:$0xff]
                %191 = vst [vmem:[%s187 + $0x8] sm:$0xff] %v190
                %v192 = vld [vmem:[%s186 + $0x10] sm:$0xff]
                %193 = vst [vmem:[%s187 + $0x10] sm:$0xff] %v192
                %v194 = vld [vmem:[%s186 + $0x18] sm:$0xff]
                %195 = vst [vmem:[%s187 + $0x18] sm:$0xff] %v194
                %v196 = vld [vmem:[%s186 + $0x40] sm:$0xff]
                %197 = vst [vmem:[%s187 + $0x20] sm:$0xff] %v196
                %v198 = vld [vmem:[%s186 + $0x48] sm:$0xff]
                %199 = vst [vmem:[%s187 + $0x28] sm:$0xff] %v198
                %v200 = vld [vmem:[%s186 + $0x50] sm:$0xff]
                %201 = vst [vmem:[%s187 + $0x30] sm:$0xff] %v200
                %v202 = vld [vmem:[%s186 + $0x58] sm:$0xff]
                %203 = vst [vmem:[%s187 + $0x38] sm:$0xff] %v202
                %v204 = vld [vmem:[%s186 + $0x80] sm:$0xff]
                %205 = vst [vmem:[%s187 + $0x40] sm:$0xff] %v204
                %v206 = vld [vmem:[%s186 + $0x88] sm:$0xff]
                %207 = vst [vmem:[%s187 + $0x48] sm:$0xff] %v206
                %v208 = vld [vmem:[%s186 + $0x90] sm:$0xff]
                %209 = vst [vmem:[%s187 + $0x50] sm:$0xff] %v208
                %v210 = vld [vmem:[%s186 + $0x98] sm:$0xff]
                %211 = vst [vmem:[%s187 + $0x58] sm:$0xff] %v210
                %v212 = vld [vmem:[%s186 + $0xc0] sm:$0xff]
                %213 = vst [vmem:[%s187 + $0x60] sm:$0xff] %v212
                %v214 = vld [vmem:[%s186 + $0xc8] sm:$0xff]
                %215 = vst [vmem:[%s187 + $0x68] sm:$0xff] %v214
                %v216 = vld [vmem:[%s186 + $0xd0] sm:$0xff]
                %217 = vst [vmem:[%s187 + $0x70] sm:$0xff] %v216
                %v218 = vld [vmem:[%s186 + $0xd8] sm:$0xff]
                %219 = vst [vmem:[%s187 + $0x78] sm:$0xff] %v218
              $region37: #{vqvae_encoder_forward.7} parent=31 // loop_footer
                %s185 = sadd.s32 1, %s181
              $region38: #{vqvae_encoder_forward.7} parent=31 // loop_footer_branch
                %180 = sbr.rel target = $region34
              $region39: #{vqvae_encoder_forward.7} parent=31 // loop_exit
                _
            $region32: #{vqvae_encoder_forward.7} parent=27 // pred_fallthru
              _
            // Predicated region
            $region40: #{vqvae_encoder_forward.7} parent=27 // pred_check
              _
            $region41: #{vqvae_encoder_forward.7} parent=27 // pred_check_branch
              %221 = sbr.rel target = $region43
            $region42: #{vqvae_encoder_forward.7} parent=27 // pred_region
              _
            $region43: #{vqvae_encoder_forward.7} parent=27 // pred_fallthru
              _
          $region28: #{vqvae_encoder_forward.7} parent=23 // pred_fallthru
            _
          %222 = vnop
        $region24: #{vqvae_encoder_forward.7} parent=19 // pred_fallthru
          _
        // Predicated region
        $region44: #{vqvae_encoder_forward.7} parent=19 // pred_check
          %p223 = pneg %p78
        $region45: #{vqvae_encoder_forward.7} parent=19 // pred_check_branch
          %225 = sbr.rel (%p223) target = $region47
        $region46: #{vqvae_encoder_forward.7} parent=19 // pred_region
          %s226 = smul.u32 128, %s18
          %p227 = scmp.lt.s32.totalorder %s226, 255
          %s228 = scalar_select %p227, %s226, 255
          %p229 = scmp.lt.s32.totalorder %s17, 0
          %s230 = scalar_select %p229, %s17, 0
          %s231 = sadd.s32 %s230, %s228
          %s232 = smul.addr %s231, 4
          %s233 = scalar_lea.vmem %s1, %s232
          %s234 = smul.u32 128, %s18
        $region47: #{vqvae_encoder_forward.7} parent=19 // pred_fallthru
          _
      $region20: #{vqvae_encoder_forward.7} parent=5 // pred_fallthru
        _
      %p235 = scmp.le.s32.totalorder 1, %s9
      %p236 = scmp.lt.s32.totalorder %s9, 3
      %p237 = pnand %p235, %p236
      %p238 = pneg %p237
      // Predicated region
      $region48: #{vqvae_encoder_forward.7} parent=5 // pred_check
        _
      $region49: #{vqvae_encoder_forward.7} parent=5 // pred_check_branch
        %240 = sbr.rel (%p237) target = $region51
      $region50: #{vqvae_encoder_forward.7} parent=5 // pred_region
        %s241 = ssub.s32 %s9, 1
        %s242 = sand.u32 %s43, 1
        %s243 = sand.u32 %s43, 1
        %s244 = smul.addr %s243, 128
        %s245 = scalar_lea.vmem [#allocation3], %s244
        // Predicated region
        $region52: #{vqvae_encoder_forward.7} parent=50 // pred_check
          %p246 = pneg %p56
        $region53: #{vqvae_encoder_forward.7} parent=50 // pred_check_branch
          %248 = sbr.rel (%p246) target = $region55
        $region54: #{vqvae_encoder_forward.7} parent=50 // pred_region
          _
        $region55: #{vqvae_encoder_forward.7} parent=50 // pred_fallthru
          _
        %s249 = sand.u32 %s43, 1
        %s250 = sand.u32 %s43, 1
        %s251 = smul.addr %s250, 128
        %s252 = scalar_lea.vmem [#allocation3], %s251
        %p253 = pneg %p56
        %p254 = pneg %p53
        %s255 = smul.u32 128, %s21
        %p256 = scmp.lt.s32.totalorder %s255, 255
        %s257 = scalar_select %p256, %s255, 255
        %p258 = scmp.lt.s32.totalorder %s20, 0
        %s259 = scalar_select %p258, %s20, 0
        %s260 = sadd.s32 %s259, %s257
        %s261 = smul.addr %s260, 4
        %s262 = scalar_lea.vmem %s1, %s261
        %p263 = pneg %p84
        %p264 = pneg %p81
        %p265 = scmp.lt.s32.totalorder %s20, 0
        %s266 = scalar_select %p265, %s20, 0
        %s267 = scalar_lea.vmem %s2, %s266
        %p268 = pneg %p110
        %p269 = pneg %p107
        %p270 = pneg %p138
        %p271 = pneg %p135
        %s272 = smul.u32 4, %s19
        %p273 = scmp.lt.s32.totalorder %s272, 3
        %s274 = scalar_select %p273, %s272, 3
        %p275 = scmp.lt.s32.totalorder %s20, 0
        %s276 = scalar_select %p275, %s20, 0
        %s277 = sadd.s32 %s276, %s274
        %s278 = smul.addr %s277, 4
        %s279 = scalar_lea.vmem %s3, %s278
        %s280 = smul.u32 4, %s19
        %s281 = smul.u32 8, %s21
        %s282 = smul.u32 128, %s21
        %p283 = scmp.lt.s32.totalorder %s282, 255
        %s284 = scalar_select %p283, %s282, 255
        %p285 = scmp.lt.s32.totalorder %s20, 0
        %s286 = scalar_select %p285, %s20, 0
        %s287 = sadd.s32 %s286, %s284
        %s288 = smul.addr %s287, 4
        %s289 = scalar_lea.vmem %s1, %s288
        %s290 = smul.u32 128, %s21
        %p291 = scmp.lt.s32.totalorder %s20, 0
        %s292 = scalar_select %p291, %s20, 0
        %s293 = scalar_lea.vmem %s2, %s292
        %s294 = smul.u32 4, %s19
        %p295 = scmp.lt.s32.totalorder %s294, 3
        %s296 = scalar_select %p295, %s294, 3
        %p297 = scmp.lt.s32.totalorder %s20, 0
        %s298 = scalar_select %p297, %s20, 0
        %s299 = sadd.s32 %s298, %s296
        %s300 = smul.addr %s299, 4
        %s301 = scalar_lea.vmem %s3, %s300
        %s302 = smul.u32 4, %s19
        %p304 = scmp.eq.s32.totalorder %s21, 0
        // Predicated region
        $region56: #{vqvae_encoder_forward.7} parent=50 // pred_check
          %p305 = pneg %p304
        $region57: #{vqvae_encoder_forward.7} parent=50 // pred_check_branch
          %307 = sbr.rel (%p305) target = $region59
        $region58: #{vqvae_encoder_forward.7} parent=50 // pred_region
          %308 = vst [vmem:[#allocation2] sm:$0xff] 0.0
          %309 = vst [vmem:[#allocation2 + $0x8] sm:$0xff] 0.0
          %310 = vst [vmem:[#allocation2 + $0x10] sm:$0xff] 0.0
          %311 = vst [vmem:[#allocation2 + $0x18] sm:$0xff] 0.0
        $region59: #{vqvae_encoder_forward.7} parent=50 // pred_fallthru
          _
        %v312 = vld [vmem:[#allocation2] sm:$0xff]
        %v313 = vld [vmem:[#allocation2 + $0x8] sm:$0xff]
        %v314 = vld [vmem:[#allocation2 + $0x10] sm:$0xff]
        %v315 = vld [vmem:[#allocation2 + $0x18] sm:$0xff]
        %v316 = vld [vmem:[%s245] sm:$0xff]
        %v317 = vld [vmem:[%s245 + $0x8] sm:$0xff]
        %v318 = vld [vmem:[%s245 + $0x10] sm:$0xff]
        %v319 = vld [vmem:[%s245 + $0x18] sm:$0xff]
        %v320 = vld [vmem:[%s245 + $0x20] sm:$0xff]
        %v321 = vld [vmem:[%s245 + $0x28] sm:$0xff]
        %v322 = vld [vmem:[%s245 + $0x30] sm:$0xff]
        %v323 = vld [vmem:[%s245 + $0x38] sm:$0xff]
        %v324 = vld [vmem:[%s245 + $0x40] sm:$0xff]
        %v325 = vld [vmem:[%s245 + $0x48] sm:$0xff]
        %v326 = vld [vmem:[%s245 + $0x50] sm:$0xff]
        %v327 = vld [vmem:[%s245 + $0x58] sm:$0xff]
        %v328 = vld [vmem:[%s245 + $0x60] sm:$0xff]
        %v329 = vld [vmem:[%s245 + $0x68] sm:$0xff]
        %v330 = vld [vmem:[%s245 + $0x70] sm:$0xff]
        %v331 = vld [vmem:[%s245 + $0x78] sm:$0xff]
        %v332 = vld [vmem:[%s289] sm:$0xf]
        %v333 = vld [vmem:[%s289 + $0x4] sm:$0xf]
        %v334 = vld [vmem:[%s289 + $0x8] sm:$0xf]
        %v335 = vld [vmem:[%s289 + $0xc] sm:$0xf]
        %v336 = vld [vmem:[%s289 + $0x10] sm:$0xf]
        %v337 = vld [vmem:[%s289 + $0x14] sm:$0xf]
        %v338 = vld [vmem:[%s289 + $0x18] sm:$0xf]
        %v339 = vld [vmem:[%s289 + $0x1c] sm:$0xf]
        %v340 = vld [vmem:[%s289 + $0x20] sm:$0xf]
        %v341 = vld [vmem:[%s289 + $0x24] sm:$0xf]
        %v342 = vld [vmem:[%s289 + $0x28] sm:$0xf]
        %v343 = vld [vmem:[%s289 + $0x2c] sm:$0xf]
        %v344 = vld [vmem:[%s289 + $0x30] sm:$0xf]
        %v345 = vld [vmem:[%s289 + $0x34] sm:$0xf]
        %v346 = vld [vmem:[%s289 + $0x38] sm:$0xf]
        %v347 = vld [vmem:[%s289 + $0x3c] sm:$0xf]
        %v348 = vld [vmem:[%s289 + $0x40] sm:$0xf]
        %v349 = vld [vmem:[%s289 + $0x44] sm:$0xf]
        %v350 = vld [vmem:[%s289 + $0x48] sm:$0xf]
        %v351 = vld [vmem:[%s289 + $0x4c] sm:$0xf]
        %v352 = vld [vmem:[%s289 + $0x50] sm:$0xf]
        %v353 = vld [vmem:[%s289 + $0x54] sm:$0xf]
        %v354 = vld [vmem:[%s289 + $0x58] sm:$0xf]
        %v355 = vld [vmem:[%s289 + $0x5c] sm:$0xf]
        %v356 = vld [vmem:[%s289 + $0x60] sm:$0xf]
        %v357 = vld [vmem:[%s289 + $0x64] sm:$0xf]
        %v358 = vld [vmem:[%s289 + $0x68] sm:$0xf]
        %v359 = vld [vmem:[%s289 + $0x6c] sm:$0xf]
        %v360 = vld [vmem:[%s289 + $0x70] sm:$0xf]
        %v361 = vld [vmem:[%s289 + $0x74] sm:$0xf]
        %v362 = vld [vmem:[%s289 + $0x78] sm:$0xf]
        %v363 = vld [vmem:[%s289 + $0x7c] sm:$0xf]
        %v364 = vld [vmem:[%s289 + $0x80] sm:$0xf]
        %v365 = vld [vmem:[%s289 + $0x84] sm:$0xf]
        %v366 = vld [vmem:[%s289 + $0x88] sm:$0xf]
        %v367 = vld [vmem:[%s289 + $0x8c] sm:$0xf]
        %v368 = vld [vmem:[%s289 + $0x90] sm:$0xf]
        %v369 = vld [vmem:[%s289 + $0x94] sm:$0xf]
        %v370 = vld [vmem:[%s289 + $0x98] sm:$0xf]
        %v371 = vld [vmem:[%s289 + $0x9c] sm:$0xf]
        %v372 = vld [vmem:[%s289 + $0xa0] sm:$0xf]
        %v373 = vld [vmem:[%s289 + $0xa4] sm:$0xf]
        %v374 = vld [vmem:[%s289 + $0xa8] sm:$0xf]
        %v375 = vld [vmem:[%s289 + $0xac] sm:$0xf]
        %v376 = vld [vmem:[%s289 + $0xb0] sm:$0xf]
        %v377 = vld [vmem:[%s289 + $0xb4] sm:$0xf]
        %v378 = vld [vmem:[%s289 + $0xb8] sm:$0xf]
        %v379 = vld [vmem:[%s289 + $0xbc] sm:$0xf]
        %v380 = vld [vmem:[%s289 + $0xc0] sm:$0xf]
        %v381 = vld [vmem:[%s289 + $0xc4] sm:$0xf]
        %v382 = vld [vmem:[%s289 + $0xc8] sm:$0xf]
        %v383 = vld [vmem:[%s289 + $0xcc] sm:$0xf]
        %v384 = vld [vmem:[%s289 + $0xd0] sm:$0xf]
        %v385 = vld [vmem:[%s289 + $0xd4] sm:$0xf]
        %v386 = vld [vmem:[%s289 + $0xd8] sm:$0xf]
        %v387 = vld [vmem:[%s289 + $0xdc] sm:$0xf]
        %v388 = vld [vmem:[%s289 + $0xe0] sm:$0xf]
        %v389 = vld [vmem:[%s289 + $0xe4] sm:$0xf]
        %v390 = vld [vmem:[%s289 + $0xe8] sm:$0xf]
        %v391 = vld [vmem:[%s289 + $0xec] sm:$0xf]
        %v392 = vld [vmem:[%s289 + $0xf0] sm:$0xf]
        %v393 = vld [vmem:[%s289 + $0xf4] sm:$0xf]
        %v394 = vld [vmem:[%s289 + $0xf8] sm:$0xf]
        %v395 = vld [vmem:[%s289 + $0xfc] sm:$0xf]
        %v396 = vld [vmem:[%s289 + $0x100] sm:$0xf]
        %v397 = vld [vmem:[%s289 + $0x104] sm:$0xf]
        %v398 = vld [vmem:[%s289 + $0x108] sm:$0xf]
        %v399 = vld [vmem:[%s289 + $0x10c] sm:$0xf]
        %v400 = vld [vmem:[%s289 + $0x110] sm:$0xf]
        %v401 = vld [vmem:[%s289 + $0x114] sm:$0xf]
        %v402 = vld [vmem:[%s289 + $0x118] sm:$0xf]
        %v403 = vld [vmem:[%s289 + $0x11c] sm:$0xf]
        %v404 = vld [vmem:[%s289 + $0x120] sm:$0xf]
        %v405 = vld [vmem:[%s289 + $0x124] sm:$0xf]
        %v406 = vld [vmem:[%s289 + $0x128] sm:$0xf]
        %v407 = vld [vmem:[%s289 + $0x12c] sm:$0xf]
        %v408 = vld [vmem:[%s289 + $0x130] sm:$0xf]
        %v409 = vld [vmem:[%s289 + $0x134] sm:$0xf]
        %v410 = vld [vmem:[%s289 + $0x138] sm:$0xf]
        %v411 = vld [vmem:[%s289 + $0x13c] sm:$0xf]
        %v412 = vld [vmem:[%s289 + $0x140] sm:$0xf]
        %v413 = vld [vmem:[%s289 + $0x144] sm:$0xf]
        %v414 = vld [vmem:[%s289 + $0x148] sm:$0xf]
        %v415 = vld [vmem:[%s289 + $0x14c] sm:$0xf]
        %v416 = vld [vmem:[%s289 + $0x150] sm:$0xf]
        %v417 = vld [vmem:[%s289 + $0x154] sm:$0xf]
        %v418 = vld [vmem:[%s289 + $0x158] sm:$0xf]
        %v419 = vld [vmem:[%s289 + $0x15c] sm:$0xf]
        %v420 = vld [vmem:[%s289 + $0x160] sm:$0xf]
        %v421 = vld [vmem:[%s289 + $0x164] sm:$0xf]
        %v422 = vld [vmem:[%s289 + $0x168] sm:$0xf]
        %v423 = vld [vmem:[%s289 + $0x16c] sm:$0xf]
        %v424 = vld [vmem:[%s289 + $0x170] sm:$0xf]
        %v425 = vld [vmem:[%s289 + $0x174] sm:$0xf]
        %v426 = vld [vmem:[%s289 + $0x178] sm:$0xf]
        %v427 = vld [vmem:[%s289 + $0x17c] sm:$0xf]
        %v428 = vld [vmem:[%s289 + $0x180] sm:$0xf]
        %v429 = vld [vmem:[%s289 + $0x184] sm:$0xf]
        %v430 = vld [vmem:[%s289 + $0x188] sm:$0xf]
        %v431 = vld [vmem:[%s289 + $0x18c] sm:$0xf]
        %v432 = vld [vmem:[%s289 + $0x190] sm:$0xf]
        %v433 = vld [vmem:[%s289 + $0x194] sm:$0xf]
        %v434 = vld [vmem:[%s289 + $0x198] sm:$0xf]
        %v435 = vld [vmem:[%s289 + $0x19c] sm:$0xf]
        %v436 = vld [vmem:[%s289 + $0x1a0] sm:$0xf]
        %v437 = vld [vmem:[%s289 + $0x1a4] sm:$0xf]
        %v438 = vld [vmem:[%s289 + $0x1a8] sm:$0xf]
        %v439 = vld [vmem:[%s289 + $0x1ac] sm:$0xf]
        %v440 = vld [vmem:[%s289 + $0x1b0] sm:$0xf]
        %v441 = vld [vmem:[%s289 + $0x1b4] sm:$0xf]
        %v442 = vld [vmem:[%s289 + $0x1b8] sm:$0xf]
        %v443 = vld [vmem:[%s289 + $0x1bc] sm:$0xf]
        %v444 = vld [vmem:[%s289 + $0x1c0] sm:$0xf]
        %v445 = vld [vmem:[%s289 + $0x1c4] sm:$0xf]
        %v446 = vld [vmem:[%s289 + $0x1c8] sm:$0xf]
        %v447 = vld [vmem:[%s289 + $0x1cc] sm:$0xf]
        %v448 = vld [vmem:[%s289 + $0x1d0] sm:$0xf]
        %v449 = vld [vmem:[%s289 + $0x1d4] sm:$0xf]
        %v450 = vld [vmem:[%s289 + $0x1d8] sm:$0xf]
        %v451 = vld [vmem:[%s289 + $0x1dc] sm:$0xf]
        %v452 = vld [vmem:[%s289 + $0x1e0] sm:$0xf]
        %v453 = vld [vmem:[%s289 + $0x1e4] sm:$0xf]
        %v454 = vld [vmem:[%s289 + $0x1e8] sm:$0xf]
        %v455 = vld [vmem:[%s289 + $0x1ec] sm:$0xf]
        %v456 = vld [vmem:[%s289 + $0x1f0] sm:$0xf]
        %v457 = vld [vmem:[%s289 + $0x1f4] sm:$0xf]
        %v458 = vld [vmem:[%s289 + $0x1f8] sm:$0xf]
        %v459 = vld [vmem:[%s289 + $0x1fc] sm:$0xf]
        %v476 = vunpack.c.l.b16 %v316
        %v477 = vunpack.c.h.b16 %v316
        %v478 = vunpack.c.l.b16 %v317
        %v479 = vunpack.c.h.b16 %v317
        %v480 = vunpack.c.l.b16 %v318
        %v481 = vunpack.c.h.b16 %v318
        %v482 = vunpack.c.l.b16 %v319
        %v483 = vunpack.c.h.b16 %v319
        %v484 = vunpack.c.l.b16 %v320
        %v485 = vunpack.c.h.b16 %v320
        %v486 = vunpack.c.l.b16 %v321
        %v487 = vunpack.c.h.b16 %v321
        %v488 = vunpack.c.l.b16 %v322
        %v489 = vunpack.c.h.b16 %v322
        %v490 = vunpack.c.l.b16 %v323
        %v491 = vunpack.c.h.b16 %v323
        %v492 = vunpack.c.l.b16 %v324
        %v493 = vunpack.c.h.b16 %v324
        %v494 = vunpack.c.l.b16 %v325
        %v495 = vunpack.c.h.b16 %v325
        %v496 = vunpack.c.l.b16 %v326
        %v497 = vunpack.c.h.b16 %v326
        %v498 = vunpack.c.l.b16 %v327
        %v499 = vunpack.c.h.b16 %v327
        %v500 = vunpack.c.l.b16 %v328
        %v501 = vunpack.c.h.b16 %v328
        %v502 = vunpack.c.l.b16 %v329
        %v503 = vunpack.c.h.b16 %v329
        %v504 = vunpack.c.l.b16 %v330
        %v505 = vunpack.c.h.b16 %v330
        %v506 = vunpack.c.l.b16 %v331
        %v507 = vunpack.c.h.b16 %v331
        %v508 = vpack.c.b16 %v484, %v476
        %v509 = vpack.c.b16 %v485, %v477
        %v510 = vpack.c.b16 %v486, %v478
        %v511 = vpack.c.b16 %v487, %v479
        %v512 = vpack.c.b16 %v488, %v480
        %v513 = vpack.c.b16 %v489, %v481
        %v514 = vpack.c.b16 %v490, %v482
        %v515 = vpack.c.b16 %v491, %v483
        %v516 = vpack.c.b16 %v500, %v492
        %v517 = vpack.c.b16 %v501, %v493
        %v518 = vpack.c.b16 %v502, %v494
        %v519 = vpack.c.b16 %v503, %v495
        %v520 = vpack.c.b16 %v504, %v496
        %v521 = vpack.c.b16 %v505, %v497
        %v522 = vpack.c.b16 %v506, %v498
        %v523 = vpack.c.b16 %v507, %v499
        %v668 = vunpack.c.l.b16 %v332
        %v669 = vunpack.c.l.b16 %v333
        %v670 = vunpack.c.l.b16 %v334
        %v671 = vunpack.c.l.b16 %v335
        %v672 = vunpack.c.l.b16 %v336
        %v673 = vunpack.c.l.b16 %v337
        %v674 = vunpack.c.l.b16 %v338
        %v675 = vunpack.c.l.b16 %v339
        %v676 = vunpack.c.l.b16 %v340
        %v677 = vunpack.c.l.b16 %v341
        %v678 = vunpack.c.l.b16 %v342
        %v679 = vunpack.c.l.b16 %v343
        %v680 = vunpack.c.l.b16 %v344
        %v681 = vunpack.c.l.b16 %v345
        %v682 = vunpack.c.l.b16 %v346
        %v683 = vunpack.c.l.b16 %v347
        %v684 = vunpack.c.l.b16 %v348
        %v685 = vunpack.c.l.b16 %v349
        %v686 = vunpack.c.l.b16 %v350
        %v687 = vunpack.c.l.b16 %v351
        %v688 = vunpack.c.l.b16 %v352
        %v689 = vunpack.c.l.b16 %v353
        %v690 = vunpack.c.l.b16 %v354
        %v691 = vunpack.c.l.b16 %v355
        %v692 = vunpack.c.l.b16 %v356
        %v693 = vunpack.c.l.b16 %v357
        %v694 = vunpack.c.l.b16 %v358
        %v695 = vunpack.c.l.b16 %v359
        %v696 = vunpack.c.l.b16 %v360
        %v697 = vunpack.c.l.b16 %v361
        %v698 = vunpack.c.l.b16 %v362
        %v699 = vunpack.c.l.b16 %v363
        %v700 = vunpack.c.l.b16 %v364
        %v701 = vunpack.c.l.b16 %v365
        %v702 = vunpack.c.l.b16 %v366
        %v703 = vunpack.c.l.b16 %v367
        %v704 = vunpack.c.l.b16 %v368
        %v705 = vunpack.c.l.b16 %v369
        %v706 = vunpack.c.l.b16 %v370
        %v707 = vunpack.c.l.b16 %v371
        %v708 = vunpack.c.l.b16 %v372
        %v709 = vunpack.c.l.b16 %v373
        %v710 = vunpack.c.l.b16 %v374
        %v711 = vunpack.c.l.b16 %v375
        %v712 = vunpack.c.l.b16 %v376
        %v713 = vunpack.c.l.b16 %v377
        %v714 = vunpack.c.l.b16 %v378
        %v715 = vunpack.c.l.b16 %v379
        %v716 = vunpack.c.l.b16 %v380
        %v717 = vunpack.c.l.b16 %v381
        %v718 = vunpack.c.l.b16 %v382
        %v719 = vunpack.c.l.b16 %v383
        %v720 = vunpack.c.l.b16 %v384
        %v721 = vunpack.c.l.b16 %v385
        %v722 = vunpack.c.l.b16 %v386
        %v723 = vunpack.c.l.b16 %v387
        %v724 = vunpack.c.l.b16 %v388
        %v725 = vunpack.c.l.b16 %v389
        %v726 = vunpack.c.l.b16 %v390
        %v727 = vunpack.c.l.b16 %v391
        %v728 = vunpack.c.l.b16 %v392
        %v729 = vunpack.c.l.b16 %v393
        %v730 = vunpack.c.l.b16 %v394
        %v731 = vunpack.c.l.b16 %v395
        %v732 = vunpack.c.l.b16 %v396
        %v733 = vunpack.c.l.b16 %v397
        %v734 = vunpack.c.l.b16 %v398
        %v735 = vunpack.c.l.b16 %v399
        %v736 = vunpack.c.l.b16 %v400
        %v737 = vunpack.c.l.b16 %v401
        %v738 = vunpack.c.l.b16 %v402
        %v739 = vunpack.c.l.b16 %v403
        %v740 = vunpack.c.l.b16 %v404
        %v741 = vunpack.c.l.b16 %v405
        %v742 = vunpack.c.l.b16 %v406
        %v743 = vunpack.c.l.b16 %v407
        %v744 = vunpack.c.l.b16 %v408
        %v745 = vunpack.c.l.b16 %v409
        %v746 = vunpack.c.l.b16 %v410
        %v747 = vunpack.c.l.b16 %v411
        %v748 = vunpack.c.l.b16 %v412
        %v749 = vunpack.c.l.b16 %v413
        %v750 = vunpack.c.l.b16 %v414
        %v751 = vunpack.c.l.b16 %v415
        %v752 = vunpack.c.l.b16 %v416
        %v753 = vunpack.c.l.b16 %v417
        %v754 = vunpack.c.l.b16 %v418
        %v755 = vunpack.c.l.b16 %v419
        %v756 = vunpack.c.l.b16 %v420
        %v757 = vunpack.c.l.b16 %v421
        %v758 = vunpack.c.l.b16 %v422
        %v759 = vunpack.c.l.b16 %v423
        %v760 = vunpack.c.l.b16 %v424
        %v761 = vunpack.c.l.b16 %v425
        %v762 = vunpack.c.l.b16 %v426
        %v763 = vunpack.c.l.b16 %v427
        %v764 = vunpack.c.l.b16 %v428
        %v765 = vunpack.c.l.b16 %v429
        %v766 = vunpack.c.l.b16 %v430
        %v767 = vunpack.c.l.b16 %v431
        %v768 = vunpack.c.l.b16 %v432
        %v769 = vunpack.c.l.b16 %v433
        %v770 = vunpack.c.l.b16 %v434
        %v771 = vunpack.c.l.b16 %v435
        %v772 = vunpack.c.l.b16 %v436
        %v773 = vunpack.c.l.b16 %v437
        %v774 = vunpack.c.l.b16 %v438
        %v775 = vunpack.c.l.b16 %v439
        %v776 = vunpack.c.l.b16 %v440
        %v777 = vunpack.c.l.b16 %v441
        %v778 = vunpack.c.l.b16 %v442
        %v779 = vunpack.c.l.b16 %v443
        %v780 = vunpack.c.l.b16 %v444
        %v781 = vunpack.c.l.b16 %v445
        %v782 = vunpack.c.l.b16 %v446
        %v783 = vunpack.c.l.b16 %v447
        %v784 = vunpack.c.l.b16 %v448
        %v785 = vunpack.c.l.b16 %v449
        %v786 = vunpack.c.l.b16 %v450
        %v787 = vunpack.c.l.b16 %v451
        %v788 = vunpack.c.l.b16 %v452
        %v789 = vunpack.c.l.b16 %v453
        %v790 = vunpack.c.l.b16 %v454
        %v791 = vunpack.c.l.b16 %v455
        %v792 = vunpack.c.l.b16 %v456
        %v793 = vunpack.c.l.b16 %v457
        %v794 = vunpack.c.l.b16 %v458
        %v795 = vunpack.c.l.b16 %v459
        %v796 = vpack.c.b16 %v669, %v668
        %v797 = vpack.c.b16 %v671, %v670
        %v798 = vpack.c.b16 %v673, %v672
        %v799 = vpack.c.b16 %v675, %v674
        %v800 = vpack.c.b16 %v677, %v676
        %v801 = vpack.c.b16 %v679, %v678
        %v802 = vpack.c.b16 %v681, %v680
        %v803 = vpack.c.b16 %v683, %v682
        %v804 = vpack.c.b16 %v685, %v684
        %v805 = vpack.c.b16 %v687, %v686
        %v806 = vpack.c.b16 %v689, %v688
        %v807 = vpack.c.b16 %v691, %v690
        %v808 = vpack.c.b16 %v693, %v692
        %v809 = vpack.c.b16 %v695, %v694
        %v810 = vpack.c.b16 %v697, %v696
        %v811 = vpack.c.b16 %v699, %v698
        %v812 = vpack.c.b16 %v701, %v700
        %v813 = vpack.c.b16 %v703, %v702
        %v814 = vpack.c.b16 %v705, %v704
        %v815 = vpack.c.b16 %v707, %v706
        %v816 = vpack.c.b16 %v709, %v708
        %v817 = vpack.c.b16 %v711, %v710
        %v818 = vpack.c.b16 %v713, %v712
        %v819 = vpack.c.b16 %v715, %v714
        %v820 = vpack.c.b16 %v717, %v716
        %v821 = vpack.c.b16 %v719, %v718
        %v822 = vpack.c.b16 %v721, %v720
        %v823 = vpack.c.b16 %v723, %v722
        %v824 = vpack.c.b16 %v725, %v724
        %v825 = vpack.c.b16 %v727, %v726
        %v826 = vpack.c.b16 %v729, %v728
        %v827 = vpack.c.b16 %v731, %v730
        %v828 = vpack.c.b16 %v733, %v732
        %v829 = vpack.c.b16 %v735, %v734
        %v830 = vpack.c.b16 %v737, %v736
        %v831 = vpack.c.b16 %v739, %v738
        %v832 = vpack.c.b16 %v741, %v740
        %v833 = vpack.c.b16 %v743, %v742
        %v834 = vpack.c.b16 %v745, %v744
        %v835 = vpack.c.b16 %v747, %v746
        %v836 = vpack.c.b16 %v749, %v748
        %v837 = vpack.c.b16 %v751, %v750
        %v838 = vpack.c.b16 %v753, %v752
        %v839 = vpack.c.b16 %v755, %v754
        %v840 = vpack.c.b16 %v757, %v756
        %v841 = vpack.c.b16 %v759, %v758
        %v842 = vpack.c.b16 %v761, %v760
        %v843 = vpack.c.b16 %v763, %v762
        %v844 = vpack.c.b16 %v765, %v764
        %v845 = vpack.c.b16 %v767, %v766
        %v846 = vpack.c.b16 %v769, %v768
        %v847 = vpack.c.b16 %v771, %v770
        %v848 = vpack.c.b16 %v773, %v772
        %v849 = vpack.c.b16 %v775, %v774
        %v850 = vpack.c.b16 %v777, %v776
        %v851 = vpack.c.b16 %v779, %v778
        %v852 = vpack.c.b16 %v781, %v780
        %v853 = vpack.c.b16 %v783, %v782
        %v854 = vpack.c.b16 %v785, %v784
        %v855 = vpack.c.b16 %v787, %v786
        %v856 = vpack.c.b16 %v789, %v788
        %v857 = vpack.c.b16 %v791, %v790
        %v858 = vpack.c.b16 %v793, %v792
        %v859 = vpack.c.b16 %v795, %v794
        %924 = vmatprep.subr.bf16.mxu0 0
        %925 = vmatpush1.bf16.msra.mxu0 %v803
        %926 = vmatprep.subr.bf16.mxu0 0
        %927 = vmatpush1.bf16.msra.mxu0 %v802
        %928 = vmatprep.subr.bf16.mxu0 0
        %929 = vmatpush1.bf16.msra.mxu0 %v801
        %930 = vmatprep.subr.bf16.mxu0 0
        %931 = vmatpush1.bf16.msra.mxu0 %v800
        %932 = vmatprep.subr.bf16.mxu0 0
        %933 = vmatpush1.bf16.msra.mxu0 %v799
        %934 = vmatprep.subr.bf16.mxu0 0
        %935 = vmatpush1.bf16.msra.mxu0 %v798
        %936 = vmatprep.subr.bf16.mxu0 0
        %937 = vmatpush1.bf16.msra.mxu0 %v797
        %938 = vmatprep.subr.bf16.mxu0 0
        %939 = vmatpush1.bf16.msra.mxu0 %v796
        %940 = vmatprep.subr.bf16.mxu0 0
        %941 = vmatpush2.bf16.msra.mxu0 %v811
        %942 = vmatprep.subr.bf16.mxu0 0
        %943 = vmatpush2.bf16.msra.mxu0 %v810
        %944 = vmatprep.subr.bf16.mxu0 0
        %945 = vmatpush2.bf16.msra.mxu0 %v809
        %946 = vmatprep.subr.bf16.mxu0 0
        %947 = vmatpush2.bf16.msra.mxu0 %v808
        %948 = vmatprep.subr.bf16.mxu0 0
        %949 = vmatpush2.bf16.msra.mxu0 %v807
        %950 = vmatprep.subr.bf16.mxu0 0
        %951 = vmatpush2.bf16.msra.mxu0 %v806
        %952 = vmatprep.subr.bf16.mxu0 0
        %953 = vmatpush2.bf16.msra.mxu0 %v805
        %954 = vmatprep.subr.bf16.mxu0 0
        %955 = vmatpush2.bf16.msra.mxu0 %v804
        %956 = vmatprep.mubr.bf16.mxu0 %v509
        %957 = vmatmul.mubr.bf16.gmra.mxu0 %v508
        %v958 = vpop.f32.mrf.mxu0
        %v959 = vadd.f32 0.0, %v958
        %v960 = vpop.f32.mrf.mxu0
        %v961 = vpop.f32.mrf.mxu0
        %v962 = vadd.f32 0.0, %v961
        %v963 = vpop.f32.mrf.mxu0
        %964 = vmatprep.mubr.bf16.mxu0 %v517
        %965 = vmatmul.mubr.bf16.gmra.mxu0 %v516
        %v966 = vpop.f32.mrf.mxu0
        %v967 = vadd.f32 0.0, %v966
        %v968 = vpop.f32.mrf.mxu0
        %v969 = vpop.f32.mrf.mxu0
        %v970 = vadd.f32 0.0, %v969
        %v971 = vpop.f32.mrf.mxu0
        %972 = vdwg.mxu0
        %973 = vmatprep.subr.bf16.mxu0 0
        %974 = vmatpush1.bf16.msra.mxu0 %v819
        %975 = vmatprep.subr.bf16.mxu0 0
        %976 = vmatpush1.bf16.msra.mxu0 %v818
        %977 = vmatprep.subr.bf16.mxu0 0
        %978 = vmatpush1.bf16.msra.mxu0 %v817
        %979 = vmatprep.subr.bf16.mxu0 0
        %980 = vmatpush1.bf16.msra.mxu0 %v816
        %981 = vmatprep.subr.bf16.mxu0 0
        %982 = vmatpush1.bf16.msra.mxu0 %v815
        %983 = vmatprep.subr.bf16.mxu0 0
        %984 = vmatpush1.bf16.msra.mxu0 %v814
        %985 = vmatprep.subr.bf16.mxu0 0
        %986 = vmatpush1.bf16.msra.mxu0 %v813
        %987 = vmatprep.subr.bf16.mxu0 0
        %988 = vmatpush1.bf16.msra.mxu0 %v812
        %989 = vmatprep.subr.bf16.mxu0 0
        %990 = vmatpush2.bf16.msra.mxu0 %v827
        %991 = vmatprep.subr.bf16.mxu0 0
        %992 = vmatpush2.bf16.msra.mxu0 %v826
        %993 = vmatprep.subr.bf16.mxu0 0
        %994 = vmatpush2.bf16.msra.mxu0 %v825
        %995 = vmatprep.subr.bf16.mxu0 0
        %996 = vmatpush2.bf16.msra.mxu0 %v824
        %997 = vmatprep.subr.bf16.mxu0 0
        %998 = vmatpush2.bf16.msra.mxu0 %v823
        %999 = vmatprep.subr.bf16.mxu0 0
        %1000 = vmatpush2.bf16.msra.mxu0 %v822
        %1001 = vmatprep.subr.bf16.mxu0 0
        %1002 = vmatpush2.bf16.msra.mxu0 %v821
        %1003 = vmatprep.subr.bf16.mxu0 0
        %1004 = vmatpush2.bf16.msra.mxu0 %v820
        %1005 = vmatprep.mubr.bf16.mxu0 %v511
        %1006 = vmatmul.mubr.bf16.gmra.mxu0 %v510
        %v1007 = vpop.f32.mrf.mxu0
        %v1008 = vadd.f32 %v959, %v1007
        %v1009 = vpop.f32.mrf.mxu0
        %v1010 = vpop.f32.mrf.mxu0
        %v1011 = vadd.f32 %v962, %v1010
        %v1012 = vpop.f32.mrf.mxu0
        %1013 = vmatprep.mubr.bf16.mxu0 %v519
        %1014 = vmatmul.mubr.bf16.gmra.mxu0 %v518
        %v1015 = vpop.f32.mrf.mxu0
        %v1016 = vadd.f32 %v967, %v1015
        %v1017 = vpop.f32.mrf.mxu0
        %v1018 = vpop.f32.mrf.mxu0
        %v1019 = vadd.f32 %v970, %v1018
        %v1020 = vpop.f32.mrf.mxu0
        %1021 = vdwg.mxu0
        %1022 = vmatprep.subr.bf16.mxu0 0
        %1023 = vmatpush1.bf16.msra.mxu0 %v835
        %1024 = vmatprep.subr.bf16.mxu0 0
        %1025 = vmatpush1.bf16.msra.mxu0 %v834
        %1026 = vmatprep.subr.bf16.mxu0 0
        %1027 = vmatpush1.bf16.msra.mxu0 %v833
        %1028 = vmatprep.subr.bf16.mxu0 0
        %1029 = vmatpush1.bf16.msra.mxu0 %v832
        %1030 = vmatprep.subr.bf16.mxu0 0
        %1031 = vmatpush1.bf16.msra.mxu0 %v831
        %1032 = vmatprep.subr.bf16.mxu0 0
        %1033 = vmatpush1.bf16.msra.mxu0 %v830
        %1034 = vmatprep.subr.bf16.mxu0 0
        %1035 = vmatpush1.bf16.msra.mxu0 %v829
        %1036 = vmatprep.subr.bf16.mxu0 0
        %1037 = vmatpush1.bf16.msra.mxu0 %v828
        %1038 = vmatprep.subr.bf16.mxu0 0
        %1039 = vmatpush2.bf16.msra.mxu0 %v843
        %1040 = vmatprep.subr.bf16.mxu0 0
        %1041 = vmatpush2.bf16.msra.mxu0 %v842
        %1042 = vmatprep.subr.bf16.mxu0 0
        %1043 = vmatpush2.bf16.msra.mxu0 %v841
        %1044 = vmatprep.subr.bf16.mxu0 0
        %1045 = vmatpush2.bf16.msra.mxu0 %v840
        %1046 = vmatprep.subr.bf16.mxu0 0
        %1047 = vmatpush2.bf16.msra.mxu0 %v839
        %1048 = vmatprep.subr.bf16.mxu0 0
        %1049 = vmatpush2.bf16.msra.mxu0 %v838
        %1050 = vmatprep.subr.bf16.mxu0 0
        %1051 = vmatpush2.bf16.msra.mxu0 %v837
        %1052 = vmatprep.subr.bf16.mxu0 0
        %1053 = vmatpush2.bf16.msra.mxu0 %v836
        %1054 = vmatprep.mubr.bf16.mxu0 %v513
        %1055 = vmatmul.mubr.bf16.gmra.mxu0 %v512
        %v1056 = vpop.f32.mrf.mxu0
        %v1057 = vadd.f32 %v1008, %v1056
        %v1058 = vpop.f32.mrf.mxu0
        %v1059 = vpop.f32.mrf.mxu0
        %v1060 = vadd.f32 %v1011, %v1059
        %v1061 = vpop.f32.mrf.mxu0
        %1062 = vmatprep.mubr.bf16.mxu0 %v521
        %1063 = vmatmul.mubr.bf16.gmra.mxu0 %v520
        %v1064 = vpop.f32.mrf.mxu0
        %v1065 = vadd.f32 %v1016, %v1064
        %v1066 = vpop.f32.mrf.mxu0
        %v1067 = vpop.f32.mrf.mxu0
        %v1068 = vadd.f32 %v1019, %v1067
        %v1069 = vpop.f32.mrf.mxu0
        %1070 = vdwg.mxu0
        %1071 = vmatprep.subr.bf16.mxu0 0
        %1072 = vmatpush1.bf16.msra.mxu0 %v851
        %1073 = vmatprep.subr.bf16.mxu0 0
        %1074 = vmatpush1.bf16.msra.mxu0 %v850
        %1075 = vmatprep.subr.bf16.mxu0 0
        %1076 = vmatpush1.bf16.msra.mxu0 %v849
        %1077 = vmatprep.subr.bf16.mxu0 0
        %1078 = vmatpush1.bf16.msra.mxu0 %v848
        %1079 = vmatprep.subr.bf16.mxu0 0
        %1080 = vmatpush1.bf16.msra.mxu0 %v847
        %1081 = vmatprep.subr.bf16.mxu0 0
        %1082 = vmatpush1.bf16.msra.mxu0 %v846
        %1083 = vmatprep.subr.bf16.mxu0 0
        %1084 = vmatpush1.bf16.msra.mxu0 %v845
        %1085 = vmatprep.subr.bf16.mxu0 0
        %1086 = vmatpush1.bf16.msra.mxu0 %v844
        %1087 = vmatprep.subr.bf16.mxu0 0
        %1088 = vmatpush2.bf16.msra.mxu0 %v859
        %1089 = vmatprep.subr.bf16.mxu0 0
        %1090 = vmatpush2.bf16.msra.mxu0 %v858
        %1091 = vmatprep.subr.bf16.mxu0 0
        %1092 = vmatpush2.bf16.msra.mxu0 %v857
        %1093 = vmatprep.subr.bf16.mxu0 0
        %1094 = vmatpush2.bf16.msra.mxu0 %v856
        %1095 = vmatprep.subr.bf16.mxu0 0
        %1096 = vmatpush2.bf16.msra.mxu0 %v855
        %1097 = vmatprep.subr.bf16.mxu0 0
        %1098 = vmatpush2.bf16.msra.mxu0 %v854
        %1099 = vmatprep.subr.bf16.mxu0 0
        %1100 = vmatpush2.bf16.msra.mxu0 %v853
        %1101 = vmatprep.subr.bf16.mxu0 0
        %1102 = vmatpush2.bf16.msra.mxu0 %v852
        %1103 = vmatprep.mubr.bf16.mxu0 %v515
        %1104 = vmatmul.mubr.bf16.gmra.mxu0 %v514
        %v1105 = vpop.f32.mrf.mxu0
        %v1106 = vadd.f32 %v1057, %v1105
        %v1107 = vpop.f32.mrf.mxu0
        %v1108 = vpop.f32.mrf.mxu0
        %v1109 = vadd.f32 %v1060, %v1108
        %v1110 = vpop.f32.mrf.mxu0
        %1111 = vmatprep.mubr.bf16.mxu0 %v523
        %1112 = vmatmul.mubr.bf16.gmra.mxu0 %v522
        %v1113 = vpop.f32.mrf.mxu0
        %v1114 = vadd.f32 %v1065, %v1113
        %v1115 = vpop.f32.mrf.mxu0
        %v1116 = vpop.f32.mrf.mxu0
        %v1117 = vadd.f32 %v1068, %v1116
        %v1118 = vpop.f32.mrf.mxu0
        %1119 = vdwg.mxu0
        %v1120 = vadd.f32 %v312, %v1106
        %v1121 = vadd.f32 %v313, %v1109
        %v1122 = vadd.f32 %v314, %v1114
        %v1123 = vadd.f32 %v315, %v1117
        %1124 = vst [vmem:[#allocation2] sm:$0xff] %v1120
        %1125 = vst [vmem:[#allocation2 + $0x8] sm:$0xff] %v1121
        %1126 = vst [vmem:[#allocation2 + $0x10] sm:$0xff] %v1122
        %1127 = vst [vmem:[#allocation2 + $0x18] sm:$0xff] %v1123
        %p1128 = scmp.eq.s32.totalorder %s21, 1
        // Predicated region
        $region60: #{vqvae_encoder_forward.7} parent=50 // pred_check
          %p1129 = pneg %p1128
        $region61: #{vqvae_encoder_forward.7} parent=50 // pred_check_branch
          %1131 = sbr.rel (%p1129) target = $region63
        $region62: #{vqvae_encoder_forward.7} parent=50 // pred_region
          %v1132 = vld [vmem:[#allocation2] sm:$0xff]
          %v1133 = vld [vmem:[#allocation2 + $0x8] sm:$0xff]
          %v1134 = vld [vmem:[#allocation2 + $0x10] sm:$0xff]
          %v1135 = vld [vmem:[#allocation2 + $0x18] sm:$0xff]
          %v1136 = vld [vmem:[%s293] sm:$0x1]
          %v1138 = vlaneseq
          %v1139 = vshrl.u32 %v1138, 7
          %v1140 = vsub.s32 0, %v1139
          %v1141 = vrot.slane %v1136, %v1140
          %v1143 = vadd.f32 %v1132, %v1141
          %v1144 = vadd.f32 %v1133, %v1141
          %v1145 = vadd.f32 %v1134, %v1141
          %v1146 = vadd.f32 %v1135, %v1141
          %v1147 = vmul.f32 %v1143, 1.702
          %v1148 = vmul.f32 %v1144, 1.702
          %v1149 = vmul.f32 %v1145, 1.702
          %v1150 = vmul.f32 %v1146, 1.702
          %v1151 = vxor.u32 %v1147, 2147483648
          %v1152 = vxor.u32 %v1148, 2147483648
          %v1153 = vxor.u32 %v1149, 2147483648
          %v1154 = vxor.u32 %v1150, 2147483648
          %v1155 = vmul.f32 %v1151, 1.442695
          %v1156 = vpow.pop %v1155
          %v1157 = vmul.f32 %v1152, 1.442695
          %v1158 = vpow.pop %v1157
          %v1159 = vmul.f32 %v1153, 1.442695
          %v1160 = vpow.pop %v1159
          %v1161 = vmul.f32 %v1154, 1.442695
          %v1162 = vpow.pop %v1161
          %v1163 = vadd.f32 %v1156, 1.0
          %v1164 = vadd.f32 %v1158, 1.0
          %v1165 = vadd.f32 %v1160, 1.0
          %v1166 = vadd.f32 %v1162, 1.0
          %v1167 = vrcp.pop %v1163
          %v1168 = vmul.f32 1.0, %v1167
          %v1169 = vrcp.pop %v1164
          %v1170 = vmul.f32 1.0, %v1169
          %v1171 = vrcp.pop %v1165
          %v1172 = vmul.f32 1.0, %v1171
          %v1173 = vrcp.pop %v1166
          %v1174 = vmul.f32 1.0, %v1173
          %v1175 = vmul.f32 %v1143, %v1168
          %v1176 = vmul.f32 %v1144, %v1170
          %v1177 = vmul.f32 %v1145, %v1172
          %v1178 = vmul.f32 %v1146, %v1174
          %v1179 = vpack.c.bf16 %v1176, %v1175
          %v1180 = vpack.c.bf16 %v1178, %v1177
          %v1183 = vunpack.c.l.b16 %v1179
          %v1184 = vunpack.c.h.b16 %v1179
          %v1185 = vunpack.c.l.b16 %v1180
          %v1186 = vunpack.c.h.b16 %v1180
          %v1187 = vpack.c.b16 %v1183, %v1183
          %v1188 = vpack.c.b16 %v1184, %v1184
          %v1189 = vpack.c.b16 %v1185, %v1185
          %v1190 = vpack.c.b16 %v1186, %v1186
          %1195 = vst [vmem:[%s301] sm:$0xf] %v1187
          %1196 = vst [vmem:[%s301 + $0x4] sm:$0xf] %v1188
          %1197 = vst [vmem:[%s301 + $0x8] sm:$0xf] %v1189
          %1198 = vst [vmem:[%s301 + $0xc] sm:$0xf] %v1190
        $region63: #{vqvae_encoder_forward.7} parent=50 // pred_fallthru
          _
        %s1199 = smul.u32 4, %s19
        %p1200 = scmp.lt.s32.totalorder %s1199, 3
        %s1201 = scalar_select %p1200, %s1199, 3
        %p1202 = scmp.lt.s32.totalorder %s20, 0
        %s1203 = scalar_select %p1202, %s20, 0
        %s1204 = sadd.s32 %s1203, %s1201
        %s1205 = smul.addr %s1204, 4
        %s1206 = scalar_lea.vmem %s3, %s1205
        // Predicated region
        $region64: #{vqvae_encoder_forward.7} parent=50 // pred_check
          %p1207 = pneg %p135
        $region65: #{vqvae_encoder_forward.7} parent=50 // pred_check_branch
          %1209 = sbr.rel (%p1207) target = $region67
        $region66: #{vqvae_encoder_forward.7} parent=50 // pred_region
          %s1210 = smul.u32 4, %s19
        $region67: #{vqvae_encoder_forward.7} parent=50 // pred_fallthru
          _
        // Predicated region
        $region68: #{vqvae_encoder_forward.7} parent=50 // pred_check
          %p1211 = pneg %p135
        $region69: #{vqvae_encoder_forward.7} parent=50 // pred_check_branch
          %1213 = sbr.rel (%p1211) target = $region71
        $region70: #{vqvae_encoder_forward.7} parent=50 // pred_region
          %s1214 = smul.u32 4, %s19
          %p1215 = scmp.lt.s32.totalorder %s1214, 3
          %s1216 = scalar_select %p1215, %s1214, 3
          %p1217 = scmp.lt.s32.totalorder %s20, 0
          %s1218 = scalar_select %p1217, %s20, 0
          %s1219 = sadd.s32 %s1218, %s1216
          %s1220 = smul.addr %s1219, 4
          %s1221 = scalar_lea.vmem %s3, %s1220
        $region71: #{vqvae_encoder_forward.7} parent=50 // pred_fallthru
          _
      $region51: #{vqvae_encoder_forward.7} parent=5 // pred_fallthru
        _
      %p1222 = scmp.le.s32.totalorder 2, %s9
      // Predicated region
      $region72: #{vqvae_encoder_forward.7} parent=5 // pred_check
        %p1223 = pneg %p1222
      $region73: #{vqvae_encoder_forward.7} parent=5 // pred_check_branch
        %1225 = sbr.rel (%p1223) target = $region75
      $region74: #{vqvae_encoder_forward.7} parent=5 // pred_region
        %s1226 = ssub.s32 %s9, 2
      $region75: #{vqvae_encoder_forward.7} parent=5 // pred_fallthru
        _
    $region6: #{vqvae_encoder_forward.7} parent=1 // loop_footer
      %s13 = sadd.s32 1, %s9
    $region7: #{vqvae_encoder_forward.7} parent=1 // loop_footer_branch
      %8 = sbr.rel target = $region3
    $region8: #{vqvae_encoder_forward.7} parent=1 // loop_exit
      _

// kernel: vqvae_encoder_forward.9
$region0: #{vqvae_encoder_forward.9}
  #allocation0 [shape = 'u32[]', space=smem, size = 0x4, offset = 0x4, fixed_abs, tag = 'smem constant byte address 0x4 - core index']
  #allocation1 [shape = 'u32[144,128]{1,0:T(1,128)}', space=vmem, size = 0x12000, scoped, tag = 'internal scratch']
  #allocation2 [shape = 'f32[32,128]{1,0:T(8,128)}', space=vmem, size = 0x4000, scoped, tag = 'scratch operand']
  %s0 = inlined_call_operand.vmem [shape: bf16[32,128], index: 0, kind: input, shape index: {}]
  %s1 = inlined_call_operand.vmem [shape: bf16[128,128], index: 1, kind: input, shape index: {}]
  %s2 = inlined_call_operand.vmem [shape: f32[1,128], index: 2, kind: input, shape index: {}]
  %s3 = inlined_call_operand.hbm [shape: f32[32,128], index: 3, kind: output, shape index: {}]
  %s4 = sld [smem:[#allocation0]]
  $region30: #{vqvae_encoder_forward.9} parent=0
    _
  %s6 = ssub.s32 1, %s4
  %s7 = scalar_select 0, %s6, %s4
  $region1: #{vqvae_encoder_forward.9} parent=0
    #allocation3 [shape = 'u8[16384]{0}', space=vmem, size = 0x4000, scoped, tag = 'output window, operand 0, single buffered']
    #allocation4 [shape = 's32[1]{0}', space=sflag, size = 0x4, scoped, tag = 'scoped memory for vqvae_encoder_forward.9']
    %8 = vsyncpa [#allocation4], 0
    // Predicated region
    $region2: #{vqvae_encoder_forward.9} parent=1 // pred_check
      _
    $region3: #{vqvae_encoder_forward.9} parent=1 // pred_check_branch
      %10 = sbr.rel (0) target = $region5
    $region4: #{vqvae_encoder_forward.9} parent=1 // pred_region
      _
    $region5: #{vqvae_encoder_forward.9} parent=1 // pred_fallthru
      _
    // Predicated region
    $region6: #{vqvae_encoder_forward.9} parent=1 // pred_check
      _
    $region7: #{vqvae_encoder_forward.9} parent=1 // pred_check_branch
      %12 = sbr.rel (0) target = $region9
    $region8: #{vqvae_encoder_forward.9} parent=1 // pred_region
      _
    $region9: #{vqvae_encoder_forward.9} parent=1 // pred_fallthru
      _
    // Predicated region
    $region10: #{vqvae_encoder_forward.9} parent=1 // pred_check
      _
    $region11: #{vqvae_encoder_forward.9} parent=1 // pred_check_branch
      %14 = sbr.rel (0) target = $region13
    $region12: #{vqvae_encoder_forward.9} parent=1 // pred_region
      _
    $region13: #{vqvae_encoder_forward.9} parent=1 // pred_fallthru
      _
    %p16 = scmp.eq.s32.totalorder 0, 0
    // Predicated region
    $region14: #{vqvae_encoder_forward.9} parent=1 // pred_check
      %p17 = pneg %p16
    $region15: #{vqvae_encoder_forward.9} parent=1 // pred_check_branch
      %19 = sbr.rel (%p17) target = $region17
    $region16: #{vqvae_encoder_forward.9} parent=1 // pred_region
      %20 = vst [vmem:[#allocation2] sm:$0xff] 0.0
      %21 = vst [vmem:[#allocation2 + $0x8] sm:$0xff] 0.0
      %22 = vst [vmem:[#allocation2 + $0x10] sm:$0xff] 0.0
      %23 = vst [vmem:[#allocation2 + $0x18] sm:$0xff] 0.0
    $region17: #{vqvae_encoder_forward.9} parent=1 // pred_fallthru
      _
    %v24 = vld [vmem:[#allocation2] sm:$0xff]
    %v25 = vld [vmem:[#allocation2 + $0x8] sm:$0xff]
    %v26 = vld [vmem:[#allocation2 + $0x10] sm:$0xff]
    %v27 = vld [vmem:[#allocation2 + $0x18] sm:$0xff]
    %v28 = vld [vmem:[%s0] sm:$0xf]
    %v29 = vld [vmem:[%s0 + $0x4] sm:$0xf]
    %v30 = vld [vmem:[%s0 + $0x8] sm:$0xf]
    %v31 = vld [vmem:[%s0 + $0xc] sm:$0xf]
    %v32 = vld [vmem:[%s1] sm:$0xf]
    %v33 = vld [vmem:[%s1 + $0x4] sm:$0xf]
    %v34 = vld [vmem:[%s1 + $0x8] sm:$0xf]
    %v35 = vld [vmem:[%s1 + $0xc] sm:$0xf]
    %v36 = vld [vmem:[%s1 + $0x10] sm:$0xf]
    %v37 = vld [vmem:[%s1 + $0x14] sm:$0xf]
    %v38 = vld [vmem:[%s1 + $0x18] sm:$0xf]
    %v39 = vld [vmem:[%s1 + $0x1c] sm:$0xf]
    %v40 = vld [vmem:[%s1 + $0x20] sm:$0xf]
    %v41 = vld [vmem:[%s1 + $0x24] sm:$0xf]
    %v42 = vld [vmem:[%s1 + $0x28] sm:$0xf]
    %v43 = vld [vmem:[%s1 + $0x2c] sm:$0xf]
    %v44 = vld [vmem:[%s1 + $0x30] sm:$0xf]
    %v45 = vld [vmem:[%s1 + $0x34] sm:$0xf]
    %v46 = vld [vmem:[%s1 + $0x38] sm:$0xf]
    %v47 = vld [vmem:[%s1 + $0x3c] sm:$0xf]
    %v52 = vunpack.c.l.b16 %v28
    %v53 = vunpack.c.l.b16 %v29
    %v54 = vunpack.c.l.b16 %v30
    %v55 = vunpack.c.l.b16 %v31
    %v56 = vpack.c.b16 %v53, %v52
    %v57 = vpack.c.b16 %v55, %v54
    %v76 = vunpack.c.l.b16 %v32
    %v77 = vunpack.c.l.b16 %v33
    %v78 = vunpack.c.l.b16 %v34
    %v79 = vunpack.c.l.b16 %v35
    %v80 = vunpack.c.l.b16 %v36
    %v81 = vunpack.c.l.b16 %v37
    %v82 = vunpack.c.l.b16 %v38
    %v83 = vunpack.c.l.b16 %v39
    %v84 = vunpack.c.l.b16 %v40
    %v85 = vunpack.c.l.b16 %v41
    %v86 = vunpack.c.l.b16 %v42
    %v87 = vunpack.c.l.b16 %v43
    %v88 = vunpack.c.l.b16 %v44
    %v89 = vunpack.c.l.b16 %v45
    %v90 = vunpack.c.l.b16 %v46
    %v91 = vunpack.c.l.b16 %v47
    %v92 = vpack.c.b16 %v77, %v76
    %v93 = vpack.c.b16 %v79, %v78
    %v94 = vpack.c.b16 %v81, %v80
    %v95 = vpack.c.b16 %v83, %v82
    %v96 = vpack.c.b16 %v85, %v84
    %v97 = vpack.c.b16 %v87, %v86
    %v98 = vpack.c.b16 %v89, %v88
    %v99 = vpack.c.b16 %v91, %v90
    %108 = vmatprep.subr.bf16.mxu0 0
    %109 = vmatpush1.bf16.msra.mxu0 %v99
    %110 = vmatprep.subr.bf16.mxu0 0
    %111 = vmatpush1.bf16.msra.mxu0 %v98
    %112 = vmatprep.subr.bf16.mxu0 0
    %113 = vmatpush1.bf16.msra.mxu0 %v97
    %114 = vmatprep.subr.bf16.mxu0 0
    %115 = vmatpush1.bf16.msra.mxu0 %v96
    %116 = vmatprep.subr.bf16.mxu0 0
    %117 = vmatpush1.bf16.msra.mxu0 %v95
    %118 = vmatprep.subr.bf16.mxu0 0
    %119 = vmatpush1.bf16.msra.mxu0 %v94
    %120 = vmatprep.subr.bf16.mxu0 0
    %121 = vmatpush1.bf16.msra.mxu0 %v93
    %122 = vmatprep.subr.bf16.mxu0 0
    %123 = vmatpush1.bf16.msra.mxu0 %v92
    %124 = vmatprep.subr.bf16.mxu0 0
    %125 = vmatpush2.bf16.msra.mxu0 0
    %126 = vmatprep.subr.bf16.mxu0 0
    %127 = vmatpush2.bf16.msra.mxu0 0
    %128 = vmatprep.subr.bf16.mxu0 0
    %129 = vmatpush2.bf16.msra.mxu0 0
    %130 = vmatprep.subr.bf16.mxu0 0
    %131 = vmatpush2.bf16.msra.mxu0 0
    %132 = vmatprep.subr.bf16.mxu0 0
    %133 = vmatpush2.bf16.msra.mxu0 0
    %134 = vmatprep.subr.bf16.mxu0 0
    %135 = vmatpush2.bf16.msra.mxu0 0
    %136 = vmatprep.subr.bf16.mxu0 0
    %137 = vmatpush2.bf16.msra.mxu0 0
    %138 = vmatprep.subr.bf16.mxu0 0
    %139 = vmatpush2.bf16.msra.mxu0 0
    %140 = vmatprep.mubr.bf16.mxu0 0
    %141 = vmatmul.mubr.bf16.gmra.mxu0 %v56
    %v142 = vpop.f32.mrf.mxu0
    %v143 = vadd.f32 0.0, %v142
    %v144 = vpop.f32.mrf.mxu0
    %v145 = vpop.f32.mrf.mxu0
    %v146 = vadd.f32 0.0, %v145
    %v147 = vpop.f32.mrf.mxu0
    %148 = vmatprep.mubr.bf16.mxu0 0
    %149 = vmatmul.mubr.bf16.gmra.mxu0 %v57
    %v150 = vpop.f32.mrf.mxu0
    %v151 = vadd.f32 0.0, %v150
    %v152 = vpop.f32.mrf.mxu0
    %v153 = vpop.f32.mrf.mxu0
    %v154 = vadd.f32 0.0, %v153
    %v155 = vpop.f32.mrf.mxu0
    %156 = vdwg.mxu0
    %v157 = vadd.f32 %v24, %v143
    %v158 = vadd.f32 %v25, %v146
    %v159 = vadd.f32 %v26, %v151
    %v160 = vadd.f32 %v27, %v154
    %161 = vst [vmem:[#allocation2] sm:$0xff] %v157
    %162 = vst [vmem:[#allocation2 + $0x8] sm:$0xff] %v158
    %163 = vst [vmem:[#allocation2 + $0x10] sm:$0xff] %v159
    %164 = vst [vmem:[#allocation2 + $0x18] sm:$0xff] %v160
    // Predicated region
    $region18: #{vqvae_encoder_forward.9} parent=1 // pred_check
      %p165 = pneg %p16
    $region19: #{vqvae_encoder_forward.9} parent=1 // pred_check_branch
      %167 = sbr.rel (%p165) target = $region21
    $region20: #{vqvae_encoder_forward.9} parent=1 // pred_region
      %v168 = vld [vmem:[#allocation2] sm:$0xff]
      %v169 = vld [vmem:[#allocation2 + $0x8] sm:$0xff]
      %v170 = vld [vmem:[#allocation2 + $0x10] sm:$0xff]
      %v171 = vld [vmem:[#allocation2 + $0x18] sm:$0xff]
      %v172 = vld [vmem:[%s2] sm:$0x1]
      %v174 = vlaneseq
      %v175 = vshrl.u32 %v174, 7
      %v176 = vsub.s32 0, %v175
      %v177 = vrot.slane %v172, %v176
      %v179 = vadd.f32 %v168, %v177
      %v180 = vadd.f32 %v169, %v177
      %v181 = vadd.f32 %v170, %v177
      %v182 = vadd.f32 %v171, %v177
      %183 = vst [vmem:[#allocation3] sm:$0xff] %v179
      %184 = vst [vmem:[#allocation3 + $0x8] sm:$0xff] %v180
      %185 = vst [vmem:[#allocation3 + $0x10] sm:$0xff] %v181
      %186 = vst [vmem:[#allocation3 + $0x18] sm:$0xff] %v182
    $region21: #{vqvae_encoder_forward.9} parent=1 // pred_fallthru
      _
    // Predicated region
    $region22: #{vqvae_encoder_forward.9} parent=1 // pred_check
      _
    $region23: #{vqvae_encoder_forward.9} parent=1 // pred_check_branch
      %188 = sbr.rel (0) target = $region25
    $region24: #{vqvae_encoder_forward.9} parent=1 // pred_region
      %s190 = ssub.s32 512, 512
      %191 = vsyncadd [#allocation4], %s190
      %s192 = sshll.u32 [#allocation3], 4
      %s193 = int_to_ptr.vmem [resolvable:$true] %s192
      %198 = dma.vmem_to_hbm [thread:$0]  %s193, 512, %s3, [#allocation4], 128, 128, 8
    $region25: #{vqvae_encoder_forward.9} parent=1 // pred_fallthru
      _
    // Predicated region
    $region26: #{vqvae_encoder_forward.9} parent=1 // pred_check
      _
    $region27: #{vqvae_encoder_forward.9} parent=1 // pred_check_branch
      %200 = sbr.rel (0) target = $region29
    $region28: #{vqvae_encoder_forward.9} parent=1 // pred_region
      %201 = dma.done [#allocation4], 512
    $region29: #{vqvae_encoder_forward.9} parent=1 // pred_fallthru
      _
    %202 = vsyncpa [#allocation4], 1

// kernel: vqvae_encoder_forward.8
$region0: #{vqvae_encoder_forward.8}
  #allocation0 [shape = 'u32[]', space=smem, size = 0x4, offset = 0x4, fixed_abs, tag = 'smem constant byte address 0x4 - core index']
  #allocation1 [shape = 'u32[144,128]{1,0:T(1,128)}', space=vmem, size = 0x12000, scoped, tag = 'internal scratch']
  %s0 = inlined_call_operand.vmem [shape: bf16[32,1152], index: 0, kind: input, shape index: {}]
  %s1 = inlined_call_operand.vmem [shape: bf16[32,128], index: 1, kind: input, shape index: {}]
  %s2 = inlined_call_operand.vmem [shape: bf16[1152,128], index: 2, kind: input, shape index: {}]
  %s3 = inlined_call_operand.vmem [shape: f32[1,128], index: 3, kind: input, shape index: {}]
  %s4 = inlined_call_operand.vmem [shape: bf16[128,128], index: 4, kind: input, shape index: {}]
  %s5 = inlined_call_operand.vmem [shape: f32[1,128], index: 5, kind: input, shape index: {}]
  %s6 = inlined_call_operand.vmem [shape: bf16[32,128], index: 6, kind: output, shape index: {}]
  %s7 = sld [smem:[#allocation0]]
  $region34: #{vqvae_encoder_forward.8} parent=0
    _
  %s9 = ssub.s32 1, %s7
  %s10 = scalar_select 0, %s9, %s7
  // Predicated region
  $region2: #{vqvae_encoder_forward.8} parent=0 // pred_check
    _
  $region3: #{vqvae_encoder_forward.8} parent=0 // pred_check_branch
    %12 = sbr.rel (0) target = $region5
  $region4: #{vqvae_encoder_forward.8} parent=0 // pred_region
    _
  $region5: #{vqvae_encoder_forward.8} parent=0 // pred_fallthru
    _
  // Predicated region
  $region6: #{vqvae_encoder_forward.8} parent=0 // pred_check
    _
  $region7: #{vqvae_encoder_forward.8} parent=0 // pred_check_branch
    %14 = sbr.rel (0) target = $region9
  $region8: #{vqvae_encoder_forward.8} parent=0 // pred_region
    _
  $region9: #{vqvae_encoder_forward.8} parent=0 // pred_fallthru
    _
  // Predicated region
  $region10: #{vqvae_encoder_forward.8} parent=0 // pred_check
    _
  $region11: #{vqvae_encoder_forward.8} parent=0 // pred_check_branch
    %16 = sbr.rel (0) target = $region13
  $region12: #{vqvae_encoder_forward.8} parent=0 // pred_region
    _
  $region13: #{vqvae_encoder_forward.8} parent=0 // pred_fallthru
    _
  // Predicated region
  $region14: #{vqvae_encoder_forward.8} parent=0 // pred_check
    _
  $region15: #{vqvae_encoder_forward.8} parent=0 // pred_check_branch
    %18 = sbr.rel (0) target = $region17
  $region16: #{vqvae_encoder_forward.8} parent=0 // pred_region
    _
  $region17: #{vqvae_encoder_forward.8} parent=0 // pred_fallthru
    _
  // Predicated region
  $region18: #{vqvae_encoder_forward.8} parent=0 // pred_check
    _
  $region19: #{vqvae_encoder_forward.8} parent=0 // pred_check_branch
    %20 = sbr.rel (0) target = $region21
  $region20: #{vqvae_encoder_forward.8} parent=0 // pred_region
    _
  $region21: #{vqvae_encoder_forward.8} parent=0 // pred_fallthru
    _
  // Predicated region
  $region22: #{vqvae_encoder_forward.8} parent=0 // pred_check
    _
  $region23: #{vqvae_encoder_forward.8} parent=0 // pred_check_branch
    %22 = sbr.rel (0) target = $region25
  $region24: #{vqvae_encoder_forward.8} parent=0 // pred_region
    _
  $region25: #{vqvae_encoder_forward.8} parent=0 // pred_fallthru
    _
  %v24 = vld [vmem:[%s0] sm:$0xff]
  %v25 = vld [vmem:[%s0 + $0x8] sm:$0xff]
  %v26 = vld [vmem:[%s0 + $0x10] sm:$0xff]
  %v27 = vld [vmem:[%s0 + $0x18] sm:$0xff]
  %v28 = vld [vmem:[%s0 + $0x20] sm:$0xf]
  %v29 = vld [vmem:[%s0 + $0x24] sm:$0xff]
  %v30 = vld [vmem:[%s0 + $0x2c] sm:$0xff]
  %v31 = vld [vmem:[%s0 + $0x34] sm:$0xff]
  %v32 = vld [vmem:[%s0 + $0x3c] sm:$0xff]
  %v33 = vld [vmem:[%s0 + $0x44] sm:$0xf]
  %v34 = vld [vmem:[%s0 + $0x48] sm:$0xff]
  %v35 = vld [vmem:[%s0 + $0x50] sm:$0xff]
  %v36 = vld [vmem:[%s0 + $0x58] sm:$0xff]
  %v37 = vld [vmem:[%s0 + $0x60] sm:$0xff]
  %v38 = vld [vmem:[%s0 + $0x68] sm:$0xf]
  %v39 = vld [vmem:[%s0 + $0x6c] sm:$0xff]
  %v40 = vld [vmem:[%s0 + $0x74] sm:$0xff]
  %v41 = vld [vmem:[%s0 + $0x7c] sm:$0xff]
  %v42 = vld [vmem:[%s0 + $0x84] sm:$0xff]
  %v43 = vld [vmem:[%s0 + $0x8c] sm:$0xf]
  %v44 = vld [vmem:[%s2] sm:$0xf]
  %v45 = vld [vmem:[%s2 + $0x4] sm:$0xf]
  %v46 = vld [vmem:[%s2 + $0x8] sm:$0xf]
  %v47 = vld [vmem:[%s2 + $0xc] sm:$0xf]
  %v48 = vld [vmem:[%s2 + $0x10] sm:$0xf]
  %v49 = vld [vmem:[%s2 + $0x14] sm:$0xf]
  %v50 = vld [vmem:[%s2 + $0x18] sm:$0xf]
  %v51 = vld [vmem:[%s2 + $0x1c] sm:$0xf]
  %v52 = vld [vmem:[%s2 + $0x20] sm:$0xf]
  %v53 = vld [vmem:[%s2 + $0x24] sm:$0xf]
  %v54 = vld [vmem:[%s2 + $0x28] sm:$0xf]
  %v55 = vld [vmem:[%s2 + $0x2c] sm:$0xf]
  %v56 = vld [vmem:[%s2 + $0x30] sm:$0xf]
  %v57 = vld [vmem:[%s2 + $0x34] sm:$0xf]
  %v58 = vld [vmem:[%s2 + $0x38] sm:$0xf]
  %v59 = vld [vmem:[%s2 + $0x3c] sm:$0xf]
  %v60 = vld [vmem:[%s2 + $0x40] sm:$0xf]
  %v61 = vld [vmem:[%s2 + $0x44] sm:$0xf]
  %v62 = vld [vmem:[%s2 + $0x48] sm:$0xf]
  %v63 = vld [vmem:[%s2 + $0x4c] sm:$0xf]
  %v64 = vld [vmem:[%s2 + $0x50] sm:$0xf]
  %v65 = vld [vmem:[%s2 + $0x54] sm:$0xf]
  %v66 = vld [vmem:[%s2 + $0x58] sm:$0xf]
  %v67 = vld [vmem:[%s2 + $0x5c] sm:$0xf]
  %v68 = vld [vmem:[%s2 + $0x60] sm:$0xf]
  %v69 = vld [vmem:[%s2 + $0x64] sm:$0xf]
  %v70 = vld [vmem:[%s2 + $0x68] sm:$0xf]
  %v71 = vld [vmem:[%s2 + $0x6c] sm:$0xf]
  %v72 = vld [vmem:[%s2 + $0x70] sm:$0xf]
  %v73 = vld [vmem:[%s2 + $0x74] sm:$0xf]
  %v74 = vld [vmem:[%s2 + $0x78] sm:$0xf]
  %v75 = vld [vmem:[%s2 + $0x7c] sm:$0xf]
  %v76 = vld [vmem:[%s2 + $0x80] sm:$0xf]
  %v77 = vld [vmem:[%s2 + $0x84] sm:$0xf]
  %v78 = vld [vmem:[%s2 + $0x88] sm:$0xf]
  %v79 = vld [vmem:[%s2 + $0x8c] sm:$0xf]
  %v80 = vld [vmem:[%s2 + $0x90] sm:$0xf]
  %v81 = vld [vmem:[%s2 + $0x94] sm:$0xf]
  %v82 = vld [vmem:[%s2 + $0x98] sm:$0xf]
  %v83 = vld [vmem:[%s2 + $0x9c] sm:$0xf]
  %v84 = vld [vmem:[%s2 + $0xa0] sm:$0xf]
  %v85 = vld [vmem:[%s2 + $0xa4] sm:$0xf]
  %v86 = vld [vmem:[%s2 + $0xa8] sm:$0xf]
  %v87 = vld [vmem:[%s2 + $0xac] sm:$0xf]
  %v88 = vld [vmem:[%s2 + $0xb0] sm:$0xf]
  %v89 = vld [vmem:[%s2 + $0xb4] sm:$0xf]
  %v90 = vld [vmem:[%s2 + $0xb8] sm:$0xf]
  %v91 = vld [vmem:[%s2 + $0xbc] sm:$0xf]
  %v92 = vld [vmem:[%s2 + $0xc0] sm:$0xf]
  %v93 = vld [vmem:[%s2 + $0xc4] sm:$0xf]
  %v94 = vld [vmem:[%s2 + $0xc8] sm:$0xf]
  %v95 = vld [vmem:[%s2 + $0xcc] sm:$0xf]
  %v96 = vld [vmem:[%s2 + $0xd0] sm:$0xf]
  %v97 = vld [vmem:[%s2 + $0xd4] sm:$0xf]
  %v98 = vld [vmem:[%s2 + $0xd8] sm:$0xf]
  %v99 = vld [vmem:[%s2 + $0xdc] sm:$0xf]
  %v100 = vld [vmem:[%s2 + $0xe0] sm:$0xf]
  %v101 = vld [vmem:[%s2 + $0xe4] sm:$0xf]
  %v102 = vld [vmem:[%s2 + $0xe8] sm:$0xf]
  %v103 = vld [vmem:[%s2 + $0xec] sm:$0xf]
  %v104 = vld [vmem:[%s2 + $0xf0] sm:$0xf]
  %v105 = vld [vmem:[%s2 + $0xf4] sm:$0xf]
  %v106 = vld [vmem:[%s2 + $0xf8] sm:$0xf]
  %v107 = vld [vmem:[%s2 + $0xfc] sm:$0xf]
  %v108 = vld [vmem:[%s2 + $0x100] sm:$0xf]
  %v109 = vld [vmem:[%s2 + $0x104] sm:$0xf]
  %v110 = vld [vmem:[%s2 + $0x108] sm:$0xf]
  %v111 = vld [vmem:[%s2 + $0x10c] sm:$0xf]
  %v112 = vld [vmem:[%s2 + $0x110] sm:$0xf]
  %v113 = vld [vmem:[%s2 + $0x114] sm:$0xf]
  %v114 = vld [vmem:[%s2 + $0x118] sm:$0xf]
  %v115 = vld [vmem:[%s2 + $0x11c] sm:$0xf]
  %v116 = vld [vmem:[%s2 + $0x120] sm:$0xf]
  %v117 = vld [vmem:[%s2 + $0x124] sm:$0xf]
  %v118 = vld [vmem:[%s2 + $0x128] sm:$0xf]
  %v119 = vld [vmem:[%s2 + $0x12c] sm:$0xf]
  %v120 = vld [vmem:[%s2 + $0x130] sm:$0xf]
  %v121 = vld [vmem:[%s2 + $0x134] sm:$0xf]
  %v122 = vld [vmem:[%s2 + $0x138] sm:$0xf]
  %v123 = vld [vmem:[%s2 + $0x13c] sm:$0xf]
  %v124 = vld [vmem:[%s2 + $0x140] sm:$0xf]
  %v125 = vld [vmem:[%s2 + $0x144] sm:$0xf]
  %v126 = vld [vmem:[%s2 + $0x148] sm:$0xf]
  %v127 = vld [vmem:[%s2 + $0x14c] sm:$0xf]
  %v128 = vld [vmem:[%s2 + $0x150] sm:$0xf]
  %v129 = vld [vmem:[%s2 + $0x154] sm:$0xf]
  %v130 = vld [vmem:[%s2 + $0x158] sm:$0xf]
  %v131 = vld [vmem:[%s2 + $0x15c] sm:$0xf]
  %v132 = vld [vmem:[%s2 + $0x160] sm:$0xf]
  %v133 = vld [vmem:[%s2 + $0x164] sm:$0xf]
  %v134 = vld [vmem:[%s2 + $0x168] sm:$0xf]
  %v135 = vld [vmem:[%s2 + $0x16c] sm:$0xf]
  %v136 = vld [vmem:[%s2 + $0x170] sm:$0xf]
  %v137 = vld [vmem:[%s2 + $0x174] sm:$0xf]
  %v138 = vld [vmem:[%s2 + $0x178] sm:$0xf]
  %v139 = vld [vmem:[%s2 + $0x17c] sm:$0xf]
  %v140 = vld [vmem:[%s2 + $0x180] sm:$0xf]
  %v141 = vld [vmem:[%s2 + $0x184] sm:$0xf]
  %v142 = vld [vmem:[%s2 + $0x188] sm:$0xf]
  %v143 = vld [vmem:[%s2 + $0x18c] sm:$0xf]
  %v144 = vld [vmem:[%s2 + $0x190] sm:$0xf]
  %v145 = vld [vmem:[%s2 + $0x194] sm:$0xf]
  %v146 = vld [vmem:[%s2 + $0x198] sm:$0xf]
  %v147 = vld [vmem:[%s2 + $0x19c] sm:$0xf]
  %v148 = vld [vmem:[%s2 + $0x1a0] sm:$0xf]
  %v149 = vld [vmem:[%s2 + $0x1a4] sm:$0xf]
  %v150 = vld [vmem:[%s2 + $0x1a8] sm:$0xf]
  %v151 = vld [vmem:[%s2 + $0x1ac] sm:$0xf]
  %v152 = vld [vmem:[%s2 + $0x1b0] sm:$0xf]
  %v153 = vld [vmem:[%s2 + $0x1b4] sm:$0xf]
  %v154 = vld [vmem:[%s2 + $0x1b8] sm:$0xf]
  %v155 = vld [vmem:[%s2 + $0x1bc] sm:$0xf]
  %v156 = vld [vmem:[%s2 + $0x1c0] sm:$0xf]
  %v157 = vld [vmem:[%s2 + $0x1c4] sm:$0xf]
  %v158 = vld [vmem:[%s2 + $0x1c8] sm:$0xf]
  %v159 = vld [vmem:[%s2 + $0x1cc] sm:$0xf]
  %v160 = vld [vmem:[%s2 + $0x1d0] sm:$0xf]
  %v161 = vld [vmem:[%s2 + $0x1d4] sm:$0xf]
  %v162 = vld [vmem:[%s2 + $0x1d8] sm:$0xf]
  %v163 = vld [vmem:[%s2 + $0x1dc] sm:$0xf]
  %v164 = vld [vmem:[%s2 + $0x1e0] sm:$0xf]
  %v165 = vld [vmem:[%s2 + $0x1e4] sm:$0xf]
  %v166 = vld [vmem:[%s2 + $0x1e8] sm:$0xf]
  %v167 = vld [vmem:[%s2 + $0x1ec] sm:$0xf]
  %v168 = vld [vmem:[%s2 + $0x1f0] sm:$0xf]
  %v169 = vld [vmem:[%s2 + $0x1f4] sm:$0xf]
  %v170 = vld [vmem:[%s2 + $0x1f8] sm:$0xf]
  %v171 = vld [vmem:[%s2 + $0x1fc] sm:$0xf]
  %v172 = vld [vmem:[%s2 + $0x200] sm:$0xf]
  %v173 = vld [vmem:[%s2 + $0x204] sm:$0xf]
  %v174 = vld [vmem:[%s2 + $0x208] sm:$0xf]
  %v175 = vld [vmem:[%s2 + $0x20c] sm:$0xf]
  %v176 = vld [vmem:[%s2 + $0x210] sm:$0xf]
  %v177 = vld [vmem:[%s2 + $0x214] sm:$0xf]
  %v178 = vld [vmem:[%s2 + $0x218] sm:$0xf]
  %v179 = vld [vmem:[%s2 + $0x21c] sm:$0xf]
  %v180 = vld [vmem:[%s2 + $0x220] sm:$0xf]
  %v181 = vld [vmem:[%s2 + $0x224] sm:$0xf]
  %v182 = vld [vmem:[%s2 + $0x228] sm:$0xf]
  %v183 = vld [vmem:[%s2 + $0x22c] sm:$0xf]
  %v184 = vld [vmem:[%s2 + $0x230] sm:$0xf]
  %v185 = vld [vmem:[%s2 + $0x234] sm:$0xf]
  %v186 = vld [vmem:[%s2 + $0x238] sm:$0xf]
  %v187 = vld [vmem:[%s2 + $0x23c] sm:$0xf]
  %v188 = vld [vmem:[%s3] sm:$0x1]
  %v190 = vlaneseq
  %v191 = vshrl.u32 %v190, 7
  %v192 = vsub.s32 0, %v191
  %v193 = vrot.slane %v188, %v192
  %v215 = vunpack.c.l.b16 %v24
  %v216 = vunpack.c.h.b16 %v24
  %v217 = vunpack.c.l.b16 %v25
  %v218 = vunpack.c.h.b16 %v25
  %v219 = vunpack.c.l.b16 %v26
  %v220 = vunpack.c.h.b16 %v26
  %v221 = vunpack.c.l.b16 %v27
  %v222 = vunpack.c.h.b16 %v27
  %v223 = vunpack.c.l.b16 %v28
  %v224 = vunpack.c.l.b16 %v29
  %v225 = vunpack.c.h.b16 %v29
  %v226 = vunpack.c.l.b16 %v30
  %v227 = vunpack.c.h.b16 %v30
  %v228 = vunpack.c.l.b16 %v31
  %v229 = vunpack.c.h.b16 %v31
  %v230 = vunpack.c.l.b16 %v32
  %v231 = vunpack.c.h.b16 %v32
  %v232 = vunpack.c.l.b16 %v33
  %v233 = vunpack.c.l.b16 %v34
  %v234 = vunpack.c.h.b16 %v34
  %v235 = vunpack.c.l.b16 %v35
  %v236 = vunpack.c.h.b16 %v35
  %v237 = vunpack.c.l.b16 %v36
  %v238 = vunpack.c.h.b16 %v36
  %v239 = vunpack.c.l.b16 %v37
  %v240 = vunpack.c.h.b16 %v37
  %v241 = vunpack.c.l.b16 %v38
  %v242 = vunpack.c.l.b16 %v39
  %v243 = vunpack.c.h.b16 %v39
  %v244 = vunpack.c.l.b16 %v40
  %v245 = vunpack.c.h.b16 %v40
  %v246 = vunpack.c.l.b16 %v41
  %v247 = vunpack.c.h.b16 %v41
  %v248 = vunpack.c.l.b16 %v42
  %v249 = vunpack.c.h.b16 %v42
  %v250 = vunpack.c.l.b16 %v43
  %v251 = vpack.c.b16 %v224, %v215
  %v252 = vpack.c.b16 %v225, %v216
  %v253 = vpack.c.b16 %v226, %v217
  %v254 = vpack.c.b16 %v227, %v218
  %v255 = vpack.c.b16 %v228, %v219
  %v256 = vpack.c.b16 %v229, %v220
  %v257 = vpack.c.b16 %v230, %v221
  %v258 = vpack.c.b16 %v231, %v222
  %v259 = vpack.c.b16 %v232, %v223
  %v260 = vpack.c.b16 %v242, %v233
  %v261 = vpack.c.b16 %v243, %v234
  %v262 = vpack.c.b16 %v244, %v235
  %v263 = vpack.c.b16 %v245, %v236
  %v264 = vpack.c.b16 %v246, %v237
  %v265 = vpack.c.b16 %v247, %v238
  %v266 = vpack.c.b16 %v248, %v239
  %v267 = vpack.c.b16 %v249, %v240
  %v268 = vpack.c.b16 %v250, %v241
  %v431 = vunpack.c.l.b16 %v44
  %v432 = vunpack.c.l.b16 %v45
  %v433 = vunpack.c.l.b16 %v46
  %v434 = vunpack.c.l.b16 %v47
  %v435 = vunpack.c.l.b16 %v48
  %v436 = vunpack.c.l.b16 %v49
  %v437 = vunpack.c.l.b16 %v50
  %v438 = vunpack.c.l.b16 %v51
  %v439 = vunpack.c.l.b16 %v52
  %v440 = vunpack.c.l.b16 %v53
  %v441 = vunpack.c.l.b16 %v54
  %v442 = vunpack.c.l.b16 %v55
  %v443 = vunpack.c.l.b16 %v56
  %v444 = vunpack.c.l.b16 %v57
  %v445 = vunpack.c.l.b16 %v58
  %v446 = vunpack.c.l.b16 %v59
  %v447 = vunpack.c.l.b16 %v60
  %v448 = vunpack.c.l.b16 %v61
  %v449 = vunpack.c.l.b16 %v62
  %v450 = vunpack.c.l.b16 %v63
  %v451 = vunpack.c.l.b16 %v64
  %v452 = vunpack.c.l.b16 %v65
  %v453 = vunpack.c.l.b16 %v66
  %v454 = vunpack.c.l.b16 %v67
  %v455 = vunpack.c.l.b16 %v68
  %v456 = vunpack.c.l.b16 %v69
  %v457 = vunpack.c.l.b16 %v70
  %v458 = vunpack.c.l.b16 %v71
  %v459 = vunpack.c.l.b16 %v72
  %v460 = vunpack.c.l.b16 %v73
  %v461 = vunpack.c.l.b16 %v74
  %v462 = vunpack.c.l.b16 %v75
  %v463 = vunpack.c.l.b16 %v76
  %v464 = vunpack.c.l.b16 %v77
  %v465 = vunpack.c.l.b16 %v78
  %v466 = vunpack.c.l.b16 %v79
  %v467 = vunpack.c.l.b16 %v80
  %v468 = vunpack.c.l.b16 %v81
  %v469 = vunpack.c.l.b16 %v82
  %v470 = vunpack.c.l.b16 %v83
  %v471 = vunpack.c.l.b16 %v84
  %v472 = vunpack.c.l.b16 %v85
  %v473 = vunpack.c.l.b16 %v86
  %v474 = vunpack.c.l.b16 %v87
  %v475 = vunpack.c.l.b16 %v88
  %v476 = vunpack.c.l.b16 %v89
  %v477 = vunpack.c.l.b16 %v90
  %v478 = vunpack.c.l.b16 %v91
  %v479 = vunpack.c.l.b16 %v92
  %v480 = vunpack.c.l.b16 %v93
  %v481 = vunpack.c.l.b16 %v94
  %v482 = vunpack.c.l.b16 %v95
  %v483 = vunpack.c.l.b16 %v96
  %v484 = vunpack.c.l.b16 %v97
  %v485 = vunpack.c.l.b16 %v98
  %v486 = vunpack.c.l.b16 %v99
  %v487 = vunpack.c.l.b16 %v100
  %v488 = vunpack.c.l.b16 %v101
  %v489 = vunpack.c.l.b16 %v102
  %v490 = vunpack.c.l.b16 %v103
  %v491 = vunpack.c.l.b16 %v104
  %v492 = vunpack.c.l.b16 %v105
  %v493 = vunpack.c.l.b16 %v106
  %v494 = vunpack.c.l.b16 %v107
  %v495 = vunpack.c.l.b16 %v108
  %v496 = vunpack.c.l.b16 %v109
  %v497 = vunpack.c.l.b16 %v110
  %v498 = vunpack.c.l.b16 %v111
  %v499 = vunpack.c.l.b16 %v112
  %v500 = vunpack.c.l.b16 %v113
  %v501 = vunpack.c.l.b16 %v114
  %v502 = vunpack.c.l.b16 %v115
  %v503 = vunpack.c.l.b16 %v116
  %v504 = vunpack.c.l.b16 %v117
  %v505 = vunpack.c.l.b16 %v118
  %v506 = vunpack.c.l.b16 %v119
  %v507 = vunpack.c.l.b16 %v120
  %v508 = vunpack.c.l.b16 %v121
  %v509 = vunpack.c.l.b16 %v122
  %v510 = vunpack.c.l.b16 %v123
  %v511 = vunpack.c.l.b16 %v124
  %v512 = vunpack.c.l.b16 %v125
  %v513 = vunpack.c.l.b16 %v126
  %v514 = vunpack.c.l.b16 %v127
  %v515 = vunpack.c.l.b16 %v128
  %v516 = vunpack.c.l.b16 %v129
  %v517 = vunpack.c.l.b16 %v130
  %v518 = vunpack.c.l.b16 %v131
  %v519 = vunpack.c.l.b16 %v132
  %v520 = vunpack.c.l.b16 %v133
  %v521 = vunpack.c.l.b16 %v134
  %v522 = vunpack.c.l.b16 %v135
  %v523 = vunpack.c.l.b16 %v136
  %v524 = vunpack.c.l.b16 %v137
  %v525 = vunpack.c.l.b16 %v138
  %v526 = vunpack.c.l.b16 %v139
  %v527 = vunpack.c.l.b16 %v140
  %v528 = vunpack.c.l.b16 %v141
  %v529 = vunpack.c.l.b16 %v142
  %v530 = vunpack.c.l.b16 %v143
  %v531 = vunpack.c.l.b16 %v144
  %v532 = vunpack.c.l.b16 %v145
  %v533 = vunpack.c.l.b16 %v146
  %v534 = vunpack.c.l.b16 %v147
  %v535 = vunpack.c.l.b16 %v148
  %v536 = vunpack.c.l.b16 %v149
  %v537 = vunpack.c.l.b16 %v150
  %v538 = vunpack.c.l.b16 %v151
  %v539 = vunpack.c.l.b16 %v152
  %v540 = vunpack.c.l.b16 %v153
  %v541 = vunpack.c.l.b16 %v154
  %v542 = vunpack.c.l.b16 %v155
  %v543 = vunpack.c.l.b16 %v156
  %v544 = vunpack.c.l.b16 %v157
  %v545 = vunpack.c.l.b16 %v158
  %v546 = vunpack.c.l.b16 %v159
  %v547 = vunpack.c.l.b16 %v160
  %v548 = vunpack.c.l.b16 %v161
  %v549 = vunpack.c.l.b16 %v162
  %v550 = vunpack.c.l.b16 %v163
  %v551 = vunpack.c.l.b16 %v164
  %v552 = vunpack.c.l.b16 %v165
  %v553 = vunpack.c.l.b16 %v166
  %v554 = vunpack.c.l.b16 %v167
  %v555 = vunpack.c.l.b16 %v168
  %v556 = vunpack.c.l.b16 %v169
  %v557 = vunpack.c.l.b16 %v170
  %v558 = vunpack.c.l.b16 %v171
  %v559 = vunpack.c.l.b16 %v172
  %v560 = vunpack.c.l.b16 %v173
  %v561 = vunpack.c.l.b16 %v174
  %v562 = vunpack.c.l.b16 %v175
  %v563 = vunpack.c.l.b16 %v176
  %v564 = vunpack.c.l.b16 %v177
  %v565 = vunpack.c.l.b16 %v178
  %v566 = vunpack.c.l.b16 %v179
  %v567 = vunpack.c.l.b16 %v180
  %v568 = vunpack.c.l.b16 %v181
  %v569 = vunpack.c.l.b16 %v182
  %v570 = vunpack.c.l.b16 %v183
  %v571 = vunpack.c.l.b16 %v184
  %v572 = vunpack.c.l.b16 %v185
  %v573 = vunpack.c.l.b16 %v186
  %v574 = vunpack.c.l.b16 %v187
  %v575 = vpack.c.b16 %v432, %v431
  %v576 = vpack.c.b16 %v434, %v433
  %v577 = vpack.c.b16 %v436, %v435
  %v578 = vpack.c.b16 %v438, %v437
  %v579 = vpack.c.b16 %v440, %v439
  %v580 = vpack.c.b16 %v442, %v441
  %v581 = vpack.c.b16 %v444, %v443
  %v582 = vpack.c.b16 %v446, %v445
  %v583 = vpack.c.b16 %v448, %v447
  %v584 = vpack.c.b16 %v450, %v449
  %v585 = vpack.c.b16 %v452, %v451
  %v586 = vpack.c.b16 %v454, %v453
  %v587 = vpack.c.b16 %v456, %v455
  %v588 = vpack.c.b16 %v458, %v457
  %v589 = vpack.c.b16 %v460, %v459
  %v590 = vpack.c.b16 %v462, %v461
  %v591 = vpack.c.b16 %v464, %v463
  %v592 = vpack.c.b16 %v466, %v465
  %v593 = vpack.c.b16 %v468, %v467
  %v594 = vpack.c.b16 %v470, %v469
  %v595 = vpack.c.b16 %v472, %v471
  %v596 = vpack.c.b16 %v474, %v473
  %v597 = vpack.c.b16 %v476, %v475
  %v598 = vpack.c.b16 %v478, %v477
  %v599 = vpack.c.b16 %v480, %v479
  %v600 = vpack.c.b16 %v482, %v481
  %v601 = vpack.c.b16 %v484, %v483
  %v602 = vpack.c.b16 %v486, %v485
  %v603 = vpack.c.b16 %v488, %v487
  %v604 = vpack.c.b16 %v490, %v489
  %v605 = vpack.c.b16 %v492, %v491
  %v606 = vpack.c.b16 %v494, %v493
  %v607 = vpack.c.b16 %v496, %v495
  %v608 = vpack.c.b16 %v498, %v497
  %v609 = vpack.c.b16 %v500, %v499
  %v610 = vpack.c.b16 %v502, %v501
  %v611 = vpack.c.b16 %v504, %v503
  %v612 = vpack.c.b16 %v506, %v505
  %v613 = vpack.c.b16 %v508, %v507
  %v614 = vpack.c.b16 %v510, %v509
  %v615 = vpack.c.b16 %v512, %v511
  %v616 = vpack.c.b16 %v514, %v513
  %v617 = vpack.c.b16 %v516, %v515
  %v618 = vpack.c.b16 %v518, %v517
  %v619 = vpack.c.b16 %v520, %v519
  %v620 = vpack.c.b16 %v522, %v521
  %v621 = vpack.c.b16 %v524, %v523
  %v622 = vpack.c.b16 %v526, %v525
  %v623 = vpack.c.b16 %v528, %v527
  %v624 = vpack.c.b16 %v530, %v529
  %v625 = vpack.c.b16 %v532, %v531
  %v626 = vpack.c.b16 %v534, %v533
  %v627 = vpack.c.b16 %v536, %v535
  %v628 = vpack.c.b16 %v538, %v537
  %v629 = vpack.c.b16 %v540, %v539
  %v630 = vpack.c.b16 %v542, %v541
  %v631 = vpack.c.b16 %v544, %v543
  %v632 = vpack.c.b16 %v546, %v545
  %v633 = vpack.c.b16 %v548, %v547
  %v634 = vpack.c.b16 %v550, %v549
  %v635 = vpack.c.b16 %v552, %v551
  %v636 = vpack.c.b16 %v554, %v553
  %v637 = vpack.c.b16 %v556, %v555
  %v638 = vpack.c.b16 %v558, %v557
  %v639 = vpack.c.b16 %v560, %v559
  %v640 = vpack.c.b16 %v562, %v561
  %v641 = vpack.c.b16 %v564, %v563
  %v642 = vpack.c.b16 %v566, %v565
  %v643 = vpack.c.b16 %v568, %v567
  %v644 = vpack.c.b16 %v570, %v569
  %v645 = vpack.c.b16 %v572, %v571
  %v646 = vpack.c.b16 %v574, %v573
  %719 = vmatprep.subr.bf16.mxu0 0
  %720 = vmatpush1.bf16.msra.mxu0 %v582
  %721 = vmatprep.subr.bf16.mxu0 0
  %722 = vmatpush1.bf16.msra.mxu0 %v581
  %723 = vmatprep.subr.bf16.mxu0 0
  %724 = vmatpush1.bf16.msra.mxu0 %v580
  %725 = vmatprep.subr.bf16.mxu0 0
  %726 = vmatpush1.bf16.msra.mxu0 %v579
  %727 = vmatprep.subr.bf16.mxu0 0
  %728 = vmatpush1.bf16.msra.mxu0 %v578
  %729 = vmatprep.subr.bf16.mxu0 0
  %730 = vmatpush1.bf16.msra.mxu0 %v577
  %731 = vmatprep.subr.bf16.mxu0 0
  %732 = vmatpush1.bf16.msra.mxu0 %v576
  %733 = vmatprep.subr.bf16.mxu0 0
  %734 = vmatpush1.bf16.msra.mxu0 %v575
  %735 = vmatprep.subr.bf16.mxu0 0
  %736 = vmatpush2.bf16.msra.mxu0 %v590
  %737 = vmatprep.subr.bf16.mxu0 0
  %738 = vmatpush2.bf16.msra.mxu0 %v589
  %739 = vmatprep.subr.bf16.mxu0 0
  %740 = vmatpush2.bf16.msra.mxu0 %v588
  %741 = vmatprep.subr.bf16.mxu0 0
  %742 = vmatpush2.bf16.msra.mxu0 %v587
  %743 = vmatprep.subr.bf16.mxu0 0
  %744 = vmatpush2.bf16.msra.mxu0 %v586
  %745 = vmatprep.subr.bf16.mxu0 0
  %746 = vmatpush2.bf16.msra.mxu0 %v585
  %747 = vmatprep.subr.bf16.mxu0 0
  %748 = vmatpush2.bf16.msra.mxu0 %v584
  %749 = vmatprep.subr.bf16.mxu0 0
  %750 = vmatpush2.bf16.msra.mxu0 %v583
  %751 = vmatprep.mubr.bf16.mxu0 %v252
  %752 = vmatmul.mubr.bf16.gmra.mxu0 %v251
  %v753 = vpop.f32.mrf.mxu0
  %v754 = vadd.f32 %v193, %v753
  %v755 = vpop.f32.mrf.mxu0
  %v756 = vpop.f32.mrf.mxu0
  %v757 = vadd.f32 %v193, %v756
  %v758 = vpop.f32.mrf.mxu0
  %759 = vmatprep.mubr.bf16.mxu0 %v261
  %760 = vmatmul.mubr.bf16.gmra.mxu0 %v260
  %v761 = vpop.f32.mrf.mxu0
  %v762 = vadd.f32 %v193, %v761
  %v763 = vpop.f32.mrf.mxu0
  %v764 = vpop.f32.mrf.mxu0
  %v765 = vadd.f32 %v193, %v764
  %v766 = vpop.f32.mrf.mxu0
  %767 = vdwg.mxu0
  %768 = vmatprep.subr.bf16.mxu0 0
  %769 = vmatpush1.bf16.msra.mxu0 %v598
  %770 = vmatprep.subr.bf16.mxu0 0
  %771 = vmatpush1.bf16.msra.mxu0 %v597
  %772 = vmatprep.subr.bf16.mxu0 0
  %773 = vmatpush1.bf16.msra.mxu0 %v596
  %774 = vmatprep.subr.bf16.mxu0 0
  %775 = vmatpush1.bf16.msra.mxu0 %v595
  %776 = vmatprep.subr.bf16.mxu0 0
  %777 = vmatpush1.bf16.msra.mxu0 %v594
  %778 = vmatprep.subr.bf16.mxu0 0
  %779 = vmatpush1.bf16.msra.mxu0 %v593
  %780 = vmatprep.subr.bf16.mxu0 0
  %781 = vmatpush1.bf16.msra.mxu0 %v592
  %782 = vmatprep.subr.bf16.mxu0 0
  %783 = vmatpush1.bf16.msra.mxu0 %v591
  %784 = vmatprep.subr.bf16.mxu0 0
  %785 = vmatpush2.bf16.msra.mxu0 %v606
  %786 = vmatprep.subr.bf16.mxu0 0
  %787 = vmatpush2.bf16.msra.mxu0 %v605
  %788 = vmatprep.subr.bf16.mxu0 0
  %789 = vmatpush2.bf16.msra.mxu0 %v604
  %790 = vmatprep.subr.bf16.mxu0 0
  %791 = vmatpush2.bf16.msra.mxu0 %v603
  %792 = vmatprep.subr.bf16.mxu0 0
  %793 = vmatpush2.bf16.msra.mxu0 %v602
  %794 = vmatprep.subr.bf16.mxu0 0
  %795 = vmatpush2.bf16.msra.mxu0 %v601
  %796 = vmatprep.subr.bf16.mxu0 0
  %797 = vmatpush2.bf16.msra.mxu0 %v600
  %798 = vmatprep.subr.bf16.mxu0 0
  %799 = vmatpush2.bf16.msra.mxu0 %v599
  %800 = vmatprep.mubr.bf16.mxu0 %v254
  %801 = vmatmul.mubr.bf16.gmra.mxu0 %v253
  %v802 = vpop.f32.mrf.mxu0
  %v803 = vadd.f32 %v754, %v802
  %v804 = vpop.f32.mrf.mxu0
  %v805 = vpop.f32.mrf.mxu0
  %v806 = vadd.f32 %v757, %v805
  %v807 = vpop.f32.mrf.mxu0
  %808 = vmatprep.mubr.bf16.mxu0 %v263
  %809 = vmatmul.mubr.bf16.gmra.mxu0 %v262
  %v810 = vpop.f32.mrf.mxu0
  %v811 = vadd.f32 %v762, %v810
  %v812 = vpop.f32.mrf.mxu0
  %v813 = vpop.f32.mrf.mxu0
  %v814 = vadd.f32 %v765, %v813
  %v815 = vpop.f32.mrf.mxu0
  %816 = vdwg.mxu0
  %817 = vmatprep.subr.bf16.mxu0 0
  %818 = vmatpush1.bf16.msra.mxu0 %v614
  %819 = vmatprep.subr.bf16.mxu0 0
  %820 = vmatpush1.bf16.msra.mxu0 %v613
  %821 = vmatprep.subr.bf16.mxu0 0
  %822 = vmatpush1.bf16.msra.mxu0 %v612
  %823 = vmatprep.subr.bf16.mxu0 0
  %824 = vmatpush1.bf16.msra.mxu0 %v611
  %825 = vmatprep.subr.bf16.mxu0 0
  %826 = vmatpush1.bf16.msra.mxu0 %v610
  %827 = vmatprep.subr.bf16.mxu0 0
  %828 = vmatpush1.bf16.msra.mxu0 %v609
  %829 = vmatprep.subr.bf16.mxu0 0
  %830 = vmatpush1.bf16.msra.mxu0 %v608
  %831 = vmatprep.subr.bf16.mxu0 0
  %832 = vmatpush1.bf16.msra.mxu0 %v607
  %833 = vmatprep.subr.bf16.mxu0 0
  %834 = vmatpush2.bf16.msra.mxu0 %v622
  %835 = vmatprep.subr.bf16.mxu0 0
  %836 = vmatpush2.bf16.msra.mxu0 %v621
  %837 = vmatprep.subr.bf16.mxu0 0
  %838 = vmatpush2.bf16.msra.mxu0 %v620
  %839 = vmatprep.subr.bf16.mxu0 0
  %840 = vmatpush2.bf16.msra.mxu0 %v619
  %841 = vmatprep.subr.bf16.mxu0 0
  %842 = vmatpush2.bf16.msra.mxu0 %v618
  %843 = vmatprep.subr.bf16.mxu0 0
  %844 = vmatpush2.bf16.msra.mxu0 %v617
  %845 = vmatprep.subr.bf16.mxu0 0
  %846 = vmatpush2.bf16.msra.mxu0 %v616
  %847 = vmatprep.subr.bf16.mxu0 0
  %848 = vmatpush2.bf16.msra.mxu0 %v615
  %849 = vmatprep.mubr.bf16.mxu0 %v256
  %850 = vmatmul.mubr.bf16.gmra.mxu0 %v255
  %v851 = vpop.f32.mrf.mxu0
  %v852 = vadd.f32 %v803, %v851
  %v853 = vpop.f32.mrf.mxu0
  %v854 = vpop.f32.mrf.mxu0
  %v855 = vadd.f32 %v806, %v854
  %v856 = vpop.f32.mrf.mxu0
  %857 = vmatprep.mubr.bf16.mxu0 %v265
  %858 = vmatmul.mubr.bf16.gmra.mxu0 %v264
  %v859 = vpop.f32.mrf.mxu0
  %v860 = vadd.f32 %v811, %v859
  %v861 = vpop.f32.mrf.mxu0
  %v862 = vpop.f32.mrf.mxu0
  %v863 = vadd.f32 %v814, %v862
  %v864 = vpop.f32.mrf.mxu0
  %865 = vdwg.mxu0
  %866 = vmatprep.subr.bf16.mxu0 0
  %867 = vmatpush1.bf16.msra.mxu0 %v630
  %868 = vmatprep.subr.bf16.mxu0 0
  %869 = vmatpush1.bf16.msra.mxu0 %v629
  %870 = vmatprep.subr.bf16.mxu0 0
  %871 = vmatpush1.bf16.msra.mxu0 %v628
  %872 = vmatprep.subr.bf16.mxu0 0
  %873 = vmatpush1.bf16.msra.mxu0 %v627
  %874 = vmatprep.subr.bf16.mxu0 0
  %875 = vmatpush1.bf16.msra.mxu0 %v626
  %876 = vmatprep.subr.bf16.mxu0 0
  %877 = vmatpush1.bf16.msra.mxu0 %v625
  %878 = vmatprep.subr.bf16.mxu0 0
  %879 = vmatpush1.bf16.msra.mxu0 %v624
  %880 = vmatprep.subr.bf16.mxu0 0
  %881 = vmatpush1.bf16.msra.mxu0 %v623
  %882 = vmatprep.subr.bf16.mxu0 0
  %883 = vmatpush2.bf16.msra.mxu0 %v638
  %884 = vmatprep.subr.bf16.mxu0 0
  %885 = vmatpush2.bf16.msra.mxu0 %v637
  %886 = vmatprep.subr.bf16.mxu0 0
  %887 = vmatpush2.bf16.msra.mxu0 %v636
  %888 = vmatprep.subr.bf16.mxu0 0
  %889 = vmatpush2.bf16.msra.mxu0 %v635
  %890 = vmatprep.subr.bf16.mxu0 0
  %891 = vmatpush2.bf16.msra.mxu0 %v634
  %892 = vmatprep.subr.bf16.mxu0 0
  %893 = vmatpush2.bf16.msra.mxu0 %v633
  %894 = vmatprep.subr.bf16.mxu0 0
  %895 = vmatpush2.bf16.msra.mxu0 %v632
  %896 = vmatprep.subr.bf16.mxu0 0
  %897 = vmatpush2.bf16.msra.mxu0 %v631
  %898 = vmatprep.mubr.bf16.mxu0 %v258
  %899 = vmatmul.mubr.bf16.gmra.mxu0 %v257
  %v900 = vpop.f32.mrf.mxu0
  %v901 = vadd.f32 %v852, %v900
  %v902 = vpop.f32.mrf.mxu0
  %v903 = vpop.f32.mrf.mxu0
  %v904 = vadd.f32 %v855, %v903
  %v905 = vpop.f32.mrf.mxu0
  %906 = vmatprep.mubr.bf16.mxu0 %v267
  %907 = vmatmul.mubr.bf16.gmra.mxu0 %v266
  %v908 = vpop.f32.mrf.mxu0
  %v909 = vadd.f32 %v860, %v908
  %v910 = vpop.f32.mrf.mxu0
  %v911 = vpop.f32.mrf.mxu0
  %v912 = vadd.f32 %v863, %v911
  %v913 = vpop.f32.mrf.mxu0
  %914 = vdwg.mxu0
  %915 = vmatprep.subr.bf16.mxu0 0
  %916 = vmatpush1.bf16.msra.mxu0 %v646
  %917 = vmatprep.subr.bf16.mxu0 0
  %918 = vmatpush1.bf16.msra.mxu0 %v645
  %919 = vmatprep.subr.bf16.mxu0 0
  %920 = vmatpush1.bf16.msra.mxu0 %v644
  %921 = vmatprep.subr.bf16.mxu0 0
  %922 = vmatpush1.bf16.msra.mxu0 %v643
  %923 = vmatprep.subr.bf16.mxu0 0
  %924 = vmatpush1.bf16.msra.mxu0 %v642
  %925 = vmatprep.subr.bf16.mxu0 0
  %926 = vmatpush1.bf16.msra.mxu0 %v641
  %927 = vmatprep.subr.bf16.mxu0 0
  %928 = vmatpush1.bf16.msra.mxu0 %v640
  %929 = vmatprep.subr.bf16.mxu0 0
  %930 = vmatpush1.bf16.msra.mxu0 %v639
  %931 = vmatprep.subr.bf16.mxu0 0
  %932 = vmatpush2.bf16.msra.mxu0 0
  %933 = vmatprep.subr.bf16.mxu0 0
  %934 = vmatpush2.bf16.msra.mxu0 0
  %935 = vmatprep.subr.bf16.mxu0 0
  %936 = vmatpush2.bf16.msra.mxu0 0
  %937 = vmatprep.subr.bf16.mxu0 0
  %938 = vmatpush2.bf16.msra.mxu0 0
  %939 = vmatprep.subr.bf16.mxu0 0
  %940 = vmatpush2.bf16.msra.mxu0 0
  %941 = vmatprep.subr.bf16.mxu0 0
  %942 = vmatpush2.bf16.msra.mxu0 0
  %943 = vmatprep.subr.bf16.mxu0 0
  %944 = vmatpush2.bf16.msra.mxu0 0
  %945 = vmatprep.subr.bf16.mxu0 0
  %946 = vmatpush2.bf16.msra.mxu0 0
  %947 = vmatprep.mubr.bf16.mxu0 0
  %948 = vmatmul.mubr.bf16.gmra.mxu0 %v259
  %v949 = vpop.f32.mrf.mxu0
  %v950 = vadd.f32 %v901, %v949
  %v951 = vpop.f32.mrf.mxu0
  %v952 = vpop.f32.mrf.mxu0
  %v953 = vadd.f32 %v904, %v952
  %v954 = vpop.f32.mrf.mxu0
  %955 = vmatprep.mubr.bf16.mxu0 0
  %956 = vmatmul.mubr.bf16.gmra.mxu0 %v268
  %v957 = vpop.f32.mrf.mxu0
  %v958 = vadd.f32 %v909, %v957
  %v959 = vpop.f32.mrf.mxu0
  %v960 = vpop.f32.mrf.mxu0
  %v961 = vadd.f32 %v912, %v960
  %v962 = vpop.f32.mrf.mxu0
  %963 = vdwg.mxu0
  %vm964 = vcmp.ge.f32.partialorder %v950, 0.0
  %vm965 = vcmp.ge.f32.partialorder %v953, 0.0
  %vm966 = vcmp.ge.f32.partialorder %v958, 0.0
  %vm967 = vcmp.ge.f32.partialorder %v961, 0.0
  %v968 = vmul.f32 %v950, 0.01
  %v969 = vmul.f32 %v953, 0.01
  %v970 = vmul.f32 %v958, 0.01
  %v971 = vmul.f32 %v961, 0.01
  %v972 = vsel %vm964, %v950, %v968
  %v973 = vsel %vm965, %v953, %v969
  %v974 = vsel %vm966, %v958, %v970
  %v975 = vsel %vm967, %v961, %v971
  %v976 = vpack.c.bf16 %v973, %v972
  %v977 = vpack.c.bf16 %v975, %v974
  %v978 = vld [vmem:[%s4] sm:$0xf]
  %v979 = vld [vmem:[%s4 + $0x4] sm:$0xf]
  %v980 = vld [vmem:[%s4 + $0x8] sm:$0xf]
  %v981 = vld [vmem:[%s4 + $0xc] sm:$0xf]
  %v982 = vld [vmem:[%s4 + $0x10] sm:$0xf]
  %v983 = vld [vmem:[%s4 + $0x14] sm:$0xf]
  %v984 = vld [vmem:[%s4 + $0x18] sm:$0xf]
  %v985 = vld [vmem:[%s4 + $0x1c] sm:$0xf]
  %v986 = vld [vmem:[%s4 + $0x20] sm:$0xf]
  %v987 = vld [vmem:[%s4 + $0x24] sm:$0xf]
  %v988 = vld [vmem:[%s4 + $0x28] sm:$0xf]
  %v989 = vld [vmem:[%s4 + $0x2c] sm:$0xf]
  %v990 = vld [vmem:[%s4 + $0x30] sm:$0xf]
  %v991 = vld [vmem:[%s4 + $0x34] sm:$0xf]
  %v992 = vld [vmem:[%s4 + $0x38] sm:$0xf]
  %v993 = vld [vmem:[%s4 + $0x3c] sm:$0xf]
  %v994 = vld [vmem:[%s5] sm:$0x1]
  %v996 = vlaneseq
  %v997 = vshrl.u32 %v996, 7
  %v998 = vsub.s32 0, %v997
  %v999 = vrot.slane %v994, %v998
  %v1017 = vunpack.c.l.b16 %v978
  %v1018 = vunpack.c.l.b16 %v979
  %v1019 = vunpack.c.l.b16 %v980
  %v1020 = vunpack.c.l.b16 %v981
  %v1021 = vunpack.c.l.b16 %v982
  %v1022 = vunpack.c.l.b16 %v983
  %v1023 = vunpack.c.l.b16 %v984
  %v1024 = vunpack.c.l.b16 %v985
  %v1025 = vunpack.c.l.b16 %v986
  %v1026 = vunpack.c.l.b16 %v987
  %v1027 = vunpack.c.l.b16 %v988
  %v1028 = vunpack.c.l.b16 %v989
  %v1029 = vunpack.c.l.b16 %v990
  %v1030 = vunpack.c.l.b16 %v991
  %v1031 = vunpack.c.l.b16 %v992
  %v1032 = vunpack.c.l.b16 %v993
  %v1033 = vpack.c.b16 %v1018, %v1017
  %v1034 = vpack.c.b16 %v1020, %v1019
  %v1035 = vpack.c.b16 %v1022, %v1021
  %v1036 = vpack.c.b16 %v1024, %v1023
  %v1037 = vpack.c.b16 %v1026, %v1025
  %v1038 = vpack.c.b16 %v1028, %v1027
  %v1039 = vpack.c.b16 %v1030, %v1029
  %v1040 = vpack.c.b16 %v1032, %v1031
  %1049 = vmatprep.subr.bf16.mxu0 0
  %1050 = vmatpush1.bf16.msra.mxu0 %v1040
  %1051 = vmatprep.subr.bf16.mxu0 0
  %1052 = vmatpush1.bf16.msra.mxu0 %v1039
  %1053 = vmatprep.subr.bf16.mxu0 0
  %1054 = vmatpush1.bf16.msra.mxu0 %v1038
  %1055 = vmatprep.subr.bf16.mxu0 0
  %1056 = vmatpush1.bf16.msra.mxu0 %v1037
  %1057 = vmatprep.subr.bf16.mxu0 0
  %1058 = vmatpush1.bf16.msra.mxu0 %v1036
  %1059 = vmatprep.subr.bf16.mxu0 0
  %1060 = vmatpush1.bf16.msra.mxu0 %v1035
  %1061 = vmatprep.subr.bf16.mxu0 0
  %1062 = vmatpush1.bf16.msra.mxu0 %v1034
  %1063 = vmatprep.subr.bf16.mxu0 0
  %1064 = vmatpush1.bf16.msra.mxu0 %v1033
  %1065 = vmatprep.subr.bf16.mxu0 0
  %1066 = vmatpush2.bf16.msra.mxu0 0
  %1067 = vmatprep.subr.bf16.mxu0 0
  %1068 = vmatpush2.bf16.msra.mxu0 0
  %1069 = vmatprep.subr.bf16.mxu0 0
  %1070 = vmatpush2.bf16.msra.mxu0 0
  %1071 = vmatprep.subr.bf16.mxu0 0
  %1072 = vmatpush2.bf16.msra.mxu0 0
  %1073 = vmatprep.subr.bf16.mxu0 0
  %1074 = vmatpush2.bf16.msra.mxu0 0
  %1075 = vmatprep.subr.bf16.mxu0 0
  %1076 = vmatpush2.bf16.msra.mxu0 0
  %1077 = vmatprep.subr.bf16.mxu0 0
  %1078 = vmatpush2.bf16.msra.mxu0 0
  %1079 = vmatprep.subr.bf16.mxu0 0
  %1080 = vmatpush2.bf16.msra.mxu0 0
  %1081 = vmatprep.mubr.bf16.mxu0 0
  %1082 = vmatmul.mubr.bf16.gmra.mxu0 %v976
  %v1083 = vpop.f32.mrf.mxu0
  %v1084 = vadd.f32 %v999, %v1083
  %v1085 = vpop.f32.mrf.mxu0
  %v1086 = vpop.f32.mrf.mxu0
  %v1087 = vadd.f32 %v999, %v1086
  %v1088 = vpop.f32.mrf.mxu0
  %1089 = vmatprep.mubr.bf16.mxu0 0
  %1090 = vmatmul.mubr.bf16.gmra.mxu0 %v977
  %v1091 = vpop.f32.mrf.mxu0
  %v1092 = vadd.f32 %v999, %v1091
  %v1093 = vpop.f32.mrf.mxu0
  %v1094 = vpop.f32.mrf.mxu0
  %v1095 = vadd.f32 %v999, %v1094
  %v1096 = vpop.f32.mrf.mxu0
  %1097 = vdwg.mxu0
  %v1098 = vld [vmem:[%s1] sm:$0xf]
  %v1099 = vld [vmem:[%s1 + $0x4] sm:$0xf]
  %v1100 = vld [vmem:[%s1 + $0x8] sm:$0xf]
  %v1101 = vld [vmem:[%s1 + $0xc] sm:$0xf]
  %v1102 = vunpack.c.l.bf16 %v1098
  %v1103 = vunpack.c.l.bf16 %v1099
  %v1104 = vunpack.c.l.bf16 %v1100
  %v1105 = vunpack.c.l.bf16 %v1101
  %v1106 = vadd.f32 %v1102, %v1084
  %v1107 = vadd.f32 %v1103, %v1087
  %v1108 = vadd.f32 %v1104, %v1092
  %v1109 = vadd.f32 %v1105, %v1095
  %v1110 = vmul.f32 %v1106, 1.702
  %v1111 = vmul.f32 %v1107, 1.702
  %v1112 = vmul.f32 %v1108, 1.702
  %v1113 = vmul.f32 %v1109, 1.702
  %v1114 = vxor.u32 %v1110, 2147483648
  %v1115 = vxor.u32 %v1111, 2147483648
  %v1116 = vxor.u32 %v1112, 2147483648
  %v1117 = vxor.u32 %v1113, 2147483648
  %v1118 = vmul.f32 %v1114, 1.442695
  %v1119 = vpow.pop %v1118
  %v1120 = vmul.f32 %v1115, 1.442695
  %v1121 = vpow.pop %v1120
  %v1122 = vmul.f32 %v1116, 1.442695
  %v1123 = vpow.pop %v1122
  %v1124 = vmul.f32 %v1117, 1.442695
  %v1125 = vpow.pop %v1124
  %v1126 = vadd.f32 %v1119, 1.0
  %v1127 = vadd.f32 %v1121, 1.0
  %v1128 = vadd.f32 %v1123, 1.0
  %v1129 = vadd.f32 %v1125, 1.0
  %v1130 = vrcp.pop %v1126
  %v1131 = vmul.f32 1.0, %v1130
  %v1132 = vrcp.pop %v1127
  %v1133 = vmul.f32 1.0, %v1132
  %v1134 = vrcp.pop %v1128
  %v1135 = vmul.f32 1.0, %v1134
  %v1136 = vrcp.pop %v1129
  %v1137 = vmul.f32 1.0, %v1136
  %v1138 = vmul.f32 %v1106, %v1131
  %v1139 = vmul.f32 %v1107, %v1133
  %v1140 = vmul.f32 %v1108, %v1135
  %v1141 = vmul.f32 %v1109, %v1137
  %v1142 = vpack.c.bf16 %v1139, %v1138
  %v1143 = vpack.c.bf16 %v1141, %v1140
  %v1146 = vunpack.c.l.b16 %v1142
  %v1147 = vunpack.c.h.b16 %v1142
  %v1148 = vunpack.c.l.b16 %v1143
  %v1149 = vunpack.c.h.b16 %v1143
  %v1150 = vpack.c.b16 %v1146, %v1146
  %v1151 = vpack.c.b16 %v1147, %v1147
  %v1152 = vpack.c.b16 %v1148, %v1148
  %v1153 = vpack.c.b16 %v1149, %v1149
  %1158 = vst [vmem:[%s6] sm:$0xf] %v1150
  %1159 = vst [vmem:[%s6 + $0x4] sm:$0xf] %v1151
  %1160 = vst [vmem:[%s6 + $0x8] sm:$0xf] %v1152
  %1161 = vst [vmem:[%s6 + $0xc] sm:$0xf] %v1153
  // Predicated region
  $region26: #{vqvae_encoder_forward.8} parent=0 // pred_check
    _
  $region27: #{vqvae_encoder_forward.8} parent=0 // pred_check_branch
    %1163 = sbr.rel (0) target = $region29
  $region28: #{vqvae_encoder_forward.8} parent=0 // pred_region
    _
  $region29: #{vqvae_encoder_forward.8} parent=0 // pred_fallthru
    _
  // Predicated region
  $region30: #{vqvae_encoder_forward.8} parent=0 // pred_check
    _
  $region31: #{vqvae_encoder_forward.8} parent=0 // pred_check_branch
    %1165 = sbr.rel (0) target = $region33
  $region32: #{vqvae_encoder_forward.8} parent=0 // pred_region
    _
  $region33: #{vqvae_encoder_forward.8} parent=0 // pred_fallthru
    _

</llo_original>
